<compile_context>
chip_gen: v6e
topology: v6e:2x2x1
jax: 0.10.0
libtpu: 0.0.40
codegen_flags: <defaults>
</compile_context>

<pallas_src>
import functools

import jax
import jax.numpy as jnp
from jax.experimental import pallas as pl
from jax.experimental.pallas import tpu as pltpu

COMMITMENT_COST = 0.25
EMBEDDING_DIM = 64
NUM_EMBEDDINGS = 512


def _vq_kernel(x_ref, et_ref, he2_ref, e_ref, q_ref, sse_ref, cnt_ref, *,
               num_valid_rows, need_mask):
    i = pl.program_id(0)
    tm = x_ref.shape[0]
    k = et_ref.shape[1]

    x = x_ref[...]                                           # (tm, d) f32

    # ---- nearest-code search -------------------------------------------------
    # dist_proxy = 0.5*||e_k||^2 - x . e_k   (same argmin as the full L2 dist)
    # bf16 inputs, f32 accumulation on the MXU.
    xe = jnp.dot(x.astype(jnp.bfloat16), et_ref[...],
                 preferred_element_type=jnp.float32)          # (tm, k)
    dist = he2_ref[...] - xe                                  # (tm, k), 1 VPU op
    idx = jnp.argmin(dist, axis=1)[:, None]                   # (tm, 1) int32

    if need_mask:
        row = jax.lax.broadcasted_iota(jnp.int32, (tm, 1), 0) + i * tm
        row_ok = row < num_valid_rows
        idx = jnp.where(row_ok, idx, -1)                      # padding selects nothing

    onehot = (jax.lax.broadcasted_iota(jnp.int32, (tm, k), 1) == idx
              ).astype(jnp.float32)                           # (tm, k)

    # quantized = one_hot @ E in f32 so selected rows stay exact codebook rows.
    q = jnp.dot(onehot, e_ref[...], preferred_element_type=jnp.float32)  # (tm, d)
    q_ref[...] = q.astype(q_ref.dtype)

    # ---- per-block partial reductions (private blocks -> grid axis parallel) --
    diff = q - x
    if need_mask:
        diff = jnp.where(row_ok, diff, 0.0)
    sse_ref[...] = jnp.sum(diff * diff).reshape(1, 1)
    cnt_ref[...] = jnp.sum(onehot, axis=0, keepdims=True)


@functools.partial(jax.jit, static_argnames=("tm",))
def vector_quantizer_forward(x_nchw, embedding, *, tm=512):
    """Replicates VectorQuantizer.forward.

    Args:
      x_nchw:    (N, C, H, W) with C == embedding_dim.
      embedding: (num_embeddings, embedding_dim) codebook.

    Returns:
      (loss_encoder, loss_codebook, quantized_nchw, perplexity)
    """
    n, c, h, w = x_nchw.shape
    k, d = embedding.shape
    assert c == d, "channel dim must equal embedding_dim"

    # NCHW -> NHWC -> (M, D)
    flat_x = jnp.transpose(x_nchw, (0, 2, 3, 1)).reshape(-1, d)
    m = flat_x.shape[0]
    nblk = -(-m // tm)
    m_pad = nblk * tm
    need_mask = m_pad != m
    if need_mask:
        flat_x = jnp.pad(flat_x, ((0, m_pad - m), (0, 0)))

    # Grid-invariant codebook preprocessing hoisted out of the kernel body.
    e_f32 = embedding.astype(jnp.float32)                     # (k, d) exact rows
    e_t_bf16 = e_f32.T.astype(jnp.bfloat16)                   # (d, k) for dist matmul
    half_e2 = (0.5 * jnp.sum(e_f32 * e_f32, axis=1)).reshape(1, k)

    kernel = functools.partial(_vq_kernel,
                               num_valid_rows=m, need_mask=need_mask)

    cost = pl.CostEstimate(
        flops=4 * m_pad * k * d,                              # two (m,k,d) matmuls
        transcendentals=0,
        bytes_accessed=(2 * 4 * m_pad * d                     # read x, write q
                        + 6 * k * d + 4 * k                   # codebook inputs
                        + nblk * 4 * (k + 1)))                # partial outputs

    q_flat, sse_p, cnt_p = pl.pallas_call(
        kernel,
        out_shape=(
            jax.ShapeDtypeStruct((m_pad, d), flat_x.dtype),
            jax.ShapeDtypeStruct((nblk, 1, 1), jnp.float32),
            jax.ShapeDtypeStruct((nblk, 1, k), jnp.float32),
        ),
        grid_spec=pltpu.PrefetchScalarGridSpec(
            num_scalar_prefetch=0,
            grid=(nblk,),
            in_specs=[
                pl.BlockSpec((tm, d), lambda i: (i, 0)),       # flat_x row tile
                pl.BlockSpec((d, k), lambda i: (0, 0)),        # E^T (bf16), resident
                pl.BlockSpec((1, k), lambda i: (0, 0)),        # 0.5*||e||^2, resident
                pl.BlockSpec((k, d), lambda i: (0, 0)),        # E (f32), resident
            ],
            out_specs=[
                pl.BlockSpec((tm, d), lambda i: (i, 0)),       # quantized tile
                pl.BlockSpec((None, 1, 1), lambda i: (i, 0, 0)),   # sse partial
                pl.BlockSpec((None, 1, k), lambda i: (i, 0, 0)),   # count partial
            ],
        ),
        compiler_params=pltpu.CompilerParams(
            dimension_semantics=("parallel",),
            vmem_limit_bytes=32 * 1024 * 1024),
        cost_estimate=cost,
    )(flat_x, e_t_bf16, half_e2, e_f32)

    sse = jnp.sum(sse_p)
    counts = jnp.sum(cnt_p, axis=(0, 1))                      # (k,)

    # MSE losses (forward values; .detach() only affects gradients).
    mse = sse / jnp.float32(m * d)
    loss_encoder = mse * COMMITMENT_COST
    loss_codebook = mse

    # straight-through estimator: forward value == quantized
    quantized_nchw = jnp.transpose(q_flat[:m].reshape(n, h, w, d), (0, 3, 1, 2))

    avg_probs = counts / jnp.float32(m)
    perplexity = jnp.exp(-jnp.sum(avg_probs * jnp.log(avg_probs + 1e-10)))

    return loss_encoder, loss_codebook, quantized_nchw, perplexity


if __name__ == "__main__":
    key = jax.random.PRNGKey(0)
    k_x, k_e = jax.random.split(key)

    # Shapes consistent with the module: batch=2, C=embedding_dim=64, 16x16.
    N, C, H, W = 2, EMBEDDING_DIM, 16, 16
    x = jax.random.normal(k_x, (N, C, H, W), dtype=jnp.float32)

    # Deterministic codebook init: uniform(-1/K, 1/K), same as the PyTorch __init__.
    embedding = jax.random.uniform(
        k_e, (NUM_EMBEDDINGS, EMBEDDING_DIM),
        minval=-1.0 / NUM_EMBEDDINGS, maxval=1.0 / NUM_EMBEDDINGS,
        dtype=jnp.float32)

    loss_enc, loss_cb, quantized, perplexity = jax.block_until_ready(
        vector_quantizer_forward(x, embedding))
    assert quantized.shape == (N, C, H, W)

    # ---- correctness checks (robust to bf16 near-tie argmin flips) ----------
    flat = jnp.transpose(x, (0, 2, 3, 1)).reshape(-1, EMBEDDING_DIM)
    q_rows = jnp.transpose(quantized, (0, 2, 3, 1)).reshape(-1, EMBEDDING_DIM)
    e = embedding.astype(jnp.float32)
    m = flat.shape[0]

    # 1) every quantized row is (a copy of) a genuine codebook row.
    d2q = (jnp.sum(q_rows ** 2, axis=1, keepdims=True) + jnp.sum(e ** 2, axis=1)
           - 2.0 * q_rows @ e.T)
    idx_k = jnp.argmin(d2q, axis=1)
    assert jnp.allclose(q_rows, e[idx_k], atol=1e-5)

    # 2) the selected code is the true (f32) nearest neighbour up to bf16 slack.
    d_f32 = (jnp.sum(flat ** 2, axis=1, keepdims=True) + jnp.sum(e ** 2, axis=1)
             - 2.0 * flat @ e.T)
    slack = d_f32[jnp.arange(m), idx_k] - jnp.min(d_f32, axis=1)
    assert float(jnp.max(slack)) <= 2e-3

    # 3) losses / perplexity are consistent with the kernel's own selection.
    mse_sel = jnp.mean((e[idx_k] - flat) ** 2)
    assert jnp.allclose(loss_cb, mse_sel, rtol=1e-4)
    assert jnp.allclose(loss_enc, mse_sel * COMMITMENT_COST, rtol=1e-4)
    probs = jnp.bincount(idx_k, length=NUM_EMBEDDINGS) / m
    perp_sel = jnp.exp(-jnp.sum(probs * jnp.log(probs + 1e-10)))
    assert jnp.allclose(perplexity, perp_sel, rtol=1e-3)

    # 4) loose check against the exact-f32 (PyTorch-equivalent) selection.
    idx_f32 = jnp.argmin(d_f32, axis=1)
    mse_f32 = jnp.mean((e[idx_f32] - flat) ** 2)
    assert jnp.allclose(loss_cb, mse_f32, rtol=2e-2)
    assert jnp.allclose(loss_enc, mse_f32 * COMMITMENT_COST, rtol=2e-2)

    print("KERNEL_OK")
</pallas_src>

<mosaic_0001>
module attributes {stable_mosaic.version = 11 : i64} {
  func.func @_vq_kernel(%arg0: i32, %arg1: memref<512x64xf32, #tpu.memory_space<vmem>>, %arg2: memref<64x512xbf16, #tpu.memory_space<vmem>>, %arg3: memref<1x512xf32, #tpu.memory_space<vmem>>, %arg4: memref<512x64xf32, #tpu.memory_space<vmem>>, %arg5: memref<512x64xf32, #tpu.memory_space<vmem>>, %arg6: memref<1x1x1xf32, #tpu.memory_space<vmem>>, %arg7: memref<1x1x512xf32, #tpu.memory_space<vmem>>) attributes {dimension_semantics = [#tpu.dimension_semantics<parallel>], iteration_bounds = array<i64: 1>, scalar_prefetch = 0 : i64, scratch_operands = 0 : i64, tpu.core_type = #tpu.core_type<tc>, window_params = [{transform_indices = @transform_0, window_bounds = array<i64: 512, 64>}, {pipeline_mode = #tpu.pipeline_mode<synchronous>, transform_indices = @transform_1, window_bounds = array<i64: 64, 512>}, {pipeline_mode = #tpu.pipeline_mode<synchronous>, transform_indices = @transform_2, window_bounds = array<i64: 1, 512>}, {pipeline_mode = #tpu.pipeline_mode<synchronous>, transform_indices = @transform_3, window_bounds = array<i64: 512, 64>}, {transform_indices = @transform_4, window_bounds = array<i64: 512, 64>}, {transform_indices = @transform_5, window_bounds = array<i64: 1, 1, 1>}, {transform_indices = @transform_6, window_bounds = array<i64: 1, 1, 512>}]} {
    %c0 = arith.constant 0 : index
    %c0_0 = arith.constant 0 : index
    %0 = vector.load %arg1[%c0, %c0_0] : memref<512x64xf32, #tpu.memory_space<vmem>>, vector<512x64xf32>
    %1 = arith.truncf %0 : vector<512x64xf32> to vector<512x64xbf16>
    %c0_1 = arith.constant 0 : index
    %c0_2 = arith.constant 0 : index
    %2 = vector.load %arg2[%c0_1, %c0_2] : memref<64x512xbf16, #tpu.memory_space<vmem>>, vector<64x512xbf16>
    %cst = arith.constant dense<0.000000e+00> : vector<512x512xf32>
    %3 = tpu.matmul %1, %2, %cst {dimension_numbers = #tpu.dot_dimension_numbers<[1], [0], [0], [1], [0, 0, 1, 1], [], []>} : vector<512x64xbf16>, vector<64x512xbf16>, vector<512x512xf32> -> vector<512x512xf32>
    %c0_3 = arith.constant 0 : index
    %c0_4 = arith.constant 0 : index
    %4 = vector.load %arg3[%c0_3, %c0_4] : memref<1x512xf32, #tpu.memory_space<vmem>>, vector<1x512xf32>
    %5 = vector.broadcast %4 : vector<1x512xf32> to vector<512x512xf32>
    %6 = arith.subf %5, %3 : vector<512x512xf32>
    %7 = tpu.reduce_index %6 {axis = 1 : i32, kind = #tpu.reduction_kind<arg_min>} : vector<512x512xf32> -> vector<512xi32>
    %8 = vector.shape_cast %7 : vector<512xi32> to vector<512x1xi32>
    %9 = tpu.iota {dimensions = array<i32: 1>} : vector<512x512xi32>
    %10 = vector.broadcast %8 : vector<512x1xi32> to vector<512x512xi32>
    %11 = arith.cmpi eq, %9, %10 : vector<512x512xi32>
    %12 = arith.extui %11 : vector<512x512xi1> to vector<512x512xi32>
    %13 = arith.sitofp %12 : vector<512x512xi32> to vector<512x512xf32>
    %c0_5 = arith.constant 0 : index
    %c0_6 = arith.constant 0 : index
    %14 = vector.load %arg4[%c0_5, %c0_6] : memref<512x64xf32, #tpu.memory_space<vmem>>, vector<512x64xf32>
    %cst_7 = arith.constant dense<0.000000e+00> : vector<512x64xf32>
    %15 = tpu.matmul %13, %14, %cst_7 {dimension_numbers = #tpu.dot_dimension_numbers<[1], [0], [0], [1], [0, 0, 1, 1], [], []>} : vector<512x512xf32>, vector<512x64xf32>, vector<512x64xf32> -> vector<512x64xf32>
    %c0_8 = arith.constant 0 : index
    %c0_9 = arith.constant 0 : index
    %16 = vector.load %arg5[%c0_8, %c0_9] : memref<512x64xf32, #tpu.memory_space<vmem>>, vector<512x64xf32>
    tpu.vector_store %arg5[%c0_8, %c0_9], %15 {strides = array<i32>} : memref<512x64xf32, #tpu.memory_space<vmem>>, vector<512x64xf32>,
    %17 = arith.subf %15, %0 : vector<512x64xf32>
    %18 = arith.mulf %17, %17 : vector<512x64xf32>
    %19 = vector.shape_cast %18 : vector<512x64xf32> to vector<1x512x64xf32>
    %cst_10 = arith.constant dense<0.000000e+00> : vector<1xf32>
    %20 = vector.multi_reduction <add>, %19, %cst_10 [1, 2] : vector<1x512x64xf32> to vector<1xf32>
    %21 = vector.shape_cast %20 : vector<1xf32> to vector<1x1x1xf32>
    %22 = vector.extract %21[0, 0, 0] : f32 from vector<1x1x1xf32>
    %23 = vector.broadcast %22 : f32 to vector<1x1xf32>
    %c0_11 = arith.constant 0 : index
    %c0_12 = arith.constant 0 : index
    %c0_13 = arith.constant 0 : index
    %24 = vector.load %arg6[%c0_11, %c0_12, %c0_13] : memref<1x1x1xf32, #tpu.memory_space<vmem>>, vector<1x1x1xf32>
    %25 = vector.shape_cast %24 : vector<1x1x1xf32> to vector<1x1xf32>
    %26 = vector.shape_cast %23 : vector<1x1xf32> to vector<1x1x1xf32>
    tpu.vector_store %arg6[%c0_11, %c0_12, %c0_13], %26 {strides = array<i32>} : memref<1x1x1xf32, #tpu.memory_space<vmem>>, vector<1x1x1xf32>,
    %cst_14 = arith.constant dense<0.000000e+00> : vector<512xf32>
    %27 = vector.multi_reduction <add>, %13, %cst_14 [0] : vector<512x512xf32> to vector<512xf32>
    %28 = vector.shape_cast %27 : vector<512xf32> to vector<1x512xf32>
    %c0_15 = arith.constant 0 : index
    %c0_16 = arith.constant 0 : index
    %c0_17 = arith.constant 0 : index
    %29 = vector.load %arg7[%c0_15, %c0_16, %c0_17] : memref<1x1x512xf32, #tpu.memory_space<vmem>>, vector<1x1x512xf32>
    %30 = vector.shape_cast %29 : vector<1x1x512xf32> to vector<1x512xf32>
    %31 = vector.shape_cast %28 : vector<1x512xf32> to vector<1x1x512xf32>
    tpu.vector_store %arg7[%c0_15, %c0_16, %c0_17], %31 {strides = array<i32>} : memref<1x1x512xf32, #tpu.memory_space<vmem>>, vector<1x1x512xf32>,
    return
  }
  func.func @transform_0(%arg0: i32) -> (i32, i32) {
    %c0_i32 = arith.constant 0 : i32
    %c0_i32_0 = arith.constant 0 : i32
    return %arg0, %c0_i32 : i32, i32
  }
  func.func @transform_1(%arg0: i32) -> (i32, i32) {
    %c0_i32 = arith.constant 0 : i32
    %c0_i32_0 = arith.constant 0 : i32
    %c0_i32_1 = arith.constant 0 : i32
    return %c0_i32, %c0_i32_0 : i32, i32
  }
  func.func @transform_2(%arg0: i32) -> (i32, i32) {
    %c0_i32 = arith.constant 0 : i32
    %c0_i32_0 = arith.constant 0 : i32
    %c0_i32_1 = arith.constant 0 : i32
    return %c0_i32, %c0_i32_0 : i32, i32
  }
  func.func @transform_3(%arg0: i32) -> (i32, i32) {
    %c0_i32 = arith.constant 0 : i32
    %c0_i32_0 = arith.constant 0 : i32
    %c0_i32_1 = arith.constant 0 : i32
    return %c0_i32, %c0_i32_0 : i32, i32
  }
  func.func @transform_4(%arg0: i32) -> (i32, i32) {
    %c0_i32 = arith.constant 0 : i32
    %c0_i32_0 = arith.constant 0 : i32
    return %arg0, %c0_i32 : i32, i32
  }
  func.func @transform_5(%arg0: i32) -> (i32, i32, i32) {
    %c0_i32 = arith.constant 0 : i32
    %c0_i32_0 = arith.constant 0 : i32
    %c0_i32_1 = arith.constant 0 : i32
    return %arg0, %c0_i32, %c0_i32_0 : i32, i32, i32
  }
  func.func @transform_6(%arg0: i32) -> (i32, i32, i32) {
    %c0_i32 = arith.constant 0 : i32
    %c0_i32_0 = arith.constant 0 : i32
    %c0_i32_1 = arith.constant 0 : i32
    return %arg0, %c0_i32, %c0_i32_0 : i32, i32, i32
  }
}

</mosaic_0001>

<llo_original>
// kernel: vector_quantizer_forward.1
$region0: #{vector_quantizer_forward.1}
  #allocation0 [shape = 'u32[]', space=smem, size = 0x4, offset = 0x4, fixed_abs, tag = 'smem constant byte address 0x4 - core index']
  #allocation1 [shape = 'u32[144,128]{1,0:T(1,128)}', space=vmem, size = 0x12000, scoped, tag = 'internal scratch']
  %s0 = inlined_call_operand.vmem [shape: f32[512,64], index: 0, kind: input, shape index: {}]
  %s1 = inlined_call_operand.vmem [shape: bf16[64,512], index: 1, kind: input, shape index: {}]
  %s2 = inlined_call_operand.vmem [shape: f32[1,512], index: 2, kind: input, shape index: {}]
  %s3 = inlined_call_operand.vmem [shape: f32[512,64], index: 3, kind: input, shape index: {}]
  %s4 = inlined_call_operand.hbm [shape: f32[512,64], index: 4, kind: output, shape index: {0}]
  %s5 = inlined_call_operand.hbm [shape: f32[1,1,1], index: 5, kind: output, shape index: {1}]
  %s6 = inlined_call_operand.vmem [shape: f32[1,1,512], index: 6, kind: output, shape index: {2}]
  %7 = xla_tuple %s4, %s5, %s6
  %s8 = sld [smem:[#allocation0]]
  $region42: #{vector_quantizer_forward.1} parent=0
    _
  %s10 = ssub.s32 1, %s8
  %s11 = scalar_select 0, %s10, %s8
  $region1: #{vector_quantizer_forward.1} parent=0
    #allocation2 [shape = 'u8[262144]{0}', space=vmem, size = 0x40000, scoped, tag = 'output window, operand 0, single buffered']
    #allocation3 [shape = 's32[1]{0}', space=sflag, size = 0x4, scoped, tag = 'scoped memory for vector_quantizer_forward.1']
    #allocation4 [shape = 'u8[512]{0}', space=vmem, size = 0x400, scoped, tag = 'output window, operand 1, single buffered']
    #allocation5 [shape = 's32[1]{0}', space=sflag, size = 0x4, scoped, tag = 'scoped memory for vector_quantizer_forward.1']
    %12 = vsyncpa [#allocation3], 0
    %13 = vsyncpa [#allocation5], 0
    // Predicated region
    $region2: #{vector_quantizer_forward.1} parent=1 // pred_check
      _
    $region3: #{vector_quantizer_forward.1} parent=1 // pred_check_branch
      %15 = sbr.rel (0) target = $region5
    $region4: #{vector_quantizer_forward.1} parent=1 // pred_region
      _
    $region5: #{vector_quantizer_forward.1} parent=1 // pred_fallthru
      _
    // Predicated region
    $region6: #{vector_quantizer_forward.1} parent=1 // pred_check
      _
    $region7: #{vector_quantizer_forward.1} parent=1 // pred_check_branch
      %17 = sbr.rel (0) target = $region9
    $region8: #{vector_quantizer_forward.1} parent=1 // pred_region
      _
    $region9: #{vector_quantizer_forward.1} parent=1 // pred_fallthru
      _
    // Predicated region
    $region10: #{vector_quantizer_forward.1} parent=1 // pred_check
      _
    $region11: #{vector_quantizer_forward.1} parent=1 // pred_check_branch
      %19 = sbr.rel (0) target = $region13
    $region12: #{vector_quantizer_forward.1} parent=1 // pred_region
      _
    $region13: #{vector_quantizer_forward.1} parent=1 // pred_fallthru
      _
    // Predicated region
    $region14: #{vector_quantizer_forward.1} parent=1 // pred_check
      _
    $region15: #{vector_quantizer_forward.1} parent=1 // pred_check_branch
      %21 = sbr.rel (0) target = $region17
    $region16: #{vector_quantizer_forward.1} parent=1 // pred_region
      _
    $region17: #{vector_quantizer_forward.1} parent=1 // pred_fallthru
      _
    %v23 = vld [vmem:[%s0] sm:$0xff]
    %v24 = vld [vmem:[%s0 + $0x8] sm:$0xff]
    %v25 = vld [vmem:[%s0 + $0x10] sm:$0xff]
    %v26 = vld [vmem:[%s0 + $0x18] sm:$0xff]
    %v27 = vld [vmem:[%s0 + $0x20] sm:$0xff]
    %v28 = vld [vmem:[%s0 + $0x28] sm:$0xff]
    %v29 = vld [vmem:[%s0 + $0x30] sm:$0xff]
    %v30 = vld [vmem:[%s0 + $0x38] sm:$0xff]
    %v31 = vld [vmem:[%s0 + $0x40] sm:$0xff]
    %v32 = vld [vmem:[%s0 + $0x48] sm:$0xff]
    %v33 = vld [vmem:[%s0 + $0x50] sm:$0xff]
    %v34 = vld [vmem:[%s0 + $0x58] sm:$0xff]
    %v35 = vld [vmem:[%s0 + $0x60] sm:$0xff]
    %v36 = vld [vmem:[%s0 + $0x68] sm:$0xff]
    %v37 = vld [vmem:[%s0 + $0x70] sm:$0xff]
    %v38 = vld [vmem:[%s0 + $0x78] sm:$0xff]
    %v39 = vld [vmem:[%s0 + $0x80] sm:$0xff]
    %v40 = vld [vmem:[%s0 + $0x88] sm:$0xff]
    %v41 = vld [vmem:[%s0 + $0x90] sm:$0xff]
    %v42 = vld [vmem:[%s0 + $0x98] sm:$0xff]
    %v43 = vld [vmem:[%s0 + $0xa0] sm:$0xff]
    %v44 = vld [vmem:[%s0 + $0xa8] sm:$0xff]
    %v45 = vld [vmem:[%s0 + $0xb0] sm:$0xff]
    %v46 = vld [vmem:[%s0 + $0xb8] sm:$0xff]
    %v47 = vld [vmem:[%s0 + $0xc0] sm:$0xff]
    %v48 = vld [vmem:[%s0 + $0xc8] sm:$0xff]
    %v49 = vld [vmem:[%s0 + $0xd0] sm:$0xff]
    %v50 = vld [vmem:[%s0 + $0xd8] sm:$0xff]
    %v51 = vld [vmem:[%s0 + $0xe0] sm:$0xff]
    %v52 = vld [vmem:[%s0 + $0xe8] sm:$0xff]
    %v53 = vld [vmem:[%s0 + $0xf0] sm:$0xff]
    %v54 = vld [vmem:[%s0 + $0xf8] sm:$0xff]
    %v55 = vld [vmem:[%s0 + $0x100] sm:$0xff]
    %v56 = vld [vmem:[%s0 + $0x108] sm:$0xff]
    %v57 = vld [vmem:[%s0 + $0x110] sm:$0xff]
    %v58 = vld [vmem:[%s0 + $0x118] sm:$0xff]
    %v59 = vld [vmem:[%s0 + $0x120] sm:$0xff]
    %v60 = vld [vmem:[%s0 + $0x128] sm:$0xff]
    %v61 = vld [vmem:[%s0 + $0x130] sm:$0xff]
    %v62 = vld [vmem:[%s0 + $0x138] sm:$0xff]
    %v63 = vld [vmem:[%s0 + $0x140] sm:$0xff]
    %v64 = vld [vmem:[%s0 + $0x148] sm:$0xff]
    %v65 = vld [vmem:[%s0 + $0x150] sm:$0xff]
    %v66 = vld [vmem:[%s0 + $0x158] sm:$0xff]
    %v67 = vld [vmem:[%s0 + $0x160] sm:$0xff]
    %v68 = vld [vmem:[%s0 + $0x168] sm:$0xff]
    %v69 = vld [vmem:[%s0 + $0x170] sm:$0xff]
    %v70 = vld [vmem:[%s0 + $0x178] sm:$0xff]
    %v71 = vld [vmem:[%s0 + $0x180] sm:$0xff]
    %v72 = vld [vmem:[%s0 + $0x188] sm:$0xff]
    %v73 = vld [vmem:[%s0 + $0x190] sm:$0xff]
    %v74 = vld [vmem:[%s0 + $0x198] sm:$0xff]
    %v75 = vld [vmem:[%s0 + $0x1a0] sm:$0xff]
    %v76 = vld [vmem:[%s0 + $0x1a8] sm:$0xff]
    %v77 = vld [vmem:[%s0 + $0x1b0] sm:$0xff]
    %v78 = vld [vmem:[%s0 + $0x1b8] sm:$0xff]
    %v79 = vld [vmem:[%s0 + $0x1c0] sm:$0xff]
    %v80 = vld [vmem:[%s0 + $0x1c8] sm:$0xff]
    %v81 = vld [vmem:[%s0 + $0x1d0] sm:$0xff]
    %v82 = vld [vmem:[%s0 + $0x1d8] sm:$0xff]
    %v83 = vld [vmem:[%s0 + $0x1e0] sm:$0xff]
    %v84 = vld [vmem:[%s0 + $0x1e8] sm:$0xff]
    %v85 = vld [vmem:[%s0 + $0x1f0] sm:$0xff]
    %v86 = vld [vmem:[%s0 + $0x1f8] sm:$0xff]
    %v87 = vpack.c.bf16 %v24, %v23
    %v88 = vpack.c.bf16 %v26, %v25
    %v89 = vpack.c.bf16 %v28, %v27
    %v90 = vpack.c.bf16 %v30, %v29
    %v91 = vpack.c.bf16 %v32, %v31
    %v92 = vpack.c.bf16 %v34, %v33
    %v93 = vpack.c.bf16 %v36, %v35
    %v94 = vpack.c.bf16 %v38, %v37
    %v95 = vpack.c.bf16 %v40, %v39
    %v96 = vpack.c.bf16 %v42, %v41
    %v97 = vpack.c.bf16 %v44, %v43
    %v98 = vpack.c.bf16 %v46, %v45
    %v99 = vpack.c.bf16 %v48, %v47
    %v100 = vpack.c.bf16 %v50, %v49
    %v101 = vpack.c.bf16 %v52, %v51
    %v102 = vpack.c.bf16 %v54, %v53
    %v103 = vpack.c.bf16 %v56, %v55
    %v104 = vpack.c.bf16 %v58, %v57
    %v105 = vpack.c.bf16 %v60, %v59
    %v106 = vpack.c.bf16 %v62, %v61
    %v107 = vpack.c.bf16 %v64, %v63
    %v108 = vpack.c.bf16 %v66, %v65
    %v109 = vpack.c.bf16 %v68, %v67
    %v110 = vpack.c.bf16 %v70, %v69
    %v111 = vpack.c.bf16 %v72, %v71
    %v112 = vpack.c.bf16 %v74, %v73
    %v113 = vpack.c.bf16 %v76, %v75
    %v114 = vpack.c.bf16 %v78, %v77
    %v115 = vpack.c.bf16 %v80, %v79
    %v116 = vpack.c.bf16 %v82, %v81
    %v117 = vpack.c.bf16 %v84, %v83
    %v118 = vpack.c.bf16 %v86, %v85
    %v119 = vld [vmem:[%s1] sm:$0xff]
    %v120 = vld [vmem:[%s1 + $0x8] sm:$0xff]
    %v121 = vld [vmem:[%s1 + $0x10] sm:$0xff]
    %v122 = vld [vmem:[%s1 + $0x18] sm:$0xff]
    %v123 = vld [vmem:[%s1 + $0x20] sm:$0xff]
    %v124 = vld [vmem:[%s1 + $0x28] sm:$0xff]
    %v125 = vld [vmem:[%s1 + $0x30] sm:$0xff]
    %v126 = vld [vmem:[%s1 + $0x38] sm:$0xff]
    %v127 = vld [vmem:[%s1 + $0x40] sm:$0xff]
    %v128 = vld [vmem:[%s1 + $0x48] sm:$0xff]
    %v129 = vld [vmem:[%s1 + $0x50] sm:$0xff]
    %v130 = vld [vmem:[%s1 + $0x58] sm:$0xff]
    %v131 = vld [vmem:[%s1 + $0x60] sm:$0xff]
    %v132 = vld [vmem:[%s1 + $0x68] sm:$0xff]
    %v133 = vld [vmem:[%s1 + $0x70] sm:$0xff]
    %v134 = vld [vmem:[%s1 + $0x78] sm:$0xff]
    %v151 = vunpack.c.l.b16 %v119
    %v152 = vunpack.c.h.b16 %v119
    %v153 = vunpack.c.l.b16 %v120
    %v154 = vunpack.c.h.b16 %v120
    %v155 = vunpack.c.l.b16 %v121
    %v156 = vunpack.c.h.b16 %v121
    %v157 = vunpack.c.l.b16 %v122
    %v158 = vunpack.c.h.b16 %v122
    %v159 = vunpack.c.l.b16 %v123
    %v160 = vunpack.c.h.b16 %v123
    %v161 = vunpack.c.l.b16 %v124
    %v162 = vunpack.c.h.b16 %v124
    %v163 = vunpack.c.l.b16 %v125
    %v164 = vunpack.c.h.b16 %v125
    %v165 = vunpack.c.l.b16 %v126
    %v166 = vunpack.c.h.b16 %v126
    %v167 = vunpack.c.l.b16 %v127
    %v168 = vunpack.c.h.b16 %v127
    %v169 = vunpack.c.l.b16 %v128
    %v170 = vunpack.c.h.b16 %v128
    %v171 = vunpack.c.l.b16 %v129
    %v172 = vunpack.c.h.b16 %v129
    %v173 = vunpack.c.l.b16 %v130
    %v174 = vunpack.c.h.b16 %v130
    %v175 = vunpack.c.l.b16 %v131
    %v176 = vunpack.c.h.b16 %v131
    %v177 = vunpack.c.l.b16 %v132
    %v178 = vunpack.c.h.b16 %v132
    %v179 = vunpack.c.l.b16 %v133
    %v180 = vunpack.c.h.b16 %v133
    %v181 = vunpack.c.l.b16 %v134
    %v182 = vunpack.c.h.b16 %v134
    %v183 = vpack.c.b16 %v155, %v151
    %v184 = vpack.c.b16 %v156, %v152
    %v185 = vpack.c.b16 %v157, %v153
    %v186 = vpack.c.b16 %v158, %v154
    %v187 = vpack.c.b16 %v163, %v159
    %v188 = vpack.c.b16 %v164, %v160
    %v189 = vpack.c.b16 %v165, %v161
    %v190 = vpack.c.b16 %v166, %v162
    %v191 = vpack.c.b16 %v171, %v167
    %v192 = vpack.c.b16 %v172, %v168
    %v193 = vpack.c.b16 %v173, %v169
    %v194 = vpack.c.b16 %v174, %v170
    %v195 = vpack.c.b16 %v179, %v175
    %v196 = vpack.c.b16 %v180, %v176
    %v197 = vpack.c.b16 %v181, %v177
    %v198 = vpack.c.b16 %v182, %v178
    %vm215 = vcmask 523264
    %v217 = vsel %vm215, %v87, 0
    %v220 = vsel %vm215, %v88, 0
    %v223 = vsel %vm215, %v89, 0
    %v226 = vsel %vm215, %v90, 0
    %v229 = vsel %vm215, %v91, 0
    %v232 = vsel %vm215, %v92, 0
    %v235 = vsel %vm215, %v93, 0
    %v238 = vsel %vm215, %v94, 0
    %v241 = vsel %vm215, %v95, 0
    %v244 = vsel %vm215, %v96, 0
    %v247 = vsel %vm215, %v97, 0
    %v250 = vsel %vm215, %v98, 0
    %v253 = vsel %vm215, %v99, 0
    %v256 = vsel %vm215, %v100, 0
    %v259 = vsel %vm215, %v101, 0
    %v262 = vsel %vm215, %v102, 0
    %v265 = vsel %vm215, %v103, 0
    %v268 = vsel %vm215, %v104, 0
    %v271 = vsel %vm215, %v105, 0
    %v274 = vsel %vm215, %v106, 0
    %v277 = vsel %vm215, %v107, 0
    %v280 = vsel %vm215, %v108, 0
    %v283 = vsel %vm215, %v109, 0
    %v286 = vsel %vm215, %v110, 0
    %v289 = vsel %vm215, %v111, 0
    %v292 = vsel %vm215, %v112, 0
    %v295 = vsel %vm215, %v113, 0
    %v298 = vsel %vm215, %v114, 0
    %v301 = vsel %vm215, %v115, 0
    %v304 = vsel %vm215, %v116, 0
    %v307 = vsel %vm215, %v117, 0
    %v310 = vsel %vm215, %v118, 0
    %312 = vmatprep.subr.bf16.mxu0 0
    %313 = vmatpush1.bf16.msra.mxu0 0
    %314 = vmatprep.subr.bf16.mxu0 0
    %315 = vmatpush1.bf16.msra.mxu0 0
    %316 = vmatprep.subr.bf16.mxu0 0
    %317 = vmatpush1.bf16.msra.mxu0 0
    %318 = vmatprep.subr.bf16.mxu0 0
    %319 = vmatpush1.bf16.msra.mxu0 0
    %320 = vmatprep.subr.bf16.mxu0 %v196
    %321 = vmatpush1.bf16.msra.mxu0 %v195
    %322 = vmatprep.subr.bf16.mxu0 %v192
    %323 = vmatpush1.bf16.msra.mxu0 %v191
    %324 = vmatprep.subr.bf16.mxu0 %v188
    %325 = vmatpush1.bf16.msra.mxu0 %v187
    %326 = vmatprep.subr.bf16.mxu0 %v184
    %327 = vmatpush1.bf16.msra.mxu0 %v183
    %328 = vmatprep.subr.bf16.mxu0 0
    %329 = vmatpush2.bf16.msra.mxu0 0
    %330 = vmatprep.subr.bf16.mxu0 0
    %331 = vmatpush2.bf16.msra.mxu0 0
    %332 = vmatprep.subr.bf16.mxu0 0
    %333 = vmatpush2.bf16.msra.mxu0 0
    %334 = vmatprep.subr.bf16.mxu0 0
    %335 = vmatpush2.bf16.msra.mxu0 0
    %336 = vmatprep.subr.bf16.mxu0 0
    %337 = vmatpush2.bf16.msra.mxu0 0
    %338 = vmatprep.subr.bf16.mxu0 0
    %339 = vmatpush2.bf16.msra.mxu0 0
    %340 = vmatprep.subr.bf16.mxu0 0
    %341 = vmatpush2.bf16.msra.mxu0 0
    %342 = vmatprep.subr.bf16.mxu0 0
    %343 = vmatpush2.bf16.msra.mxu0 0
    %344 = vmatprep.mubr.bf16.mxu0 0
    %345 = vmatmul.mubr.bf16.gmra.mxu0 %v217
    %v346 = vpop.f32.mrf.mxu0
    %v347 = vadd.f32 0.0, %v346
    %v348 = vpop.f32.mrf.mxu0
    %v349 = vadd.f32 0.0, %v348
    %v350 = vpop.f32.mrf.mxu0
    %v351 = vadd.f32 0.0, %v350
    %v352 = vpop.f32.mrf.mxu0
    %v353 = vadd.f32 0.0, %v352
    %354 = vmatprep.mubr.bf16.mxu0 0
    %355 = vmatmul.mubr.bf16.gmra.mxu0 %v220
    %v356 = vpop.f32.mrf.mxu0
    %v357 = vadd.f32 0.0, %v356
    %v358 = vpop.f32.mrf.mxu0
    %v359 = vadd.f32 0.0, %v358
    %v360 = vpop.f32.mrf.mxu0
    %v361 = vadd.f32 0.0, %v360
    %v362 = vpop.f32.mrf.mxu0
    %v363 = vadd.f32 0.0, %v362
    %364 = vmatprep.mubr.bf16.mxu0 0
    %365 = vmatmul.mubr.bf16.gmra.mxu0 %v223
    %v366 = vpop.f32.mrf.mxu0
    %v367 = vadd.f32 0.0, %v366
    %v368 = vpop.f32.mrf.mxu0
    %v369 = vadd.f32 0.0, %v368
    %v370 = vpop.f32.mrf.mxu0
    %v371 = vadd.f32 0.0, %v370
    %v372 = vpop.f32.mrf.mxu0
    %v373 = vadd.f32 0.0, %v372
    %374 = vmatprep.mubr.bf16.mxu0 0
    %375 = vmatmul.mubr.bf16.gmra.mxu0 %v226
    %v376 = vpop.f32.mrf.mxu0
    %v377 = vadd.f32 0.0, %v376
    %v378 = vpop.f32.mrf.mxu0
    %v379 = vadd.f32 0.0, %v378
    %v380 = vpop.f32.mrf.mxu0
    %v381 = vadd.f32 0.0, %v380
    %v382 = vpop.f32.mrf.mxu0
    %v383 = vadd.f32 0.0, %v382
    %384 = vmatprep.mubr.bf16.mxu0 0
    %385 = vmatmul.mubr.bf16.gmra.mxu0 %v229
    %v386 = vpop.f32.mrf.mxu0
    %v387 = vadd.f32 0.0, %v386
    %v388 = vpop.f32.mrf.mxu0
    %v389 = vadd.f32 0.0, %v388
    %v390 = vpop.f32.mrf.mxu0
    %v391 = vadd.f32 0.0, %v390
    %v392 = vpop.f32.mrf.mxu0
    %v393 = vadd.f32 0.0, %v392
    %394 = vmatprep.mubr.bf16.mxu0 0
    %395 = vmatmul.mubr.bf16.gmra.mxu0 %v232
    %v396 = vpop.f32.mrf.mxu0
    %v397 = vadd.f32 0.0, %v396
    %v398 = vpop.f32.mrf.mxu0
    %v399 = vadd.f32 0.0, %v398
    %v400 = vpop.f32.mrf.mxu0
    %v401 = vadd.f32 0.0, %v400
    %v402 = vpop.f32.mrf.mxu0
    %v403 = vadd.f32 0.0, %v402
    %404 = vmatprep.mubr.bf16.mxu0 0
    %405 = vmatmul.mubr.bf16.gmra.mxu0 %v235
    %v406 = vpop.f32.mrf.mxu0
    %v407 = vadd.f32 0.0, %v406
    %v408 = vpop.f32.mrf.mxu0
    %v409 = vadd.f32 0.0, %v408
    %v410 = vpop.f32.mrf.mxu0
    %v411 = vadd.f32 0.0, %v410
    %v412 = vpop.f32.mrf.mxu0
    %v413 = vadd.f32 0.0, %v412
    %414 = vmatprep.mubr.bf16.mxu0 0
    %415 = vmatmul.mubr.bf16.gmra.mxu0 %v238
    %v416 = vpop.f32.mrf.mxu0
    %v417 = vadd.f32 0.0, %v416
    %v418 = vpop.f32.mrf.mxu0
    %v419 = vadd.f32 0.0, %v418
    %v420 = vpop.f32.mrf.mxu0
    %v421 = vadd.f32 0.0, %v420
    %v422 = vpop.f32.mrf.mxu0
    %v423 = vadd.f32 0.0, %v422
    %424 = vmatprep.mubr.bf16.mxu0 0
    %425 = vmatmul.mubr.bf16.gmra.mxu0 %v241
    %v426 = vpop.f32.mrf.mxu0
    %v427 = vadd.f32 0.0, %v426
    %v428 = vpop.f32.mrf.mxu0
    %v429 = vadd.f32 0.0, %v428
    %v430 = vpop.f32.mrf.mxu0
    %v431 = vadd.f32 0.0, %v430
    %v432 = vpop.f32.mrf.mxu0
    %v433 = vadd.f32 0.0, %v432
    %434 = vmatprep.mubr.bf16.mxu0 0
    %435 = vmatmul.mubr.bf16.gmra.mxu0 %v244
    %v436 = vpop.f32.mrf.mxu0
    %v437 = vadd.f32 0.0, %v436
    %v438 = vpop.f32.mrf.mxu0
    %v439 = vadd.f32 0.0, %v438
    %v440 = vpop.f32.mrf.mxu0
    %v441 = vadd.f32 0.0, %v440
    %v442 = vpop.f32.mrf.mxu0
    %v443 = vadd.f32 0.0, %v442
    %444 = vmatprep.mubr.bf16.mxu0 0
    %445 = vmatmul.mubr.bf16.gmra.mxu0 %v247
    %v446 = vpop.f32.mrf.mxu0
    %v447 = vadd.f32 0.0, %v446
    %v448 = vpop.f32.mrf.mxu0
    %v449 = vadd.f32 0.0, %v448
    %v450 = vpop.f32.mrf.mxu0
    %v451 = vadd.f32 0.0, %v450
    %v452 = vpop.f32.mrf.mxu0
    %v453 = vadd.f32 0.0, %v452
    %454 = vmatprep.mubr.bf16.mxu0 0
    %455 = vmatmul.mubr.bf16.gmra.mxu0 %v250
    %v456 = vpop.f32.mrf.mxu0
    %v457 = vadd.f32 0.0, %v456
    %v458 = vpop.f32.mrf.mxu0
    %v459 = vadd.f32 0.0, %v458
    %v460 = vpop.f32.mrf.mxu0
    %v461 = vadd.f32 0.0, %v460
    %v462 = vpop.f32.mrf.mxu0
    %v463 = vadd.f32 0.0, %v462
    %464 = vmatprep.mubr.bf16.mxu0 0
    %465 = vmatmul.mubr.bf16.gmra.mxu0 %v253
    %v466 = vpop.f32.mrf.mxu0
    %v467 = vadd.f32 0.0, %v466
    %v468 = vpop.f32.mrf.mxu0
    %v469 = vadd.f32 0.0, %v468
    %v470 = vpop.f32.mrf.mxu0
    %v471 = vadd.f32 0.0, %v470
    %v472 = vpop.f32.mrf.mxu0
    %v473 = vadd.f32 0.0, %v472
    %474 = vmatprep.mubr.bf16.mxu0 0
    %475 = vmatmul.mubr.bf16.gmra.mxu0 %v256
    %v476 = vpop.f32.mrf.mxu0
    %v477 = vadd.f32 0.0, %v476
    %v478 = vpop.f32.mrf.mxu0
    %v479 = vadd.f32 0.0, %v478
    %v480 = vpop.f32.mrf.mxu0
    %v481 = vadd.f32 0.0, %v480
    %v482 = vpop.f32.mrf.mxu0
    %v483 = vadd.f32 0.0, %v482
    %484 = vmatprep.mubr.bf16.mxu0 0
    %485 = vmatmul.mubr.bf16.gmra.mxu0 %v259
    %v486 = vpop.f32.mrf.mxu0
    %v487 = vadd.f32 0.0, %v486
    %v488 = vpop.f32.mrf.mxu0
    %v489 = vadd.f32 0.0, %v488
    %v490 = vpop.f32.mrf.mxu0
    %v491 = vadd.f32 0.0, %v490
    %v492 = vpop.f32.mrf.mxu0
    %v493 = vadd.f32 0.0, %v492
    %494 = vmatprep.mubr.bf16.mxu0 0
    %495 = vmatmul.mubr.bf16.gmra.mxu0 %v262
    %v496 = vpop.f32.mrf.mxu0
    %v497 = vadd.f32 0.0, %v496
    %v498 = vpop.f32.mrf.mxu0
    %v499 = vadd.f32 0.0, %v498
    %v500 = vpop.f32.mrf.mxu0
    %v501 = vadd.f32 0.0, %v500
    %v502 = vpop.f32.mrf.mxu0
    %v503 = vadd.f32 0.0, %v502
    %504 = vmatprep.mubr.bf16.mxu0 0
    %505 = vmatmul.mubr.bf16.gmra.mxu0 %v265
    %v506 = vpop.f32.mrf.mxu0
    %v507 = vadd.f32 0.0, %v506
    %v508 = vpop.f32.mrf.mxu0
    %v509 = vadd.f32 0.0, %v508
    %v510 = vpop.f32.mrf.mxu0
    %v511 = vadd.f32 0.0, %v510
    %v512 = vpop.f32.mrf.mxu0
    %v513 = vadd.f32 0.0, %v512
    %514 = vmatprep.mubr.bf16.mxu0 0
    %515 = vmatmul.mubr.bf16.gmra.mxu0 %v268
    %v516 = vpop.f32.mrf.mxu0
    %v517 = vadd.f32 0.0, %v516
    %v518 = vpop.f32.mrf.mxu0
    %v519 = vadd.f32 0.0, %v518
    %v520 = vpop.f32.mrf.mxu0
    %v521 = vadd.f32 0.0, %v520
    %v522 = vpop.f32.mrf.mxu0
    %v523 = vadd.f32 0.0, %v522
    %524 = vmatprep.mubr.bf16.mxu0 0
    %525 = vmatmul.mubr.bf16.gmra.mxu0 %v271
    %v526 = vpop.f32.mrf.mxu0
    %v527 = vadd.f32 0.0, %v526
    %v528 = vpop.f32.mrf.mxu0
    %v529 = vadd.f32 0.0, %v528
    %v530 = vpop.f32.mrf.mxu0
    %v531 = vadd.f32 0.0, %v530
    %v532 = vpop.f32.mrf.mxu0
    %v533 = vadd.f32 0.0, %v532
    %534 = vmatprep.mubr.bf16.mxu0 0
    %535 = vmatmul.mubr.bf16.gmra.mxu0 %v274
    %v536 = vpop.f32.mrf.mxu0
    %v537 = vadd.f32 0.0, %v536
    %v538 = vpop.f32.mrf.mxu0
    %v539 = vadd.f32 0.0, %v538
    %v540 = vpop.f32.mrf.mxu0
    %v541 = vadd.f32 0.0, %v540
    %v542 = vpop.f32.mrf.mxu0
    %v543 = vadd.f32 0.0, %v542
    %544 = vmatprep.mubr.bf16.mxu0 0
    %545 = vmatmul.mubr.bf16.gmra.mxu0 %v277
    %v546 = vpop.f32.mrf.mxu0
    %v547 = vadd.f32 0.0, %v546
    %v548 = vpop.f32.mrf.mxu0
    %v549 = vadd.f32 0.0, %v548
    %v550 = vpop.f32.mrf.mxu0
    %v551 = vadd.f32 0.0, %v550
    %v552 = vpop.f32.mrf.mxu0
    %v553 = vadd.f32 0.0, %v552
    %554 = vmatprep.mubr.bf16.mxu0 0
    %555 = vmatmul.mubr.bf16.gmra.mxu0 %v280
    %v556 = vpop.f32.mrf.mxu0
    %v557 = vadd.f32 0.0, %v556
    %v558 = vpop.f32.mrf.mxu0
    %v559 = vadd.f32 0.0, %v558
    %v560 = vpop.f32.mrf.mxu0
    %v561 = vadd.f32 0.0, %v560
    %v562 = vpop.f32.mrf.mxu0
    %v563 = vadd.f32 0.0, %v562
    %564 = vmatprep.mubr.bf16.mxu0 0
    %565 = vmatmul.mubr.bf16.gmra.mxu0 %v283
    %v566 = vpop.f32.mrf.mxu0
    %v567 = vadd.f32 0.0, %v566
    %v568 = vpop.f32.mrf.mxu0
    %v569 = vadd.f32 0.0, %v568
    %v570 = vpop.f32.mrf.mxu0
    %v571 = vadd.f32 0.0, %v570
    %v572 = vpop.f32.mrf.mxu0
    %v573 = vadd.f32 0.0, %v572
    %574 = vmatprep.mubr.bf16.mxu0 0
    %575 = vmatmul.mubr.bf16.gmra.mxu0 %v286
    %v576 = vpop.f32.mrf.mxu0
    %v577 = vadd.f32 0.0, %v576
    %v578 = vpop.f32.mrf.mxu0
    %v579 = vadd.f32 0.0, %v578
    %v580 = vpop.f32.mrf.mxu0
    %v581 = vadd.f32 0.0, %v580
    %v582 = vpop.f32.mrf.mxu0
    %v583 = vadd.f32 0.0, %v582
    %584 = vmatprep.mubr.bf16.mxu0 0
    %585 = vmatmul.mubr.bf16.gmra.mxu0 %v289
    %v586 = vpop.f32.mrf.mxu0
    %v587 = vadd.f32 0.0, %v586
    %v588 = vpop.f32.mrf.mxu0
    %v589 = vadd.f32 0.0, %v588
    %v590 = vpop.f32.mrf.mxu0
    %v591 = vadd.f32 0.0, %v590
    %v592 = vpop.f32.mrf.mxu0
    %v593 = vadd.f32 0.0, %v592
    %594 = vmatprep.mubr.bf16.mxu0 0
    %595 = vmatmul.mubr.bf16.gmra.mxu0 %v292
    %v596 = vpop.f32.mrf.mxu0
    %v597 = vadd.f32 0.0, %v596
    %v598 = vpop.f32.mrf.mxu0
    %v599 = vadd.f32 0.0, %v598
    %v600 = vpop.f32.mrf.mxu0
    %v601 = vadd.f32 0.0, %v600
    %v602 = vpop.f32.mrf.mxu0
    %v603 = vadd.f32 0.0, %v602
    %604 = vmatprep.mubr.bf16.mxu0 0
    %605 = vmatmul.mubr.bf16.gmra.mxu0 %v295
    %v606 = vpop.f32.mrf.mxu0
    %v607 = vadd.f32 0.0, %v606
    %v608 = vpop.f32.mrf.mxu0
    %v609 = vadd.f32 0.0, %v608
    %v610 = vpop.f32.mrf.mxu0
    %v611 = vadd.f32 0.0, %v610
    %v612 = vpop.f32.mrf.mxu0
    %v613 = vadd.f32 0.0, %v612
    %614 = vmatprep.mubr.bf16.mxu0 0
    %615 = vmatmul.mubr.bf16.gmra.mxu0 %v298
    %v616 = vpop.f32.mrf.mxu0
    %v617 = vadd.f32 0.0, %v616
    %v618 = vpop.f32.mrf.mxu0
    %v619 = vadd.f32 0.0, %v618
    %v620 = vpop.f32.mrf.mxu0
    %v621 = vadd.f32 0.0, %v620
    %v622 = vpop.f32.mrf.mxu0
    %v623 = vadd.f32 0.0, %v622
    %624 = vmatprep.mubr.bf16.mxu0 0
    %625 = vmatmul.mubr.bf16.gmra.mxu0 %v301
    %v626 = vpop.f32.mrf.mxu0
    %v627 = vadd.f32 0.0, %v626
    %v628 = vpop.f32.mrf.mxu0
    %v629 = vadd.f32 0.0, %v628
    %v630 = vpop.f32.mrf.mxu0
    %v631 = vadd.f32 0.0, %v630
    %v632 = vpop.f32.mrf.mxu0
    %v633 = vadd.f32 0.0, %v632
    %634 = vmatprep.mubr.bf16.mxu0 0
    %635 = vmatmul.mubr.bf16.gmra.mxu0 %v304
    %v636 = vpop.f32.mrf.mxu0
    %v637 = vadd.f32 0.0, %v636
    %v638 = vpop.f32.mrf.mxu0
    %v639 = vadd.f32 0.0, %v638
    %v640 = vpop.f32.mrf.mxu0
    %v641 = vadd.f32 0.0, %v640
    %v642 = vpop.f32.mrf.mxu0
    %v643 = vadd.f32 0.0, %v642
    %644 = vmatprep.mubr.bf16.mxu0 0
    %645 = vmatmul.mubr.bf16.gmra.mxu0 %v307
    %v646 = vpop.f32.mrf.mxu0
    %v647 = vadd.f32 0.0, %v646
    %v648 = vpop.f32.mrf.mxu0
    %v649 = vadd.f32 0.0, %v648
    %v650 = vpop.f32.mrf.mxu0
    %v651 = vadd.f32 0.0, %v650
    %v652 = vpop.f32.mrf.mxu0
    %v653 = vadd.f32 0.0, %v652
    %654 = vmatprep.mubr.bf16.mxu0 0
    %655 = vmatmul.mubr.bf16.gmra.mxu0 %v310
    %v656 = vpop.f32.mrf.mxu0
    %v657 = vadd.f32 0.0, %v656
    %v658 = vpop.f32.mrf.mxu0
    %v659 = vadd.f32 0.0, %v658
    %v660 = vpop.f32.mrf.mxu0
    %v661 = vadd.f32 0.0, %v660
    %v662 = vpop.f32.mrf.mxu0
    %v663 = vadd.f32 0.0, %v662
    %664 = vdwg.mxu0
    %665 = vmatprep.subr.bf16.mxu0 0
    %666 = vmatpush1.bf16.msra.mxu0 0
    %667 = vmatprep.subr.bf16.mxu0 0
    %668 = vmatpush1.bf16.msra.mxu0 0
    %669 = vmatprep.subr.bf16.mxu0 0
    %670 = vmatpush1.bf16.msra.mxu0 0
    %671 = vmatprep.subr.bf16.mxu0 0
    %672 = vmatpush1.bf16.msra.mxu0 0
    %673 = vmatprep.subr.bf16.mxu0 %v198
    %674 = vmatpush1.bf16.msra.mxu0 %v197
    %675 = vmatprep.subr.bf16.mxu0 %v194
    %676 = vmatpush1.bf16.msra.mxu0 %v193
    %677 = vmatprep.subr.bf16.mxu0 %v190
    %678 = vmatpush1.bf16.msra.mxu0 %v189
    %679 = vmatprep.subr.bf16.mxu0 %v186
    %680 = vmatpush1.bf16.msra.mxu0 %v185
    %681 = vmatprep.subr.bf16.mxu0 0
    %682 = vmatpush2.bf16.msra.mxu0 0
    %683 = vmatprep.subr.bf16.mxu0 0
    %684 = vmatpush2.bf16.msra.mxu0 0
    %685 = vmatprep.subr.bf16.mxu0 0
    %686 = vmatpush2.bf16.msra.mxu0 0
    %687 = vmatprep.subr.bf16.mxu0 0
    %688 = vmatpush2.bf16.msra.mxu0 0
    %689 = vmatprep.subr.bf16.mxu0 0
    %690 = vmatpush2.bf16.msra.mxu0 0
    %691 = vmatprep.subr.bf16.mxu0 0
    %692 = vmatpush2.bf16.msra.mxu0 0
    %693 = vmatprep.subr.bf16.mxu0 0
    %694 = vmatpush2.bf16.msra.mxu0 0
    %695 = vmatprep.subr.bf16.mxu0 0
    %696 = vmatpush2.bf16.msra.mxu0 0
    %697 = vmatprep.mubr.bf16.mxu0 0
    %698 = vmatmul.mubr.bf16.gmra.mxu0 %v217
    %v699 = vpop.f32.mrf.mxu0
    %v700 = vadd.f32 0.0, %v699
    %v701 = vpop.f32.mrf.mxu0
    %v702 = vadd.f32 0.0, %v701
    %v703 = vpop.f32.mrf.mxu0
    %v704 = vadd.f32 0.0, %v703
    %v705 = vpop.f32.mrf.mxu0
    %v706 = vadd.f32 0.0, %v705
    %707 = vmatprep.mubr.bf16.mxu0 0
    %708 = vmatmul.mubr.bf16.gmra.mxu0 %v220
    %v709 = vpop.f32.mrf.mxu0
    %v710 = vadd.f32 0.0, %v709
    %v711 = vpop.f32.mrf.mxu0
    %v712 = vadd.f32 0.0, %v711
    %v713 = vpop.f32.mrf.mxu0
    %v714 = vadd.f32 0.0, %v713
    %v715 = vpop.f32.mrf.mxu0
    %v716 = vadd.f32 0.0, %v715
    %717 = vmatprep.mubr.bf16.mxu0 0
    %718 = vmatmul.mubr.bf16.gmra.mxu0 %v223
    %v719 = vpop.f32.mrf.mxu0
    %v720 = vadd.f32 0.0, %v719
    %v721 = vpop.f32.mrf.mxu0
    %v722 = vadd.f32 0.0, %v721
    %v723 = vpop.f32.mrf.mxu0
    %v724 = vadd.f32 0.0, %v723
    %v725 = vpop.f32.mrf.mxu0
    %v726 = vadd.f32 0.0, %v725
    %727 = vmatprep.mubr.bf16.mxu0 0
    %728 = vmatmul.mubr.bf16.gmra.mxu0 %v226
    %v729 = vpop.f32.mrf.mxu0
    %v730 = vadd.f32 0.0, %v729
    %v731 = vpop.f32.mrf.mxu0
    %v732 = vadd.f32 0.0, %v731
    %v733 = vpop.f32.mrf.mxu0
    %v734 = vadd.f32 0.0, %v733
    %v735 = vpop.f32.mrf.mxu0
    %v736 = vadd.f32 0.0, %v735
    %737 = vmatprep.mubr.bf16.mxu0 0
    %738 = vmatmul.mubr.bf16.gmra.mxu0 %v229
    %v739 = vpop.f32.mrf.mxu0
    %v740 = vadd.f32 0.0, %v739
    %v741 = vpop.f32.mrf.mxu0
    %v742 = vadd.f32 0.0, %v741
    %v743 = vpop.f32.mrf.mxu0
    %v744 = vadd.f32 0.0, %v743
    %v745 = vpop.f32.mrf.mxu0
    %v746 = vadd.f32 0.0, %v745
    %747 = vmatprep.mubr.bf16.mxu0 0
    %748 = vmatmul.mubr.bf16.gmra.mxu0 %v232
    %v749 = vpop.f32.mrf.mxu0
    %v750 = vadd.f32 0.0, %v749
    %v751 = vpop.f32.mrf.mxu0
    %v752 = vadd.f32 0.0, %v751
    %v753 = vpop.f32.mrf.mxu0
    %v754 = vadd.f32 0.0, %v753
    %v755 = vpop.f32.mrf.mxu0
    %v756 = vadd.f32 0.0, %v755
    %757 = vmatprep.mubr.bf16.mxu0 0
    %758 = vmatmul.mubr.bf16.gmra.mxu0 %v235
    %v759 = vpop.f32.mrf.mxu0
    %v760 = vadd.f32 0.0, %v759
    %v761 = vpop.f32.mrf.mxu0
    %v762 = vadd.f32 0.0, %v761
    %v763 = vpop.f32.mrf.mxu0
    %v764 = vadd.f32 0.0, %v763
    %v765 = vpop.f32.mrf.mxu0
    %v766 = vadd.f32 0.0, %v765
    %767 = vmatprep.mubr.bf16.mxu0 0
    %768 = vmatmul.mubr.bf16.gmra.mxu0 %v238
    %v769 = vpop.f32.mrf.mxu0
    %v770 = vadd.f32 0.0, %v769
    %v771 = vpop.f32.mrf.mxu0
    %v772 = vadd.f32 0.0, %v771
    %v773 = vpop.f32.mrf.mxu0
    %v774 = vadd.f32 0.0, %v773
    %v775 = vpop.f32.mrf.mxu0
    %v776 = vadd.f32 0.0, %v775
    %777 = vmatprep.mubr.bf16.mxu0 0
    %778 = vmatmul.mubr.bf16.gmra.mxu0 %v241
    %v779 = vpop.f32.mrf.mxu0
    %v780 = vadd.f32 0.0, %v779
    %v781 = vpop.f32.mrf.mxu0
    %v782 = vadd.f32 0.0, %v781
    %v783 = vpop.f32.mrf.mxu0
    %v784 = vadd.f32 0.0, %v783
    %v785 = vpop.f32.mrf.mxu0
    %v786 = vadd.f32 0.0, %v785
    %787 = vmatprep.mubr.bf16.mxu0 0
    %788 = vmatmul.mubr.bf16.gmra.mxu0 %v244
    %v789 = vpop.f32.mrf.mxu0
    %v790 = vadd.f32 0.0, %v789
    %v791 = vpop.f32.mrf.mxu0
    %v792 = vadd.f32 0.0, %v791
    %v793 = vpop.f32.mrf.mxu0
    %v794 = vadd.f32 0.0, %v793
    %v795 = vpop.f32.mrf.mxu0
    %v796 = vadd.f32 0.0, %v795
    %797 = vmatprep.mubr.bf16.mxu0 0
    %798 = vmatmul.mubr.bf16.gmra.mxu0 %v247
    %v799 = vpop.f32.mrf.mxu0
    %v800 = vadd.f32 0.0, %v799
    %v801 = vpop.f32.mrf.mxu0
    %v802 = vadd.f32 0.0, %v801
    %v803 = vpop.f32.mrf.mxu0
    %v804 = vadd.f32 0.0, %v803
    %v805 = vpop.f32.mrf.mxu0
    %v806 = vadd.f32 0.0, %v805
    %807 = vmatprep.mubr.bf16.mxu0 0
    %808 = vmatmul.mubr.bf16.gmra.mxu0 %v250
    %v809 = vpop.f32.mrf.mxu0
    %v810 = vadd.f32 0.0, %v809
    %v811 = vpop.f32.mrf.mxu0
    %v812 = vadd.f32 0.0, %v811
    %v813 = vpop.f32.mrf.mxu0
    %v814 = vadd.f32 0.0, %v813
    %v815 = vpop.f32.mrf.mxu0
    %v816 = vadd.f32 0.0, %v815
    %817 = vmatprep.mubr.bf16.mxu0 0
    %818 = vmatmul.mubr.bf16.gmra.mxu0 %v253
    %v819 = vpop.f32.mrf.mxu0
    %v820 = vadd.f32 0.0, %v819
    %v821 = vpop.f32.mrf.mxu0
    %v822 = vadd.f32 0.0, %v821
    %v823 = vpop.f32.mrf.mxu0
    %v824 = vadd.f32 0.0, %v823
    %v825 = vpop.f32.mrf.mxu0
    %v826 = vadd.f32 0.0, %v825
    %827 = vmatprep.mubr.bf16.mxu0 0
    %828 = vmatmul.mubr.bf16.gmra.mxu0 %v256
    %v829 = vpop.f32.mrf.mxu0
    %v830 = vadd.f32 0.0, %v829
    %v831 = vpop.f32.mrf.mxu0
    %v832 = vadd.f32 0.0, %v831
    %v833 = vpop.f32.mrf.mxu0
    %v834 = vadd.f32 0.0, %v833
    %v835 = vpop.f32.mrf.mxu0
    %v836 = vadd.f32 0.0, %v835
    %837 = vmatprep.mubr.bf16.mxu0 0
    %838 = vmatmul.mubr.bf16.gmra.mxu0 %v259
    %v839 = vpop.f32.mrf.mxu0
    %v840 = vadd.f32 0.0, %v839
    %v841 = vpop.f32.mrf.mxu0
    %v842 = vadd.f32 0.0, %v841
    %v843 = vpop.f32.mrf.mxu0
    %v844 = vadd.f32 0.0, %v843
    %v845 = vpop.f32.mrf.mxu0
    %v846 = vadd.f32 0.0, %v845
    %847 = vmatprep.mubr.bf16.mxu0 0
    %848 = vmatmul.mubr.bf16.gmra.mxu0 %v262
    %v849 = vpop.f32.mrf.mxu0
    %v850 = vadd.f32 0.0, %v849
    %v851 = vpop.f32.mrf.mxu0
    %v852 = vadd.f32 0.0, %v851
    %v853 = vpop.f32.mrf.mxu0
    %v854 = vadd.f32 0.0, %v853
    %v855 = vpop.f32.mrf.mxu0
    %v856 = vadd.f32 0.0, %v855
    %857 = vmatprep.mubr.bf16.mxu0 0
    %858 = vmatmul.mubr.bf16.gmra.mxu0 %v265
    %v859 = vpop.f32.mrf.mxu0
    %v860 = vadd.f32 0.0, %v859
    %v861 = vpop.f32.mrf.mxu0
    %v862 = vadd.f32 0.0, %v861
    %v863 = vpop.f32.mrf.mxu0
    %v864 = vadd.f32 0.0, %v863
    %v865 = vpop.f32.mrf.mxu0
    %v866 = vadd.f32 0.0, %v865
    %867 = vmatprep.mubr.bf16.mxu0 0
    %868 = vmatmul.mubr.bf16.gmra.mxu0 %v268
    %v869 = vpop.f32.mrf.mxu0
    %v870 = vadd.f32 0.0, %v869
    %v871 = vpop.f32.mrf.mxu0
    %v872 = vadd.f32 0.0, %v871
    %v873 = vpop.f32.mrf.mxu0
    %v874 = vadd.f32 0.0, %v873
    %v875 = vpop.f32.mrf.mxu0
    %v876 = vadd.f32 0.0, %v875
    %877 = vmatprep.mubr.bf16.mxu0 0
    %878 = vmatmul.mubr.bf16.gmra.mxu0 %v271
    %v879 = vpop.f32.mrf.mxu0
    %v880 = vadd.f32 0.0, %v879
    %v881 = vpop.f32.mrf.mxu0
    %v882 = vadd.f32 0.0, %v881
    %v883 = vpop.f32.mrf.mxu0
    %v884 = vadd.f32 0.0, %v883
    %v885 = vpop.f32.mrf.mxu0
    %v886 = vadd.f32 0.0, %v885
    %887 = vmatprep.mubr.bf16.mxu0 0
    %888 = vmatmul.mubr.bf16.gmra.mxu0 %v274
    %v889 = vpop.f32.mrf.mxu0
    %v890 = vadd.f32 0.0, %v889
    %v891 = vpop.f32.mrf.mxu0
    %v892 = vadd.f32 0.0, %v891
    %v893 = vpop.f32.mrf.mxu0
    %v894 = vadd.f32 0.0, %v893
    %v895 = vpop.f32.mrf.mxu0
    %v896 = vadd.f32 0.0, %v895
    %897 = vmatprep.mubr.bf16.mxu0 0
    %898 = vmatmul.mubr.bf16.gmra.mxu0 %v277
    %v899 = vpop.f32.mrf.mxu0
    %v900 = vadd.f32 0.0, %v899
    %v901 = vpop.f32.mrf.mxu0
    %v902 = vadd.f32 0.0, %v901
    %v903 = vpop.f32.mrf.mxu0
    %v904 = vadd.f32 0.0, %v903
    %v905 = vpop.f32.mrf.mxu0
    %v906 = vadd.f32 0.0, %v905
    %907 = vmatprep.mubr.bf16.mxu0 0
    %908 = vmatmul.mubr.bf16.gmra.mxu0 %v280
    %v909 = vpop.f32.mrf.mxu0
    %v910 = vadd.f32 0.0, %v909
    %v911 = vpop.f32.mrf.mxu0
    %v912 = vadd.f32 0.0, %v911
    %v913 = vpop.f32.mrf.mxu0
    %v914 = vadd.f32 0.0, %v913
    %v915 = vpop.f32.mrf.mxu0
    %v916 = vadd.f32 0.0, %v915
    %917 = vmatprep.mubr.bf16.mxu0 0
    %918 = vmatmul.mubr.bf16.gmra.mxu0 %v283
    %v919 = vpop.f32.mrf.mxu0
    %v920 = vadd.f32 0.0, %v919
    %v921 = vpop.f32.mrf.mxu0
    %v922 = vadd.f32 0.0, %v921
    %v923 = vpop.f32.mrf.mxu0
    %v924 = vadd.f32 0.0, %v923
    %v925 = vpop.f32.mrf.mxu0
    %v926 = vadd.f32 0.0, %v925
    %927 = vmatprep.mubr.bf16.mxu0 0
    %928 = vmatmul.mubr.bf16.gmra.mxu0 %v286
    %v929 = vpop.f32.mrf.mxu0
    %v930 = vadd.f32 0.0, %v929
    %v931 = vpop.f32.mrf.mxu0
    %v932 = vadd.f32 0.0, %v931
    %v933 = vpop.f32.mrf.mxu0
    %v934 = vadd.f32 0.0, %v933
    %v935 = vpop.f32.mrf.mxu0
    %v936 = vadd.f32 0.0, %v935
    %937 = vmatprep.mubr.bf16.mxu0 0
    %938 = vmatmul.mubr.bf16.gmra.mxu0 %v289
    %v939 = vpop.f32.mrf.mxu0
    %v940 = vadd.f32 0.0, %v939
    %v941 = vpop.f32.mrf.mxu0
    %v942 = vadd.f32 0.0, %v941
    %v943 = vpop.f32.mrf.mxu0
    %v944 = vadd.f32 0.0, %v943
    %v945 = vpop.f32.mrf.mxu0
    %v946 = vadd.f32 0.0, %v945
    %947 = vmatprep.mubr.bf16.mxu0 0
    %948 = vmatmul.mubr.bf16.gmra.mxu0 %v292
    %v949 = vpop.f32.mrf.mxu0
    %v950 = vadd.f32 0.0, %v949
    %v951 = vpop.f32.mrf.mxu0
    %v952 = vadd.f32 0.0, %v951
    %v953 = vpop.f32.mrf.mxu0
    %v954 = vadd.f32 0.0, %v953
    %v955 = vpop.f32.mrf.mxu0
    %v956 = vadd.f32 0.0, %v955
    %957 = vmatprep.mubr.bf16.mxu0 0
    %958 = vmatmul.mubr.bf16.gmra.mxu0 %v295
    %v959 = vpop.f32.mrf.mxu0
    %v960 = vadd.f32 0.0, %v959
    %v961 = vpop.f32.mrf.mxu0
    %v962 = vadd.f32 0.0, %v961
    %v963 = vpop.f32.mrf.mxu0
    %v964 = vadd.f32 0.0, %v963
    %v965 = vpop.f32.mrf.mxu0
    %v966 = vadd.f32 0.0, %v965
    %967 = vmatprep.mubr.bf16.mxu0 0
    %968 = vmatmul.mubr.bf16.gmra.mxu0 %v298
    %v969 = vpop.f32.mrf.mxu0
    %v970 = vadd.f32 0.0, %v969
    %v971 = vpop.f32.mrf.mxu0
    %v972 = vadd.f32 0.0, %v971
    %v973 = vpop.f32.mrf.mxu0
    %v974 = vadd.f32 0.0, %v973
    %v975 = vpop.f32.mrf.mxu0
    %v976 = vadd.f32 0.0, %v975
    %977 = vmatprep.mubr.bf16.mxu0 0
    %978 = vmatmul.mubr.bf16.gmra.mxu0 %v301
    %v979 = vpop.f32.mrf.mxu0
    %v980 = vadd.f32 0.0, %v979
    %v981 = vpop.f32.mrf.mxu0
    %v982 = vadd.f32 0.0, %v981
    %v983 = vpop.f32.mrf.mxu0
    %v984 = vadd.f32 0.0, %v983
    %v985 = vpop.f32.mrf.mxu0
    %v986 = vadd.f32 0.0, %v985
    %987 = vmatprep.mubr.bf16.mxu0 0
    %988 = vmatmul.mubr.bf16.gmra.mxu0 %v304
    %v989 = vpop.f32.mrf.mxu0
    %v990 = vadd.f32 0.0, %v989
    %v991 = vpop.f32.mrf.mxu0
    %v992 = vadd.f32 0.0, %v991
    %v993 = vpop.f32.mrf.mxu0
    %v994 = vadd.f32 0.0, %v993
    %v995 = vpop.f32.mrf.mxu0
    %v996 = vadd.f32 0.0, %v995
    %997 = vmatprep.mubr.bf16.mxu0 0
    %998 = vmatmul.mubr.bf16.gmra.mxu0 %v307
    %v999 = vpop.f32.mrf.mxu0
    %v1000 = vadd.f32 0.0, %v999
    %v1001 = vpop.f32.mrf.mxu0
    %v1002 = vadd.f32 0.0, %v1001
    %v1003 = vpop.f32.mrf.mxu0
    %v1004 = vadd.f32 0.0, %v1003
    %v1005 = vpop.f32.mrf.mxu0
    %v1006 = vadd.f32 0.0, %v1005
    %1007 = vmatprep.mubr.bf16.mxu0 0
    %1008 = vmatmul.mubr.bf16.gmra.mxu0 %v310
    %v1009 = vpop.f32.mrf.mxu0
    %v1010 = vadd.f32 0.0, %v1009
    %v1011 = vpop.f32.mrf.mxu0
    %v1012 = vadd.f32 0.0, %v1011
    %v1013 = vpop.f32.mrf.mxu0
    %v1014 = vadd.f32 0.0, %v1013
    %v1015 = vpop.f32.mrf.mxu0
    %v1016 = vadd.f32 0.0, %v1015
    %1017 = vdwg.mxu0
    %v1018 = vld [vmem:[%s2] sm:$0xf]
    %v1020 = vlaneseq
    %v1021 = vshrl.u32 %v1020, 7
    %v1022 = vsub.s32 0, %v1021
    %v1023 = vrot.slane %v1018, %v1022
    %v1024 = vlaneseq
    %v1025 = vshrl.u32 %v1024, 7
    %v1026 = vsub.s32 1, %v1025
    %v1027 = vrot.slane %v1018, %v1026
    %v1028 = vlaneseq
    %v1029 = vshrl.u32 %v1028, 7
    %v1030 = vsub.s32 2, %v1029
    %v1031 = vrot.slane %v1018, %v1030
    %v1032 = vlaneseq
    %v1033 = vshrl.u32 %v1032, 7
    %v1034 = vsub.s32 3, %v1033
    %v1035 = vrot.slane %v1018, %v1034
    %v1040 = vsub.f32 %v1023, %v347
    %v1041 = vsub.f32 %v1027, %v349
    %v1042 = vsub.f32 %v1031, %v700
    %v1043 = vsub.f32 %v1035, %v702
    %v1044 = vsub.f32 %v1023, %v351
    %v1045 = vsub.f32 %v1027, %v353
    %v1046 = vsub.f32 %v1031, %v704
    %v1047 = vsub.f32 %v1035, %v706
    %v1048 = vsub.f32 %v1023, %v357
    %v1049 = vsub.f32 %v1027, %v359
    %v1050 = vsub.f32 %v1031, %v710
    %v1051 = vsub.f32 %v1035, %v712
    %v1052 = vsub.f32 %v1023, %v361
    %v1053 = vsub.f32 %v1027, %v363
    %v1054 = vsub.f32 %v1031, %v714
    %v1055 = vsub.f32 %v1035, %v716
    %v1056 = vsub.f32 %v1023, %v367
    %v1057 = vsub.f32 %v1027, %v369
    %v1058 = vsub.f32 %v1031, %v720
    %v1059 = vsub.f32 %v1035, %v722
    %v1060 = vsub.f32 %v1023, %v371
    %v1061 = vsub.f32 %v1027, %v373
    %v1062 = vsub.f32 %v1031, %v724
    %v1063 = vsub.f32 %v1035, %v726
    %v1064 = vsub.f32 %v1023, %v377
    %v1065 = vsub.f32 %v1027, %v379
    %v1066 = vsub.f32 %v1031, %v730
    %v1067 = vsub.f32 %v1035, %v732
    %v1068 = vsub.f32 %v1023, %v381
    %v1069 = vsub.f32 %v1027, %v383
    %v1070 = vsub.f32 %v1031, %v734
    %v1071 = vsub.f32 %v1035, %v736
    %v1072 = vsub.f32 %v1023, %v387
    %v1073 = vsub.f32 %v1027, %v389
    %v1074 = vsub.f32 %v1031, %v740
    %v1075 = vsub.f32 %v1035, %v742
    %v1076 = vsub.f32 %v1023, %v391
    %v1077 = vsub.f32 %v1027, %v393
    %v1078 = vsub.f32 %v1031, %v744
    %v1079 = vsub.f32 %v1035, %v746
    %v1080 = vsub.f32 %v1023, %v397
    %v1081 = vsub.f32 %v1027, %v399
    %v1082 = vsub.f32 %v1031, %v750
    %v1083 = vsub.f32 %v1035, %v752
    %v1084 = vsub.f32 %v1023, %v401
    %v1085 = vsub.f32 %v1027, %v403
    %v1086 = vsub.f32 %v1031, %v754
    %v1087 = vsub.f32 %v1035, %v756
    %v1088 = vsub.f32 %v1023, %v407
    %v1089 = vsub.f32 %v1027, %v409
    %v1090 = vsub.f32 %v1031, %v760
    %v1091 = vsub.f32 %v1035, %v762
    %v1092 = vsub.f32 %v1023, %v411
    %v1093 = vsub.f32 %v1027, %v413
    %v1094 = vsub.f32 %v1031, %v764
    %v1095 = vsub.f32 %v1035, %v766
    %v1096 = vsub.f32 %v1023, %v417
    %v1097 = vsub.f32 %v1027, %v419
    %v1098 = vsub.f32 %v1031, %v770
    %v1099 = vsub.f32 %v1035, %v772
    %v1100 = vsub.f32 %v1023, %v421
    %v1101 = vsub.f32 %v1027, %v423
    %v1102 = vsub.f32 %v1031, %v774
    %v1103 = vsub.f32 %v1035, %v776
    %v1104 = vsub.f32 %v1023, %v427
    %v1105 = vsub.f32 %v1027, %v429
    %v1106 = vsub.f32 %v1031, %v780
    %v1107 = vsub.f32 %v1035, %v782
    %v1108 = vsub.f32 %v1023, %v431
    %v1109 = vsub.f32 %v1027, %v433
    %v1110 = vsub.f32 %v1031, %v784
    %v1111 = vsub.f32 %v1035, %v786
    %v1112 = vsub.f32 %v1023, %v437
    %v1113 = vsub.f32 %v1027, %v439
    %v1114 = vsub.f32 %v1031, %v790
    %v1115 = vsub.f32 %v1035, %v792
    %v1116 = vsub.f32 %v1023, %v441
    %v1117 = vsub.f32 %v1027, %v443
    %v1118 = vsub.f32 %v1031, %v794
    %v1119 = vsub.f32 %v1035, %v796
    %v1120 = vsub.f32 %v1023, %v447
    %v1121 = vsub.f32 %v1027, %v449
    %v1122 = vsub.f32 %v1031, %v800
    %v1123 = vsub.f32 %v1035, %v802
    %v1124 = vsub.f32 %v1023, %v451
    %v1125 = vsub.f32 %v1027, %v453
    %v1126 = vsub.f32 %v1031, %v804
    %v1127 = vsub.f32 %v1035, %v806
    %v1128 = vsub.f32 %v1023, %v457
    %v1129 = vsub.f32 %v1027, %v459
    %v1130 = vsub.f32 %v1031, %v810
    %v1131 = vsub.f32 %v1035, %v812
    %v1132 = vsub.f32 %v1023, %v461
    %v1133 = vsub.f32 %v1027, %v463
    %v1134 = vsub.f32 %v1031, %v814
    %v1135 = vsub.f32 %v1035, %v816
    %v1136 = vsub.f32 %v1023, %v467
    %v1137 = vsub.f32 %v1027, %v469
    %v1138 = vsub.f32 %v1031, %v820
    %v1139 = vsub.f32 %v1035, %v822
    %v1140 = vsub.f32 %v1023, %v471
    %v1141 = vsub.f32 %v1027, %v473
    %v1142 = vsub.f32 %v1031, %v824
    %v1143 = vsub.f32 %v1035, %v826
    %v1144 = vsub.f32 %v1023, %v477
    %v1145 = vsub.f32 %v1027, %v479
    %v1146 = vsub.f32 %v1031, %v830
    %v1147 = vsub.f32 %v1035, %v832
    %v1148 = vsub.f32 %v1023, %v481
    %v1149 = vsub.f32 %v1027, %v483
    %v1150 = vsub.f32 %v1031, %v834
    %v1151 = vsub.f32 %v1035, %v836
    %v1152 = vsub.f32 %v1023, %v487
    %v1153 = vsub.f32 %v1027, %v489
    %v1154 = vsub.f32 %v1031, %v840
    %v1155 = vsub.f32 %v1035, %v842
    %v1156 = vsub.f32 %v1023, %v491
    %v1157 = vsub.f32 %v1027, %v493
    %v1158 = vsub.f32 %v1031, %v844
    %v1159 = vsub.f32 %v1035, %v846
    %v1160 = vsub.f32 %v1023, %v497
    %v1161 = vsub.f32 %v1027, %v499
    %v1162 = vsub.f32 %v1031, %v850
    %v1163 = vsub.f32 %v1035, %v852
    %v1164 = vsub.f32 %v1023, %v501
    %v1165 = vsub.f32 %v1027, %v503
    %v1166 = vsub.f32 %v1031, %v854
    %v1167 = vsub.f32 %v1035, %v856
    %v1168 = vsub.f32 %v1023, %v507
    %v1169 = vsub.f32 %v1027, %v509
    %v1170 = vsub.f32 %v1031, %v860
    %v1171 = vsub.f32 %v1035, %v862
    %v1172 = vsub.f32 %v1023, %v511
    %v1173 = vsub.f32 %v1027, %v513
    %v1174 = vsub.f32 %v1031, %v864
    %v1175 = vsub.f32 %v1035, %v866
    %v1176 = vsub.f32 %v1023, %v517
    %v1177 = vsub.f32 %v1027, %v519
    %v1178 = vsub.f32 %v1031, %v870
    %v1179 = vsub.f32 %v1035, %v872
    %v1180 = vsub.f32 %v1023, %v521
    %v1181 = vsub.f32 %v1027, %v523
    %v1182 = vsub.f32 %v1031, %v874
    %v1183 = vsub.f32 %v1035, %v876
    %v1184 = vsub.f32 %v1023, %v527
    %v1185 = vsub.f32 %v1027, %v529
    %v1186 = vsub.f32 %v1031, %v880
    %v1187 = vsub.f32 %v1035, %v882
    %v1188 = vsub.f32 %v1023, %v531
    %v1189 = vsub.f32 %v1027, %v533
    %v1190 = vsub.f32 %v1031, %v884
    %v1191 = vsub.f32 %v1035, %v886
    %v1192 = vsub.f32 %v1023, %v537
    %v1193 = vsub.f32 %v1027, %v539
    %v1194 = vsub.f32 %v1031, %v890
    %v1195 = vsub.f32 %v1035, %v892
    %v1196 = vsub.f32 %v1023, %v541
    %v1197 = vsub.f32 %v1027, %v543
    %v1198 = vsub.f32 %v1031, %v894
    %v1199 = vsub.f32 %v1035, %v896
    %v1200 = vsub.f32 %v1023, %v547
    %v1201 = vsub.f32 %v1027, %v549
    %v1202 = vsub.f32 %v1031, %v900
    %v1203 = vsub.f32 %v1035, %v902
    %v1204 = vsub.f32 %v1023, %v551
    %v1205 = vsub.f32 %v1027, %v553
    %v1206 = vsub.f32 %v1031, %v904
    %v1207 = vsub.f32 %v1035, %v906
    %v1208 = vsub.f32 %v1023, %v557
    %v1209 = vsub.f32 %v1027, %v559
    %v1210 = vsub.f32 %v1031, %v910
    %v1211 = vsub.f32 %v1035, %v912
    %v1212 = vsub.f32 %v1023, %v561
    %v1213 = vsub.f32 %v1027, %v563
    %v1214 = vsub.f32 %v1031, %v914
    %v1215 = vsub.f32 %v1035, %v916
    %v1216 = vsub.f32 %v1023, %v567
    %v1217 = vsub.f32 %v1027, %v569
    %v1218 = vsub.f32 %v1031, %v920
    %v1219 = vsub.f32 %v1035, %v922
    %v1220 = vsub.f32 %v1023, %v571
    %v1221 = vsub.f32 %v1027, %v573
    %v1222 = vsub.f32 %v1031, %v924
    %v1223 = vsub.f32 %v1035, %v926
    %v1224 = vsub.f32 %v1023, %v577
    %v1225 = vsub.f32 %v1027, %v579
    %v1226 = vsub.f32 %v1031, %v930
    %v1227 = vsub.f32 %v1035, %v932
    %v1228 = vsub.f32 %v1023, %v581
    %v1229 = vsub.f32 %v1027, %v583
    %v1230 = vsub.f32 %v1031, %v934
    %v1231 = vsub.f32 %v1035, %v936
    %v1232 = vsub.f32 %v1023, %v587
    %v1233 = vsub.f32 %v1027, %v589
    %v1234 = vsub.f32 %v1031, %v940
    %v1235 = vsub.f32 %v1035, %v942
    %v1236 = vsub.f32 %v1023, %v591
    %v1237 = vsub.f32 %v1027, %v593
    %v1238 = vsub.f32 %v1031, %v944
    %v1239 = vsub.f32 %v1035, %v946
    %v1240 = vsub.f32 %v1023, %v597
    %v1241 = vsub.f32 %v1027, %v599
    %v1242 = vsub.f32 %v1031, %v950
    %v1243 = vsub.f32 %v1035, %v952
    %v1244 = vsub.f32 %v1023, %v601
    %v1245 = vsub.f32 %v1027, %v603
    %v1246 = vsub.f32 %v1031, %v954
    %v1247 = vsub.f32 %v1035, %v956
    %v1248 = vsub.f32 %v1023, %v607
    %v1249 = vsub.f32 %v1027, %v609
    %v1250 = vsub.f32 %v1031, %v960
    %v1251 = vsub.f32 %v1035, %v962
    %v1252 = vsub.f32 %v1023, %v611
    %v1253 = vsub.f32 %v1027, %v613
    %v1254 = vsub.f32 %v1031, %v964
    %v1255 = vsub.f32 %v1035, %v966
    %v1256 = vsub.f32 %v1023, %v617
    %v1257 = vsub.f32 %v1027, %v619
    %v1258 = vsub.f32 %v1031, %v970
    %v1259 = vsub.f32 %v1035, %v972
    %v1260 = vsub.f32 %v1023, %v621
    %v1261 = vsub.f32 %v1027, %v623
    %v1262 = vsub.f32 %v1031, %v974
    %v1263 = vsub.f32 %v1035, %v976
    %v1264 = vsub.f32 %v1023, %v627
    %v1265 = vsub.f32 %v1027, %v629
    %v1266 = vsub.f32 %v1031, %v980
    %v1267 = vsub.f32 %v1035, %v982
    %v1268 = vsub.f32 %v1023, %v631
    %v1269 = vsub.f32 %v1027, %v633
    %v1270 = vsub.f32 %v1031, %v984
    %v1271 = vsub.f32 %v1035, %v986
    %v1272 = vsub.f32 %v1023, %v637
    %v1273 = vsub.f32 %v1027, %v639
    %v1274 = vsub.f32 %v1031, %v990
    %v1275 = vsub.f32 %v1035, %v992
    %v1276 = vsub.f32 %v1023, %v641
    %v1277 = vsub.f32 %v1027, %v643
    %v1278 = vsub.f32 %v1031, %v994
    %v1279 = vsub.f32 %v1035, %v996
    %v1280 = vsub.f32 %v1023, %v647
    %v1281 = vsub.f32 %v1027, %v649
    %v1282 = vsub.f32 %v1031, %v1000
    %v1283 = vsub.f32 %v1035, %v1002
    %v1284 = vsub.f32 %v1023, %v651
    %v1285 = vsub.f32 %v1027, %v653
    %v1286 = vsub.f32 %v1031, %v1004
    %v1287 = vsub.f32 %v1035, %v1006
    %v1288 = vsub.f32 %v1023, %v657
    %v1289 = vsub.f32 %v1027, %v659
    %v1290 = vsub.f32 %v1031, %v1010
    %v1291 = vsub.f32 %v1035, %v1012
    %v1292 = vsub.f32 %v1023, %v661
    %v1293 = vsub.f32 %v1027, %v663
    %v1294 = vsub.f32 %v1031, %v1014
    %v1295 = vsub.f32 %v1035, %v1016
    %v1296 = vlaneseq
    %v1297 = vand.u32 %v1296, 127
    %v1298 = vadd.s32 %v1297, 128
    %vm1299 = vcmp.le.f32.partialorder %v1040, %v1041
    %v1300 = vsel %vm1299, %v1040, %v1041
    %v1301 = vsel %vm1299, %v1297, %v1298
    %v1302 = vadd.s32 %v1297, 256
    %vm1303 = vcmp.le.f32.partialorder %v1300, %v1042
    %v1304 = vsel %vm1303, %v1300, %v1042
    %v1305 = vsel %vm1303, %v1301, %v1302
    %v1306 = vadd.s32 %v1297, 384
    %vm1307 = vcmp.le.f32.partialorder %v1304, %v1043
    %v1308 = vsel %vm1307, %v1304, %v1043
    %v1309 = vsel %vm1307, %v1305, %v1306
    %1310 = vmin.index.xlane.f32.xlu0 %v1308
    %v1311 = vpop.xlane.xlu0 %1310
    %1312 = vset.pattern.permute.xlu0 %v1311
    %1313 = vperm.xlu0 %1312, %v1309
    %v1314 = vpop.permute.xlu0 %1313
    %vm1315 = vcmp.le.f32.partialorder %v1044, %v1045
    %v1316 = vsel %vm1315, %v1044, %v1045
    %v1317 = vsel %vm1315, %v1297, %v1298
    %vm1318 = vcmp.le.f32.partialorder %v1316, %v1046
    %v1319 = vsel %vm1318, %v1316, %v1046
    %v1320 = vsel %vm1318, %v1317, %v1302
    %vm1321 = vcmp.le.f32.partialorder %v1319, %v1047
    %v1322 = vsel %vm1321, %v1319, %v1047
    %v1323 = vsel %vm1321, %v1320, %v1306
    %1324 = vmin.index.xlane.f32.xlu0 %v1322
    %v1325 = vpop.xlane.xlu0 %1324
    %1326 = vset.pattern.permute.xlu0 %v1325
    %1327 = vperm.xlu0 %1326, %v1323
    %v1328 = vpop.permute.xlu0 %1327
    %vm1329 = vcmp.le.f32.partialorder %v1048, %v1049
    %v1330 = vsel %vm1329, %v1048, %v1049
    %v1331 = vsel %vm1329, %v1297, %v1298
    %vm1332 = vcmp.le.f32.partialorder %v1330, %v1050
    %v1333 = vsel %vm1332, %v1330, %v1050
    %v1334 = vsel %vm1332, %v1331, %v1302
    %vm1335 = vcmp.le.f32.partialorder %v1333, %v1051
    %v1336 = vsel %vm1335, %v1333, %v1051
    %v1337 = vsel %vm1335, %v1334, %v1306
    %1338 = vmin.index.xlane.f32.xlu0 %v1336
    %v1339 = vpop.xlane.xlu0 %1338
    %1340 = vset.pattern.permute.xlu0 %v1339
    %1341 = vperm.xlu0 %1340, %v1337
    %v1342 = vpop.permute.xlu0 %1341
    %vm1343 = vcmp.le.f32.partialorder %v1052, %v1053
    %v1344 = vsel %vm1343, %v1052, %v1053
    %v1345 = vsel %vm1343, %v1297, %v1298
    %vm1346 = vcmp.le.f32.partialorder %v1344, %v1054
    %v1347 = vsel %vm1346, %v1344, %v1054
    %v1348 = vsel %vm1346, %v1345, %v1302
    %vm1349 = vcmp.le.f32.partialorder %v1347, %v1055
    %v1350 = vsel %vm1349, %v1347, %v1055
    %v1351 = vsel %vm1349, %v1348, %v1306
    %1352 = vmin.index.xlane.f32.xlu0 %v1350
    %v1353 = vpop.xlane.xlu0 %1352
    %1354 = vset.pattern.permute.xlu0 %v1353
    %1355 = vperm.xlu0 %1354, %v1351
    %v1356 = vpop.permute.xlu0 %1355
    %vm1357 = vcmp.le.f32.partialorder %v1056, %v1057
    %v1358 = vsel %vm1357, %v1056, %v1057
    %v1359 = vsel %vm1357, %v1297, %v1298
    %vm1360 = vcmp.le.f32.partialorder %v1358, %v1058
    %v1361 = vsel %vm1360, %v1358, %v1058
    %v1362 = vsel %vm1360, %v1359, %v1302
    %vm1363 = vcmp.le.f32.partialorder %v1361, %v1059
    %v1364 = vsel %vm1363, %v1361, %v1059
    %v1365 = vsel %vm1363, %v1362, %v1306
    %1366 = vmin.index.xlane.f32.xlu0 %v1364
    %v1367 = vpop.xlane.xlu0 %1366
    %1368 = vset.pattern.permute.xlu0 %v1367
    %1369 = vperm.xlu0 %1368, %v1365
    %v1370 = vpop.permute.xlu0 %1369
    %vm1371 = vcmp.le.f32.partialorder %v1060, %v1061
    %v1372 = vsel %vm1371, %v1060, %v1061
    %v1373 = vsel %vm1371, %v1297, %v1298
    %vm1374 = vcmp.le.f32.partialorder %v1372, %v1062
    %v1375 = vsel %vm1374, %v1372, %v1062
    %v1376 = vsel %vm1374, %v1373, %v1302
    %vm1377 = vcmp.le.f32.partialorder %v1375, %v1063
    %v1378 = vsel %vm1377, %v1375, %v1063
    %v1379 = vsel %vm1377, %v1376, %v1306
    %1380 = vmin.index.xlane.f32.xlu0 %v1378
    %v1381 = vpop.xlane.xlu0 %1380
    %1382 = vset.pattern.permute.xlu0 %v1381
    %1383 = vperm.xlu0 %1382, %v1379
    %v1384 = vpop.permute.xlu0 %1383
    %vm1385 = vcmp.le.f32.partialorder %v1064, %v1065
    %v1386 = vsel %vm1385, %v1064, %v1065
    %v1387 = vsel %vm1385, %v1297, %v1298
    %vm1388 = vcmp.le.f32.partialorder %v1386, %v1066
    %v1389 = vsel %vm1388, %v1386, %v1066
    %v1390 = vsel %vm1388, %v1387, %v1302
    %vm1391 = vcmp.le.f32.partialorder %v1389, %v1067
    %v1392 = vsel %vm1391, %v1389, %v1067
    %v1393 = vsel %vm1391, %v1390, %v1306
    %1394 = vmin.index.xlane.f32.xlu0 %v1392
    %v1395 = vpop.xlane.xlu0 %1394
    %1396 = vset.pattern.permute.xlu0 %v1395
    %1397 = vperm.xlu0 %1396, %v1393
    %v1398 = vpop.permute.xlu0 %1397
    %vm1399 = vcmp.le.f32.partialorder %v1068, %v1069
    %v1400 = vsel %vm1399, %v1068, %v1069
    %v1401 = vsel %vm1399, %v1297, %v1298
    %vm1402 = vcmp.le.f32.partialorder %v1400, %v1070
    %v1403 = vsel %vm1402, %v1400, %v1070
    %v1404 = vsel %vm1402, %v1401, %v1302
    %vm1405 = vcmp.le.f32.partialorder %v1403, %v1071
    %v1406 = vsel %vm1405, %v1403, %v1071
    %v1407 = vsel %vm1405, %v1404, %v1306
    %1408 = vmin.index.xlane.f32.xlu0 %v1406
    %v1409 = vpop.xlane.xlu0 %1408
    %1410 = vset.pattern.permute.xlu0 %v1409
    %1411 = vperm.xlu0 %1410, %v1407
    %v1412 = vpop.permute.xlu0 %1411
    %vm1413 = vcmp.le.f32.partialorder %v1072, %v1073
    %v1414 = vsel %vm1413, %v1072, %v1073
    %v1415 = vsel %vm1413, %v1297, %v1298
    %vm1416 = vcmp.le.f32.partialorder %v1414, %v1074
    %v1417 = vsel %vm1416, %v1414, %v1074
    %v1418 = vsel %vm1416, %v1415, %v1302
    %vm1419 = vcmp.le.f32.partialorder %v1417, %v1075
    %v1420 = vsel %vm1419, %v1417, %v1075
    %v1421 = vsel %vm1419, %v1418, %v1306
    %1422 = vmin.index.xlane.f32.xlu0 %v1420
    %v1423 = vpop.xlane.xlu0 %1422
    %1424 = vset.pattern.permute.xlu0 %v1423
    %1425 = vperm.xlu0 %1424, %v1421
    %v1426 = vpop.permute.xlu0 %1425
    %vm1427 = vcmp.le.f32.partialorder %v1076, %v1077
    %v1428 = vsel %vm1427, %v1076, %v1077
    %v1429 = vsel %vm1427, %v1297, %v1298
    %vm1430 = vcmp.le.f32.partialorder %v1428, %v1078
    %v1431 = vsel %vm1430, %v1428, %v1078
    %v1432 = vsel %vm1430, %v1429, %v1302
    %vm1433 = vcmp.le.f32.partialorder %v1431, %v1079
    %v1434 = vsel %vm1433, %v1431, %v1079
    %v1435 = vsel %vm1433, %v1432, %v1306
    %1436 = vmin.index.xlane.f32.xlu0 %v1434
    %v1437 = vpop.xlane.xlu0 %1436
    %1438 = vset.pattern.permute.xlu0 %v1437
    %1439 = vperm.xlu0 %1438, %v1435
    %v1440 = vpop.permute.xlu0 %1439
    %vm1441 = vcmp.le.f32.partialorder %v1080, %v1081
    %v1442 = vsel %vm1441, %v1080, %v1081
    %v1443 = vsel %vm1441, %v1297, %v1298
    %vm1444 = vcmp.le.f32.partialorder %v1442, %v1082
    %v1445 = vsel %vm1444, %v1442, %v1082
    %v1446 = vsel %vm1444, %v1443, %v1302
    %vm1447 = vcmp.le.f32.partialorder %v1445, %v1083
    %v1448 = vsel %vm1447, %v1445, %v1083
    %v1449 = vsel %vm1447, %v1446, %v1306
    %1450 = vmin.index.xlane.f32.xlu0 %v1448
    %v1451 = vpop.xlane.xlu0 %1450
    %1452 = vset.pattern.permute.xlu0 %v1451
    %1453 = vperm.xlu0 %1452, %v1449
    %v1454 = vpop.permute.xlu0 %1453
    %vm1455 = vcmp.le.f32.partialorder %v1084, %v1085
    %v1456 = vsel %vm1455, %v1084, %v1085
    %v1457 = vsel %vm1455, %v1297, %v1298
    %vm1458 = vcmp.le.f32.partialorder %v1456, %v1086
    %v1459 = vsel %vm1458, %v1456, %v1086
    %v1460 = vsel %vm1458, %v1457, %v1302
    %vm1461 = vcmp.le.f32.partialorder %v1459, %v1087
    %v1462 = vsel %vm1461, %v1459, %v1087
    %v1463 = vsel %vm1461, %v1460, %v1306
    %1464 = vmin.index.xlane.f32.xlu0 %v1462
    %v1465 = vpop.xlane.xlu0 %1464
    %1466 = vset.pattern.permute.xlu0 %v1465
    %1467 = vperm.xlu0 %1466, %v1463
    %v1468 = vpop.permute.xlu0 %1467
    %vm1469 = vcmp.le.f32.partialorder %v1088, %v1089
    %v1470 = vsel %vm1469, %v1088, %v1089
    %v1471 = vsel %vm1469, %v1297, %v1298
    %vm1472 = vcmp.le.f32.partialorder %v1470, %v1090
    %v1473 = vsel %vm1472, %v1470, %v1090
    %v1474 = vsel %vm1472, %v1471, %v1302
    %vm1475 = vcmp.le.f32.partialorder %v1473, %v1091
    %v1476 = vsel %vm1475, %v1473, %v1091
    %v1477 = vsel %vm1475, %v1474, %v1306
    %1478 = vmin.index.xlane.f32.xlu0 %v1476
    %v1479 = vpop.xlane.xlu0 %1478
    %1480 = vset.pattern.permute.xlu0 %v1479
    %1481 = vperm.xlu0 %1480, %v1477
    %v1482 = vpop.permute.xlu0 %1481
    %vm1483 = vcmp.le.f32.partialorder %v1092, %v1093
    %v1484 = vsel %vm1483, %v1092, %v1093
    %v1485 = vsel %vm1483, %v1297, %v1298
    %vm1486 = vcmp.le.f32.partialorder %v1484, %v1094
    %v1487 = vsel %vm1486, %v1484, %v1094
    %v1488 = vsel %vm1486, %v1485, %v1302
    %vm1489 = vcmp.le.f32.partialorder %v1487, %v1095
    %v1490 = vsel %vm1489, %v1487, %v1095
    %v1491 = vsel %vm1489, %v1488, %v1306
    %1492 = vmin.index.xlane.f32.xlu0 %v1490
    %v1493 = vpop.xlane.xlu0 %1492
    %1494 = vset.pattern.permute.xlu0 %v1493
    %1495 = vperm.xlu0 %1494, %v1491
    %v1496 = vpop.permute.xlu0 %1495
    %vm1497 = vcmp.le.f32.partialorder %v1096, %v1097
    %v1498 = vsel %vm1497, %v1096, %v1097
    %v1499 = vsel %vm1497, %v1297, %v1298
    %vm1500 = vcmp.le.f32.partialorder %v1498, %v1098
    %v1501 = vsel %vm1500, %v1498, %v1098
    %v1502 = vsel %vm1500, %v1499, %v1302
    %vm1503 = vcmp.le.f32.partialorder %v1501, %v1099
    %v1504 = vsel %vm1503, %v1501, %v1099
    %v1505 = vsel %vm1503, %v1502, %v1306
    %1506 = vmin.index.xlane.f32.xlu0 %v1504
    %v1507 = vpop.xlane.xlu0 %1506
    %1508 = vset.pattern.permute.xlu0 %v1507
    %1509 = vperm.xlu0 %1508, %v1505
    %v1510 = vpop.permute.xlu0 %1509
    %vm1511 = vcmp.le.f32.partialorder %v1100, %v1101
    %v1512 = vsel %vm1511, %v1100, %v1101
    %v1513 = vsel %vm1511, %v1297, %v1298
    %vm1514 = vcmp.le.f32.partialorder %v1512, %v1102
    %v1515 = vsel %vm1514, %v1512, %v1102
    %v1516 = vsel %vm1514, %v1513, %v1302
    %vm1517 = vcmp.le.f32.partialorder %v1515, %v1103
    %v1518 = vsel %vm1517, %v1515, %v1103
    %v1519 = vsel %vm1517, %v1516, %v1306
    %1520 = vmin.index.xlane.f32.xlu0 %v1518
    %v1521 = vpop.xlane.xlu0 %1520
    %1522 = vset.pattern.permute.xlu0 %v1521
    %1523 = vperm.xlu0 %1522, %v1519
    %v1524 = vpop.permute.xlu0 %1523
    %vm1525 = vcmp.le.f32.partialorder %v1104, %v1105
    %v1526 = vsel %vm1525, %v1104, %v1105
    %v1527 = vsel %vm1525, %v1297, %v1298
    %vm1528 = vcmp.le.f32.partialorder %v1526, %v1106
    %v1529 = vsel %vm1528, %v1526, %v1106
    %v1530 = vsel %vm1528, %v1527, %v1302
    %vm1531 = vcmp.le.f32.partialorder %v1529, %v1107
    %v1532 = vsel %vm1531, %v1529, %v1107
    %v1533 = vsel %vm1531, %v1530, %v1306
    %1534 = vmin.index.xlane.f32.xlu0 %v1532
    %v1535 = vpop.xlane.xlu0 %1534
    %1536 = vset.pattern.permute.xlu0 %v1535
    %1537 = vperm.xlu0 %1536, %v1533
    %v1538 = vpop.permute.xlu0 %1537
    %vm1539 = vcmp.le.f32.partialorder %v1108, %v1109
    %v1540 = vsel %vm1539, %v1108, %v1109
    %v1541 = vsel %vm1539, %v1297, %v1298
    %vm1542 = vcmp.le.f32.partialorder %v1540, %v1110
    %v1543 = vsel %vm1542, %v1540, %v1110
    %v1544 = vsel %vm1542, %v1541, %v1302
    %vm1545 = vcmp.le.f32.partialorder %v1543, %v1111
    %v1546 = vsel %vm1545, %v1543, %v1111
    %v1547 = vsel %vm1545, %v1544, %v1306
    %1548 = vmin.index.xlane.f32.xlu0 %v1546
    %v1549 = vpop.xlane.xlu0 %1548
    %1550 = vset.pattern.permute.xlu0 %v1549
    %1551 = vperm.xlu0 %1550, %v1547
    %v1552 = vpop.permute.xlu0 %1551
    %vm1553 = vcmp.le.f32.partialorder %v1112, %v1113
    %v1554 = vsel %vm1553, %v1112, %v1113
    %v1555 = vsel %vm1553, %v1297, %v1298
    %vm1556 = vcmp.le.f32.partialorder %v1554, %v1114
    %v1557 = vsel %vm1556, %v1554, %v1114
    %v1558 = vsel %vm1556, %v1555, %v1302
    %vm1559 = vcmp.le.f32.partialorder %v1557, %v1115
    %v1560 = vsel %vm1559, %v1557, %v1115
    %v1561 = vsel %vm1559, %v1558, %v1306
    %1562 = vmin.index.xlane.f32.xlu0 %v1560
    %v1563 = vpop.xlane.xlu0 %1562
    %1564 = vset.pattern.permute.xlu0 %v1563
    %1565 = vperm.xlu0 %1564, %v1561
    %v1566 = vpop.permute.xlu0 %1565
    %vm1567 = vcmp.le.f32.partialorder %v1116, %v1117
    %v1568 = vsel %vm1567, %v1116, %v1117
    %v1569 = vsel %vm1567, %v1297, %v1298
    %vm1570 = vcmp.le.f32.partialorder %v1568, %v1118
    %v1571 = vsel %vm1570, %v1568, %v1118
    %v1572 = vsel %vm1570, %v1569, %v1302
    %vm1573 = vcmp.le.f32.partialorder %v1571, %v1119
    %v1574 = vsel %vm1573, %v1571, %v1119
    %v1575 = vsel %vm1573, %v1572, %v1306
    %1576 = vmin.index.xlane.f32.xlu0 %v1574
    %v1577 = vpop.xlane.xlu0 %1576
    %1578 = vset.pattern.permute.xlu0 %v1577
    %1579 = vperm.xlu0 %1578, %v1575
    %v1580 = vpop.permute.xlu0 %1579
    %vm1581 = vcmp.le.f32.partialorder %v1120, %v1121
    %v1582 = vsel %vm1581, %v1120, %v1121
    %v1583 = vsel %vm1581, %v1297, %v1298
    %vm1584 = vcmp.le.f32.partialorder %v1582, %v1122
    %v1585 = vsel %vm1584, %v1582, %v1122
    %v1586 = vsel %vm1584, %v1583, %v1302
    %vm1587 = vcmp.le.f32.partialorder %v1585, %v1123
    %v1588 = vsel %vm1587, %v1585, %v1123
    %v1589 = vsel %vm1587, %v1586, %v1306
    %1590 = vmin.index.xlane.f32.xlu0 %v1588
    %v1591 = vpop.xlane.xlu0 %1590
    %1592 = vset.pattern.permute.xlu0 %v1591
    %1593 = vperm.xlu0 %1592, %v1589
    %v1594 = vpop.permute.xlu0 %1593
    %vm1595 = vcmp.le.f32.partialorder %v1124, %v1125
    %v1596 = vsel %vm1595, %v1124, %v1125
    %v1597 = vsel %vm1595, %v1297, %v1298
    %vm1598 = vcmp.le.f32.partialorder %v1596, %v1126
    %v1599 = vsel %vm1598, %v1596, %v1126
    %v1600 = vsel %vm1598, %v1597, %v1302
    %vm1601 = vcmp.le.f32.partialorder %v1599, %v1127
    %v1602 = vsel %vm1601, %v1599, %v1127
    %v1603 = vsel %vm1601, %v1600, %v1306
    %1604 = vmin.index.xlane.f32.xlu0 %v1602
    %v1605 = vpop.xlane.xlu0 %1604
    %1606 = vset.pattern.permute.xlu0 %v1605
    %1607 = vperm.xlu0 %1606, %v1603
    %v1608 = vpop.permute.xlu0 %1607
    %vm1609 = vcmp.le.f32.partialorder %v1128, %v1129
    %v1610 = vsel %vm1609, %v1128, %v1129
    %v1611 = vsel %vm1609, %v1297, %v1298
    %vm1612 = vcmp.le.f32.partialorder %v1610, %v1130
    %v1613 = vsel %vm1612, %v1610, %v1130
    %v1614 = vsel %vm1612, %v1611, %v1302
    %vm1615 = vcmp.le.f32.partialorder %v1613, %v1131
    %v1616 = vsel %vm1615, %v1613, %v1131
    %v1617 = vsel %vm1615, %v1614, %v1306
    %1618 = vmin.index.xlane.f32.xlu0 %v1616
    %v1619 = vpop.xlane.xlu0 %1618
    %1620 = vset.pattern.permute.xlu0 %v1619
    %1621 = vperm.xlu0 %1620, %v1617
    %v1622 = vpop.permute.xlu0 %1621
    %vm1623 = vcmp.le.f32.partialorder %v1132, %v1133
    %v1624 = vsel %vm1623, %v1132, %v1133
    %v1625 = vsel %vm1623, %v1297, %v1298
    %vm1626 = vcmp.le.f32.partialorder %v1624, %v1134
    %v1627 = vsel %vm1626, %v1624, %v1134
    %v1628 = vsel %vm1626, %v1625, %v1302
    %vm1629 = vcmp.le.f32.partialorder %v1627, %v1135
    %v1630 = vsel %vm1629, %v1627, %v1135
    %v1631 = vsel %vm1629, %v1628, %v1306
    %1632 = vmin.index.xlane.f32.xlu0 %v1630
    %v1633 = vpop.xlane.xlu0 %1632
    %1634 = vset.pattern.permute.xlu0 %v1633
    %1635 = vperm.xlu0 %1634, %v1631
    %v1636 = vpop.permute.xlu0 %1635
    %vm1637 = vcmp.le.f32.partialorder %v1136, %v1137
    %v1638 = vsel %vm1637, %v1136, %v1137
    %v1639 = vsel %vm1637, %v1297, %v1298
    %vm1640 = vcmp.le.f32.partialorder %v1638, %v1138
    %v1641 = vsel %vm1640, %v1638, %v1138
    %v1642 = vsel %vm1640, %v1639, %v1302
    %vm1643 = vcmp.le.f32.partialorder %v1641, %v1139
    %v1644 = vsel %vm1643, %v1641, %v1139
    %v1645 = vsel %vm1643, %v1642, %v1306
    %1646 = vmin.index.xlane.f32.xlu0 %v1644
    %v1647 = vpop.xlane.xlu0 %1646
    %1648 = vset.pattern.permute.xlu0 %v1647
    %1649 = vperm.xlu0 %1648, %v1645
    %v1650 = vpop.permute.xlu0 %1649
    %vm1651 = vcmp.le.f32.partialorder %v1140, %v1141
    %v1652 = vsel %vm1651, %v1140, %v1141
    %v1653 = vsel %vm1651, %v1297, %v1298
    %vm1654 = vcmp.le.f32.partialorder %v1652, %v1142
    %v1655 = vsel %vm1654, %v1652, %v1142
    %v1656 = vsel %vm1654, %v1653, %v1302
    %vm1657 = vcmp.le.f32.partialorder %v1655, %v1143
    %v1658 = vsel %vm1657, %v1655, %v1143
    %v1659 = vsel %vm1657, %v1656, %v1306
    %1660 = vmin.index.xlane.f32.xlu0 %v1658
    %v1661 = vpop.xlane.xlu0 %1660
    %1662 = vset.pattern.permute.xlu0 %v1661
    %1663 = vperm.xlu0 %1662, %v1659
    %v1664 = vpop.permute.xlu0 %1663
    %vm1665 = vcmp.le.f32.partialorder %v1144, %v1145
    %v1666 = vsel %vm1665, %v1144, %v1145
    %v1667 = vsel %vm1665, %v1297, %v1298
    %vm1668 = vcmp.le.f32.partialorder %v1666, %v1146
    %v1669 = vsel %vm1668, %v1666, %v1146
    %v1670 = vsel %vm1668, %v1667, %v1302
    %vm1671 = vcmp.le.f32.partialorder %v1669, %v1147
    %v1672 = vsel %vm1671, %v1669, %v1147
    %v1673 = vsel %vm1671, %v1670, %v1306
    %1674 = vmin.index.xlane.f32.xlu0 %v1672
    %v1675 = vpop.xlane.xlu0 %1674
    %1676 = vset.pattern.permute.xlu0 %v1675
    %1677 = vperm.xlu0 %1676, %v1673
    %v1678 = vpop.permute.xlu0 %1677
    %vm1679 = vcmp.le.f32.partialorder %v1148, %v1149
    %v1680 = vsel %vm1679, %v1148, %v1149
    %v1681 = vsel %vm1679, %v1297, %v1298
    %vm1682 = vcmp.le.f32.partialorder %v1680, %v1150
    %v1683 = vsel %vm1682, %v1680, %v1150
    %v1684 = vsel %vm1682, %v1681, %v1302
    %vm1685 = vcmp.le.f32.partialorder %v1683, %v1151
    %v1686 = vsel %vm1685, %v1683, %v1151
    %v1687 = vsel %vm1685, %v1684, %v1306
    %1688 = vmin.index.xlane.f32.xlu0 %v1686
    %v1689 = vpop.xlane.xlu0 %1688
    %1690 = vset.pattern.permute.xlu0 %v1689
    %1691 = vperm.xlu0 %1690, %v1687
    %v1692 = vpop.permute.xlu0 %1691
    %vm1693 = vcmp.le.f32.partialorder %v1152, %v1153
    %v1694 = vsel %vm1693, %v1152, %v1153
    %v1695 = vsel %vm1693, %v1297, %v1298
    %vm1696 = vcmp.le.f32.partialorder %v1694, %v1154
    %v1697 = vsel %vm1696, %v1694, %v1154
    %v1698 = vsel %vm1696, %v1695, %v1302
    %vm1699 = vcmp.le.f32.partialorder %v1697, %v1155
    %v1700 = vsel %vm1699, %v1697, %v1155
    %v1701 = vsel %vm1699, %v1698, %v1306
    %1702 = vmin.index.xlane.f32.xlu0 %v1700
    %v1703 = vpop.xlane.xlu0 %1702
    %1704 = vset.pattern.permute.xlu0 %v1703
    %1705 = vperm.xlu0 %1704, %v1701
    %v1706 = vpop.permute.xlu0 %1705
    %vm1707 = vcmp.le.f32.partialorder %v1156, %v1157
    %v1708 = vsel %vm1707, %v1156, %v1157
    %v1709 = vsel %vm1707, %v1297, %v1298
    %vm1710 = vcmp.le.f32.partialorder %v1708, %v1158
    %v1711 = vsel %vm1710, %v1708, %v1158
    %v1712 = vsel %vm1710, %v1709, %v1302
    %vm1713 = vcmp.le.f32.partialorder %v1711, %v1159
    %v1714 = vsel %vm1713, %v1711, %v1159
    %v1715 = vsel %vm1713, %v1712, %v1306
    %1716 = vmin.index.xlane.f32.xlu0 %v1714
    %v1717 = vpop.xlane.xlu0 %1716
    %1718 = vset.pattern.permute.xlu0 %v1717
    %1719 = vperm.xlu0 %1718, %v1715
    %v1720 = vpop.permute.xlu0 %1719
    %vm1721 = vcmp.le.f32.partialorder %v1160, %v1161
    %v1722 = vsel %vm1721, %v1160, %v1161
    %v1723 = vsel %vm1721, %v1297, %v1298
    %vm1724 = vcmp.le.f32.partialorder %v1722, %v1162
    %v1725 = vsel %vm1724, %v1722, %v1162
    %v1726 = vsel %vm1724, %v1723, %v1302
    %vm1727 = vcmp.le.f32.partialorder %v1725, %v1163
    %v1728 = vsel %vm1727, %v1725, %v1163
    %v1729 = vsel %vm1727, %v1726, %v1306
    %1730 = vmin.index.xlane.f32.xlu0 %v1728
    %v1731 = vpop.xlane.xlu0 %1730
    %1732 = vset.pattern.permute.xlu0 %v1731
    %1733 = vperm.xlu0 %1732, %v1729
    %v1734 = vpop.permute.xlu0 %1733
    %vm1735 = vcmp.le.f32.partialorder %v1164, %v1165
    %v1736 = vsel %vm1735, %v1164, %v1165
    %v1737 = vsel %vm1735, %v1297, %v1298
    %vm1738 = vcmp.le.f32.partialorder %v1736, %v1166
    %v1739 = vsel %vm1738, %v1736, %v1166
    %v1740 = vsel %vm1738, %v1737, %v1302
    %vm1741 = vcmp.le.f32.partialorder %v1739, %v1167
    %v1742 = vsel %vm1741, %v1739, %v1167
    %v1743 = vsel %vm1741, %v1740, %v1306
    %1744 = vmin.index.xlane.f32.xlu0 %v1742
    %v1745 = vpop.xlane.xlu0 %1744
    %1746 = vset.pattern.permute.xlu0 %v1745
    %1747 = vperm.xlu0 %1746, %v1743
    %v1748 = vpop.permute.xlu0 %1747
    %vm1749 = vcmp.le.f32.partialorder %v1168, %v1169
    %v1750 = vsel %vm1749, %v1168, %v1169
    %v1751 = vsel %vm1749, %v1297, %v1298
    %vm1752 = vcmp.le.f32.partialorder %v1750, %v1170
    %v1753 = vsel %vm1752, %v1750, %v1170
    %v1754 = vsel %vm1752, %v1751, %v1302
    %vm1755 = vcmp.le.f32.partialorder %v1753, %v1171
    %v1756 = vsel %vm1755, %v1753, %v1171
    %v1757 = vsel %vm1755, %v1754, %v1306
    %1758 = vmin.index.xlane.f32.xlu0 %v1756
    %v1759 = vpop.xlane.xlu0 %1758
    %1760 = vset.pattern.permute.xlu0 %v1759
    %1761 = vperm.xlu0 %1760, %v1757
    %v1762 = vpop.permute.xlu0 %1761
    %vm1763 = vcmp.le.f32.partialorder %v1172, %v1173
    %v1764 = vsel %vm1763, %v1172, %v1173
    %v1765 = vsel %vm1763, %v1297, %v1298
    %vm1766 = vcmp.le.f32.partialorder %v1764, %v1174
    %v1767 = vsel %vm1766, %v1764, %v1174
    %v1768 = vsel %vm1766, %v1765, %v1302
    %vm1769 = vcmp.le.f32.partialorder %v1767, %v1175
    %v1770 = vsel %vm1769, %v1767, %v1175
    %v1771 = vsel %vm1769, %v1768, %v1306
    %1772 = vmin.index.xlane.f32.xlu0 %v1770
    %v1773 = vpop.xlane.xlu0 %1772
    %1774 = vset.pattern.permute.xlu0 %v1773
    %1775 = vperm.xlu0 %1774, %v1771
    %v1776 = vpop.permute.xlu0 %1775
    %vm1777 = vcmp.le.f32.partialorder %v1176, %v1177
    %v1778 = vsel %vm1777, %v1176, %v1177
    %v1779 = vsel %vm1777, %v1297, %v1298
    %vm1780 = vcmp.le.f32.partialorder %v1778, %v1178
    %v1781 = vsel %vm1780, %v1778, %v1178
    %v1782 = vsel %vm1780, %v1779, %v1302
    %vm1783 = vcmp.le.f32.partialorder %v1781, %v1179
    %v1784 = vsel %vm1783, %v1781, %v1179
    %v1785 = vsel %vm1783, %v1782, %v1306
    %1786 = vmin.index.xlane.f32.xlu0 %v1784
    %v1787 = vpop.xlane.xlu0 %1786
    %1788 = vset.pattern.permute.xlu0 %v1787
    %1789 = vperm.xlu0 %1788, %v1785
    %v1790 = vpop.permute.xlu0 %1789
    %vm1791 = vcmp.le.f32.partialorder %v1180, %v1181
    %v1792 = vsel %vm1791, %v1180, %v1181
    %v1793 = vsel %vm1791, %v1297, %v1298
    %vm1794 = vcmp.le.f32.partialorder %v1792, %v1182
    %v1795 = vsel %vm1794, %v1792, %v1182
    %v1796 = vsel %vm1794, %v1793, %v1302
    %vm1797 = vcmp.le.f32.partialorder %v1795, %v1183
    %v1798 = vsel %vm1797, %v1795, %v1183
    %v1799 = vsel %vm1797, %v1796, %v1306
    %1800 = vmin.index.xlane.f32.xlu0 %v1798
    %v1801 = vpop.xlane.xlu0 %1800
    %1802 = vset.pattern.permute.xlu0 %v1801
    %1803 = vperm.xlu0 %1802, %v1799
    %v1804 = vpop.permute.xlu0 %1803
    %vm1805 = vcmp.le.f32.partialorder %v1184, %v1185
    %v1806 = vsel %vm1805, %v1184, %v1185
    %v1807 = vsel %vm1805, %v1297, %v1298
    %vm1808 = vcmp.le.f32.partialorder %v1806, %v1186
    %v1809 = vsel %vm1808, %v1806, %v1186
    %v1810 = vsel %vm1808, %v1807, %v1302
    %vm1811 = vcmp.le.f32.partialorder %v1809, %v1187
    %v1812 = vsel %vm1811, %v1809, %v1187
    %v1813 = vsel %vm1811, %v1810, %v1306
    %1814 = vmin.index.xlane.f32.xlu0 %v1812
    %v1815 = vpop.xlane.xlu0 %1814
    %1816 = vset.pattern.permute.xlu0 %v1815
    %1817 = vperm.xlu0 %1816, %v1813
    %v1818 = vpop.permute.xlu0 %1817
    %vm1819 = vcmp.le.f32.partialorder %v1188, %v1189
    %v1820 = vsel %vm1819, %v1188, %v1189
    %v1821 = vsel %vm1819, %v1297, %v1298
    %vm1822 = vcmp.le.f32.partialorder %v1820, %v1190
    %v1823 = vsel %vm1822, %v1820, %v1190
    %v1824 = vsel %vm1822, %v1821, %v1302
    %vm1825 = vcmp.le.f32.partialorder %v1823, %v1191
    %v1826 = vsel %vm1825, %v1823, %v1191
    %v1827 = vsel %vm1825, %v1824, %v1306
    %1828 = vmin.index.xlane.f32.xlu0 %v1826
    %v1829 = vpop.xlane.xlu0 %1828
    %1830 = vset.pattern.permute.xlu0 %v1829
    %1831 = vperm.xlu0 %1830, %v1827
    %v1832 = vpop.permute.xlu0 %1831
    %vm1833 = vcmp.le.f32.partialorder %v1192, %v1193
    %v1834 = vsel %vm1833, %v1192, %v1193
    %v1835 = vsel %vm1833, %v1297, %v1298
    %vm1836 = vcmp.le.f32.partialorder %v1834, %v1194
    %v1837 = vsel %vm1836, %v1834, %v1194
    %v1838 = vsel %vm1836, %v1835, %v1302
    %vm1839 = vcmp.le.f32.partialorder %v1837, %v1195
    %v1840 = vsel %vm1839, %v1837, %v1195
    %v1841 = vsel %vm1839, %v1838, %v1306
    %1842 = vmin.index.xlane.f32.xlu0 %v1840
    %v1843 = vpop.xlane.xlu0 %1842
    %1844 = vset.pattern.permute.xlu0 %v1843
    %1845 = vperm.xlu0 %1844, %v1841
    %v1846 = vpop.permute.xlu0 %1845
    %vm1847 = vcmp.le.f32.partialorder %v1196, %v1197
    %v1848 = vsel %vm1847, %v1196, %v1197
    %v1849 = vsel %vm1847, %v1297, %v1298
    %vm1850 = vcmp.le.f32.partialorder %v1848, %v1198
    %v1851 = vsel %vm1850, %v1848, %v1198
    %v1852 = vsel %vm1850, %v1849, %v1302
    %vm1853 = vcmp.le.f32.partialorder %v1851, %v1199
    %v1854 = vsel %vm1853, %v1851, %v1199
    %v1855 = vsel %vm1853, %v1852, %v1306
    %1856 = vmin.index.xlane.f32.xlu0 %v1854
    %v1857 = vpop.xlane.xlu0 %1856
    %1858 = vset.pattern.permute.xlu0 %v1857
    %1859 = vperm.xlu0 %1858, %v1855
    %v1860 = vpop.permute.xlu0 %1859
    %vm1861 = vcmp.le.f32.partialorder %v1200, %v1201
    %v1862 = vsel %vm1861, %v1200, %v1201
    %v1863 = vsel %vm1861, %v1297, %v1298
    %vm1864 = vcmp.le.f32.partialorder %v1862, %v1202
    %v1865 = vsel %vm1864, %v1862, %v1202
    %v1866 = vsel %vm1864, %v1863, %v1302
    %vm1867 = vcmp.le.f32.partialorder %v1865, %v1203
    %v1868 = vsel %vm1867, %v1865, %v1203
    %v1869 = vsel %vm1867, %v1866, %v1306
    %1870 = vmin.index.xlane.f32.xlu0 %v1868
    %v1871 = vpop.xlane.xlu0 %1870
    %1872 = vset.pattern.permute.xlu0 %v1871
    %1873 = vperm.xlu0 %1872, %v1869
    %v1874 = vpop.permute.xlu0 %1873
    %vm1875 = vcmp.le.f32.partialorder %v1204, %v1205
    %v1876 = vsel %vm1875, %v1204, %v1205
    %v1877 = vsel %vm1875, %v1297, %v1298
    %vm1878 = vcmp.le.f32.partialorder %v1876, %v1206
    %v1879 = vsel %vm1878, %v1876, %v1206
    %v1880 = vsel %vm1878, %v1877, %v1302
    %vm1881 = vcmp.le.f32.partialorder %v1879, %v1207
    %v1882 = vsel %vm1881, %v1879, %v1207
    %v1883 = vsel %vm1881, %v1880, %v1306
    %1884 = vmin.index.xlane.f32.xlu0 %v1882
    %v1885 = vpop.xlane.xlu0 %1884
    %1886 = vset.pattern.permute.xlu0 %v1885
    %1887 = vperm.xlu0 %1886, %v1883
    %v1888 = vpop.permute.xlu0 %1887
    %vm1889 = vcmp.le.f32.partialorder %v1208, %v1209
    %v1890 = vsel %vm1889, %v1208, %v1209
    %v1891 = vsel %vm1889, %v1297, %v1298
    %vm1892 = vcmp.le.f32.partialorder %v1890, %v1210
    %v1893 = vsel %vm1892, %v1890, %v1210
    %v1894 = vsel %vm1892, %v1891, %v1302
    %vm1895 = vcmp.le.f32.partialorder %v1893, %v1211
    %v1896 = vsel %vm1895, %v1893, %v1211
    %v1897 = vsel %vm1895, %v1894, %v1306
    %1898 = vmin.index.xlane.f32.xlu0 %v1896
    %v1899 = vpop.xlane.xlu0 %1898
    %1900 = vset.pattern.permute.xlu0 %v1899
    %1901 = vperm.xlu0 %1900, %v1897
    %v1902 = vpop.permute.xlu0 %1901
    %vm1903 = vcmp.le.f32.partialorder %v1212, %v1213
    %v1904 = vsel %vm1903, %v1212, %v1213
    %v1905 = vsel %vm1903, %v1297, %v1298
    %vm1906 = vcmp.le.f32.partialorder %v1904, %v1214
    %v1907 = vsel %vm1906, %v1904, %v1214
    %v1908 = vsel %vm1906, %v1905, %v1302
    %vm1909 = vcmp.le.f32.partialorder %v1907, %v1215
    %v1910 = vsel %vm1909, %v1907, %v1215
    %v1911 = vsel %vm1909, %v1908, %v1306
    %1912 = vmin.index.xlane.f32.xlu0 %v1910
    %v1913 = vpop.xlane.xlu0 %1912
    %1914 = vset.pattern.permute.xlu0 %v1913
    %1915 = vperm.xlu0 %1914, %v1911
    %v1916 = vpop.permute.xlu0 %1915
    %vm1917 = vcmp.le.f32.partialorder %v1216, %v1217
    %v1918 = vsel %vm1917, %v1216, %v1217
    %v1919 = vsel %vm1917, %v1297, %v1298
    %vm1920 = vcmp.le.f32.partialorder %v1918, %v1218
    %v1921 = vsel %vm1920, %v1918, %v1218
    %v1922 = vsel %vm1920, %v1919, %v1302
    %vm1923 = vcmp.le.f32.partialorder %v1921, %v1219
    %v1924 = vsel %vm1923, %v1921, %v1219
    %v1925 = vsel %vm1923, %v1922, %v1306
    %1926 = vmin.index.xlane.f32.xlu0 %v1924
    %v1927 = vpop.xlane.xlu0 %1926
    %1928 = vset.pattern.permute.xlu0 %v1927
    %1929 = vperm.xlu0 %1928, %v1925
    %v1930 = vpop.permute.xlu0 %1929
    %vm1931 = vcmp.le.f32.partialorder %v1220, %v1221
    %v1932 = vsel %vm1931, %v1220, %v1221
    %v1933 = vsel %vm1931, %v1297, %v1298
    %vm1934 = vcmp.le.f32.partialorder %v1932, %v1222
    %v1935 = vsel %vm1934, %v1932, %v1222
    %v1936 = vsel %vm1934, %v1933, %v1302
    %vm1937 = vcmp.le.f32.partialorder %v1935, %v1223
    %v1938 = vsel %vm1937, %v1935, %v1223
    %v1939 = vsel %vm1937, %v1936, %v1306
    %1940 = vmin.index.xlane.f32.xlu0 %v1938
    %v1941 = vpop.xlane.xlu0 %1940
    %1942 = vset.pattern.permute.xlu0 %v1941
    %1943 = vperm.xlu0 %1942, %v1939
    %v1944 = vpop.permute.xlu0 %1943
    %vm1945 = vcmp.le.f32.partialorder %v1224, %v1225
    %v1946 = vsel %vm1945, %v1224, %v1225
    %v1947 = vsel %vm1945, %v1297, %v1298
    %vm1948 = vcmp.le.f32.partialorder %v1946, %v1226
    %v1949 = vsel %vm1948, %v1946, %v1226
    %v1950 = vsel %vm1948, %v1947, %v1302
    %vm1951 = vcmp.le.f32.partialorder %v1949, %v1227
    %v1952 = vsel %vm1951, %v1949, %v1227
    %v1953 = vsel %vm1951, %v1950, %v1306
    %1954 = vmin.index.xlane.f32.xlu0 %v1952
    %v1955 = vpop.xlane.xlu0 %1954
    %1956 = vset.pattern.permute.xlu0 %v1955
    %1957 = vperm.xlu0 %1956, %v1953
    %v1958 = vpop.permute.xlu0 %1957
    %vm1959 = vcmp.le.f32.partialorder %v1228, %v1229
    %v1960 = vsel %vm1959, %v1228, %v1229
    %v1961 = vsel %vm1959, %v1297, %v1298
    %vm1962 = vcmp.le.f32.partialorder %v1960, %v1230
    %v1963 = vsel %vm1962, %v1960, %v1230
    %v1964 = vsel %vm1962, %v1961, %v1302
    %vm1965 = vcmp.le.f32.partialorder %v1963, %v1231
    %v1966 = vsel %vm1965, %v1963, %v1231
    %v1967 = vsel %vm1965, %v1964, %v1306
    %1968 = vmin.index.xlane.f32.xlu0 %v1966
    %v1969 = vpop.xlane.xlu0 %1968
    %1970 = vset.pattern.permute.xlu0 %v1969
    %1971 = vperm.xlu0 %1970, %v1967
    %v1972 = vpop.permute.xlu0 %1971
    %vm1973 = vcmp.le.f32.partialorder %v1232, %v1233
    %v1974 = vsel %vm1973, %v1232, %v1233
    %v1975 = vsel %vm1973, %v1297, %v1298
    %vm1976 = vcmp.le.f32.partialorder %v1974, %v1234
    %v1977 = vsel %vm1976, %v1974, %v1234
    %v1978 = vsel %vm1976, %v1975, %v1302
    %vm1979 = vcmp.le.f32.partialorder %v1977, %v1235
    %v1980 = vsel %vm1979, %v1977, %v1235
    %v1981 = vsel %vm1979, %v1978, %v1306
    %1982 = vmin.index.xlane.f32.xlu0 %v1980
    %v1983 = vpop.xlane.xlu0 %1982
    %1984 = vset.pattern.permute.xlu0 %v1983
    %1985 = vperm.xlu0 %1984, %v1981
    %v1986 = vpop.permute.xlu0 %1985
    %vm1987 = vcmp.le.f32.partialorder %v1236, %v1237
    %v1988 = vsel %vm1987, %v1236, %v1237
    %v1989 = vsel %vm1987, %v1297, %v1298
    %vm1990 = vcmp.le.f32.partialorder %v1988, %v1238
    %v1991 = vsel %vm1990, %v1988, %v1238
    %v1992 = vsel %vm1990, %v1989, %v1302
    %vm1993 = vcmp.le.f32.partialorder %v1991, %v1239
    %v1994 = vsel %vm1993, %v1991, %v1239
    %v1995 = vsel %vm1993, %v1992, %v1306
    %1996 = vmin.index.xlane.f32.xlu0 %v1994
    %v1997 = vpop.xlane.xlu0 %1996
    %1998 = vset.pattern.permute.xlu0 %v1997
    %1999 = vperm.xlu0 %1998, %v1995
    %v2000 = vpop.permute.xlu0 %1999
    %vm2001 = vcmp.le.f32.partialorder %v1240, %v1241
    %v2002 = vsel %vm2001, %v1240, %v1241
    %v2003 = vsel %vm2001, %v1297, %v1298
    %vm2004 = vcmp.le.f32.partialorder %v2002, %v1242
    %v2005 = vsel %vm2004, %v2002, %v1242
    %v2006 = vsel %vm2004, %v2003, %v1302
    %vm2007 = vcmp.le.f32.partialorder %v2005, %v1243
    %v2008 = vsel %vm2007, %v2005, %v1243
    %v2009 = vsel %vm2007, %v2006, %v1306
    %2010 = vmin.index.xlane.f32.xlu0 %v2008
    %v2011 = vpop.xlane.xlu0 %2010
    %2012 = vset.pattern.permute.xlu0 %v2011
    %2013 = vperm.xlu0 %2012, %v2009
    %v2014 = vpop.permute.xlu0 %2013
    %vm2015 = vcmp.le.f32.partialorder %v1244, %v1245
    %v2016 = vsel %vm2015, %v1244, %v1245
    %v2017 = vsel %vm2015, %v1297, %v1298
    %vm2018 = vcmp.le.f32.partialorder %v2016, %v1246
    %v2019 = vsel %vm2018, %v2016, %v1246
    %v2020 = vsel %vm2018, %v2017, %v1302
    %vm2021 = vcmp.le.f32.partialorder %v2019, %v1247
    %v2022 = vsel %vm2021, %v2019, %v1247
    %v2023 = vsel %vm2021, %v2020, %v1306
    %2024 = vmin.index.xlane.f32.xlu0 %v2022
    %v2025 = vpop.xlane.xlu0 %2024
    %2026 = vset.pattern.permute.xlu0 %v2025
    %2027 = vperm.xlu0 %2026, %v2023
    %v2028 = vpop.permute.xlu0 %2027
    %vm2029 = vcmp.le.f32.partialorder %v1248, %v1249
    %v2030 = vsel %vm2029, %v1248, %v1249
    %v2031 = vsel %vm2029, %v1297, %v1298
    %vm2032 = vcmp.le.f32.partialorder %v2030, %v1250
    %v2033 = vsel %vm2032, %v2030, %v1250
    %v2034 = vsel %vm2032, %v2031, %v1302
    %vm2035 = vcmp.le.f32.partialorder %v2033, %v1251
    %v2036 = vsel %vm2035, %v2033, %v1251
    %v2037 = vsel %vm2035, %v2034, %v1306
    %2038 = vmin.index.xlane.f32.xlu0 %v2036
    %v2039 = vpop.xlane.xlu0 %2038
    %2040 = vset.pattern.permute.xlu0 %v2039
    %2041 = vperm.xlu0 %2040, %v2037
    %v2042 = vpop.permute.xlu0 %2041
    %vm2043 = vcmp.le.f32.partialorder %v1252, %v1253
    %v2044 = vsel %vm2043, %v1252, %v1253
    %v2045 = vsel %vm2043, %v1297, %v1298
    %vm2046 = vcmp.le.f32.partialorder %v2044, %v1254
    %v2047 = vsel %vm2046, %v2044, %v1254
    %v2048 = vsel %vm2046, %v2045, %v1302
    %vm2049 = vcmp.le.f32.partialorder %v2047, %v1255
    %v2050 = vsel %vm2049, %v2047, %v1255
    %v2051 = vsel %vm2049, %v2048, %v1306
    %2052 = vmin.index.xlane.f32.xlu0 %v2050
    %v2053 = vpop.xlane.xlu0 %2052
    %2054 = vset.pattern.permute.xlu0 %v2053
    %2055 = vperm.xlu0 %2054, %v2051
    %v2056 = vpop.permute.xlu0 %2055
    %vm2057 = vcmp.le.f32.partialorder %v1256, %v1257
    %v2058 = vsel %vm2057, %v1256, %v1257
    %v2059 = vsel %vm2057, %v1297, %v1298
    %vm2060 = vcmp.le.f32.partialorder %v2058, %v1258
    %v2061 = vsel %vm2060, %v2058, %v1258
    %v2062 = vsel %vm2060, %v2059, %v1302
    %vm2063 = vcmp.le.f32.partialorder %v2061, %v1259
    %v2064 = vsel %vm2063, %v2061, %v1259
    %v2065 = vsel %vm2063, %v2062, %v1306
    %2066 = vmin.index.xlane.f32.xlu0 %v2064
    %v2067 = vpop.xlane.xlu0 %2066
    %2068 = vset.pattern.permute.xlu0 %v2067
    %2069 = vperm.xlu0 %2068, %v2065
    %v2070 = vpop.permute.xlu0 %2069
    %vm2071 = vcmp.le.f32.partialorder %v1260, %v1261
    %v2072 = vsel %vm2071, %v1260, %v1261
    %v2073 = vsel %vm2071, %v1297, %v1298
    %vm2074 = vcmp.le.f32.partialorder %v2072, %v1262
    %v2075 = vsel %vm2074, %v2072, %v1262
    %v2076 = vsel %vm2074, %v2073, %v1302
    %vm2077 = vcmp.le.f32.partialorder %v2075, %v1263
    %v2078 = vsel %vm2077, %v2075, %v1263
    %v2079 = vsel %vm2077, %v2076, %v1306
    %2080 = vmin.index.xlane.f32.xlu0 %v2078
    %v2081 = vpop.xlane.xlu0 %2080
    %2082 = vset.pattern.permute.xlu0 %v2081
    %2083 = vperm.xlu0 %2082, %v2079
    %v2084 = vpop.permute.xlu0 %2083
    %vm2085 = vcmp.le.f32.partialorder %v1264, %v1265
    %v2086 = vsel %vm2085, %v1264, %v1265
    %v2087 = vsel %vm2085, %v1297, %v1298
    %vm2088 = vcmp.le.f32.partialorder %v2086, %v1266
    %v2089 = vsel %vm2088, %v2086, %v1266
    %v2090 = vsel %vm2088, %v2087, %v1302
    %vm2091 = vcmp.le.f32.partialorder %v2089, %v1267
    %v2092 = vsel %vm2091, %v2089, %v1267
    %v2093 = vsel %vm2091, %v2090, %v1306
    %2094 = vmin.index.xlane.f32.xlu0 %v2092
    %v2095 = vpop.xlane.xlu0 %2094
    %2096 = vset.pattern.permute.xlu0 %v2095
    %2097 = vperm.xlu0 %2096, %v2093
    %v2098 = vpop.permute.xlu0 %2097
    %vm2099 = vcmp.le.f32.partialorder %v1268, %v1269
    %v2100 = vsel %vm2099, %v1268, %v1269
    %v2101 = vsel %vm2099, %v1297, %v1298
    %vm2102 = vcmp.le.f32.partialorder %v2100, %v1270
    %v2103 = vsel %vm2102, %v2100, %v1270
    %v2104 = vsel %vm2102, %v2101, %v1302
    %vm2105 = vcmp.le.f32.partialorder %v2103, %v1271
    %v2106 = vsel %vm2105, %v2103, %v1271
    %v2107 = vsel %vm2105, %v2104, %v1306
    %2108 = vmin.index.xlane.f32.xlu0 %v2106
    %v2109 = vpop.xlane.xlu0 %2108
    %2110 = vset.pattern.permute.xlu0 %v2109
    %2111 = vperm.xlu0 %2110, %v2107
    %v2112 = vpop.permute.xlu0 %2111
    %vm2113 = vcmp.le.f32.partialorder %v1272, %v1273
    %v2114 = vsel %vm2113, %v1272, %v1273
    %v2115 = vsel %vm2113, %v1297, %v1298
    %vm2116 = vcmp.le.f32.partialorder %v2114, %v1274
    %v2117 = vsel %vm2116, %v2114, %v1274
    %v2118 = vsel %vm2116, %v2115, %v1302
    %vm2119 = vcmp.le.f32.partialorder %v2117, %v1275
    %v2120 = vsel %vm2119, %v2117, %v1275
    %v2121 = vsel %vm2119, %v2118, %v1306
    %2122 = vmin.index.xlane.f32.xlu0 %v2120
    %v2123 = vpop.xlane.xlu0 %2122
    %2124 = vset.pattern.permute.xlu0 %v2123
    %2125 = vperm.xlu0 %2124, %v2121
    %v2126 = vpop.permute.xlu0 %2125
    %vm2127 = vcmp.le.f32.partialorder %v1276, %v1277
    %v2128 = vsel %vm2127, %v1276, %v1277
    %v2129 = vsel %vm2127, %v1297, %v1298
    %vm2130 = vcmp.le.f32.partialorder %v2128, %v1278
    %v2131 = vsel %vm2130, %v2128, %v1278
    %v2132 = vsel %vm2130, %v2129, %v1302
    %vm2133 = vcmp.le.f32.partialorder %v2131, %v1279
    %v2134 = vsel %vm2133, %v2131, %v1279
    %v2135 = vsel %vm2133, %v2132, %v1306
    %2136 = vmin.index.xlane.f32.xlu0 %v2134
    %v2137 = vpop.xlane.xlu0 %2136
    %2138 = vset.pattern.permute.xlu0 %v2137
    %2139 = vperm.xlu0 %2138, %v2135
    %v2140 = vpop.permute.xlu0 %2139
    %vm2141 = vcmp.le.f32.partialorder %v1280, %v1281
    %v2142 = vsel %vm2141, %v1280, %v1281
    %v2143 = vsel %vm2141, %v1297, %v1298
    %vm2144 = vcmp.le.f32.partialorder %v2142, %v1282
    %v2145 = vsel %vm2144, %v2142, %v1282
    %v2146 = vsel %vm2144, %v2143, %v1302
    %vm2147 = vcmp.le.f32.partialorder %v2145, %v1283
    %v2148 = vsel %vm2147, %v2145, %v1283
    %v2149 = vsel %vm2147, %v2146, %v1306
    %2150 = vmin.index.xlane.f32.xlu0 %v2148
    %v2151 = vpop.xlane.xlu0 %2150
    %2152 = vset.pattern.permute.xlu0 %v2151
    %2153 = vperm.xlu0 %2152, %v2149
    %v2154 = vpop.permute.xlu0 %2153
    %vm2155 = vcmp.le.f32.partialorder %v1284, %v1285
    %v2156 = vsel %vm2155, %v1284, %v1285
    %v2157 = vsel %vm2155, %v1297, %v1298
    %vm2158 = vcmp.le.f32.partialorder %v2156, %v1286
    %v2159 = vsel %vm2158, %v2156, %v1286
    %v2160 = vsel %vm2158, %v2157, %v1302
    %vm2161 = vcmp.le.f32.partialorder %v2159, %v1287
    %v2162 = vsel %vm2161, %v2159, %v1287
    %v2163 = vsel %vm2161, %v2160, %v1306
    %2164 = vmin.index.xlane.f32.xlu0 %v2162
    %v2165 = vpop.xlane.xlu0 %2164
    %2166 = vset.pattern.permute.xlu0 %v2165
    %2167 = vperm.xlu0 %2166, %v2163
    %v2168 = vpop.permute.xlu0 %2167
    %vm2169 = vcmp.le.f32.partialorder %v1288, %v1289
    %v2170 = vsel %vm2169, %v1288, %v1289
    %v2171 = vsel %vm2169, %v1297, %v1298
    %vm2172 = vcmp.le.f32.partialorder %v2170, %v1290
    %v2173 = vsel %vm2172, %v2170, %v1290
    %v2174 = vsel %vm2172, %v2171, %v1302
    %vm2175 = vcmp.le.f32.partialorder %v2173, %v1291
    %v2176 = vsel %vm2175, %v2173, %v1291
    %v2177 = vsel %vm2175, %v2174, %v1306
    %2178 = vmin.index.xlane.f32.xlu0 %v2176
    %v2179 = vpop.xlane.xlu0 %2178
    %2180 = vset.pattern.permute.xlu0 %v2179
    %2181 = vperm.xlu0 %2180, %v2177
    %v2182 = vpop.permute.xlu0 %2181
    %vm2183 = vcmp.le.f32.partialorder %v1292, %v1293
    %v2184 = vsel %vm2183, %v1292, %v1293
    %v2185 = vsel %vm2183, %v1297, %v1298
    %vm2186 = vcmp.le.f32.partialorder %v2184, %v1294
    %v2187 = vsel %vm2186, %v2184, %v1294
    %v2188 = vsel %vm2186, %v2185, %v1302
    %vm2189 = vcmp.le.f32.partialorder %v2187, %v1295
    %v2190 = vsel %vm2189, %v2187, %v1295
    %v2191 = vsel %vm2189, %v2188, %v1306
    %2192 = vmin.index.xlane.f32.xlu0 %v2190
    %v2193 = vpop.xlane.xlu0 %2192
    %2194 = vset.pattern.permute.xlu0 %v2193
    %2195 = vperm.xlu0 %2194, %v2191
    %v2196 = vpop.permute.xlu0 %2195
    %vm2197 = vcmp.eq.s32.totalorder %v1297, %v1314
    %vm2198 = vcmp.eq.s32.totalorder %v1298, %v1314
    %vm2199 = vcmp.eq.s32.totalorder %v1302, %v1314
    %vm2200 = vcmp.eq.s32.totalorder %v1306, %v1314
    %vm2201 = vcmp.eq.s32.totalorder %v1297, %v1328
    %vm2202 = vcmp.eq.s32.totalorder %v1298, %v1328
    %vm2203 = vcmp.eq.s32.totalorder %v1302, %v1328
    %vm2204 = vcmp.eq.s32.totalorder %v1306, %v1328
    %vm2205 = vcmp.eq.s32.totalorder %v1297, %v1342
    %vm2206 = vcmp.eq.s32.totalorder %v1298, %v1342
    %vm2207 = vcmp.eq.s32.totalorder %v1302, %v1342
    %vm2208 = vcmp.eq.s32.totalorder %v1306, %v1342
    %vm2209 = vcmp.eq.s32.totalorder %v1297, %v1356
    %vm2210 = vcmp.eq.s32.totalorder %v1298, %v1356
    %vm2211 = vcmp.eq.s32.totalorder %v1302, %v1356
    %vm2212 = vcmp.eq.s32.totalorder %v1306, %v1356
    %vm2213 = vcmp.eq.s32.totalorder %v1297, %v1370
    %vm2214 = vcmp.eq.s32.totalorder %v1298, %v1370
    %vm2215 = vcmp.eq.s32.totalorder %v1302, %v1370
    %vm2216 = vcmp.eq.s32.totalorder %v1306, %v1370
    %vm2217 = vcmp.eq.s32.totalorder %v1297, %v1384
    %vm2218 = vcmp.eq.s32.totalorder %v1298, %v1384
    %vm2219 = vcmp.eq.s32.totalorder %v1302, %v1384
    %vm2220 = vcmp.eq.s32.totalorder %v1306, %v1384
    %vm2221 = vcmp.eq.s32.totalorder %v1297, %v1398
    %vm2222 = vcmp.eq.s32.totalorder %v1298, %v1398
    %vm2223 = vcmp.eq.s32.totalorder %v1302, %v1398
    %vm2224 = vcmp.eq.s32.totalorder %v1306, %v1398
    %vm2225 = vcmp.eq.s32.totalorder %v1297, %v1412
    %vm2226 = vcmp.eq.s32.totalorder %v1298, %v1412
    %vm2227 = vcmp.eq.s32.totalorder %v1302, %v1412
    %vm2228 = vcmp.eq.s32.totalorder %v1306, %v1412
    %vm2229 = vcmp.eq.s32.totalorder %v1297, %v1426
    %vm2230 = vcmp.eq.s32.totalorder %v1298, %v1426
    %vm2231 = vcmp.eq.s32.totalorder %v1302, %v1426
    %vm2232 = vcmp.eq.s32.totalorder %v1306, %v1426
    %vm2233 = vcmp.eq.s32.totalorder %v1297, %v1440
    %vm2234 = vcmp.eq.s32.totalorder %v1298, %v1440
    %vm2235 = vcmp.eq.s32.totalorder %v1302, %v1440
    %vm2236 = vcmp.eq.s32.totalorder %v1306, %v1440
    %vm2237 = vcmp.eq.s32.totalorder %v1297, %v1454
    %vm2238 = vcmp.eq.s32.totalorder %v1298, %v1454
    %vm2239 = vcmp.eq.s32.totalorder %v1302, %v1454
    %vm2240 = vcmp.eq.s32.totalorder %v1306, %v1454
    %vm2241 = vcmp.eq.s32.totalorder %v1297, %v1468
    %vm2242 = vcmp.eq.s32.totalorder %v1298, %v1468
    %vm2243 = vcmp.eq.s32.totalorder %v1302, %v1468
    %vm2244 = vcmp.eq.s32.totalorder %v1306, %v1468
    %vm2245 = vcmp.eq.s32.totalorder %v1297, %v1482
    %vm2246 = vcmp.eq.s32.totalorder %v1298, %v1482
    %vm2247 = vcmp.eq.s32.totalorder %v1302, %v1482
    %vm2248 = vcmp.eq.s32.totalorder %v1306, %v1482
    %vm2249 = vcmp.eq.s32.totalorder %v1297, %v1496
    %vm2250 = vcmp.eq.s32.totalorder %v1298, %v1496
    %vm2251 = vcmp.eq.s32.totalorder %v1302, %v1496
    %vm2252 = vcmp.eq.s32.totalorder %v1306, %v1496
    %vm2253 = vcmp.eq.s32.totalorder %v1297, %v1510
    %vm2254 = vcmp.eq.s32.totalorder %v1298, %v1510
    %vm2255 = vcmp.eq.s32.totalorder %v1302, %v1510
    %vm2256 = vcmp.eq.s32.totalorder %v1306, %v1510
    %vm2257 = vcmp.eq.s32.totalorder %v1297, %v1524
    %vm2258 = vcmp.eq.s32.totalorder %v1298, %v1524
    %vm2259 = vcmp.eq.s32.totalorder %v1302, %v1524
    %vm2260 = vcmp.eq.s32.totalorder %v1306, %v1524
    %vm2261 = vcmp.eq.s32.totalorder %v1297, %v1538
    %vm2262 = vcmp.eq.s32.totalorder %v1298, %v1538
    %vm2263 = vcmp.eq.s32.totalorder %v1302, %v1538
    %vm2264 = vcmp.eq.s32.totalorder %v1306, %v1538
    %vm2265 = vcmp.eq.s32.totalorder %v1297, %v1552
    %vm2266 = vcmp.eq.s32.totalorder %v1298, %v1552
    %vm2267 = vcmp.eq.s32.totalorder %v1302, %v1552
    %vm2268 = vcmp.eq.s32.totalorder %v1306, %v1552
    %vm2269 = vcmp.eq.s32.totalorder %v1297, %v1566
    %vm2270 = vcmp.eq.s32.totalorder %v1298, %v1566
    %vm2271 = vcmp.eq.s32.totalorder %v1302, %v1566
    %vm2272 = vcmp.eq.s32.totalorder %v1306, %v1566
    %vm2273 = vcmp.eq.s32.totalorder %v1297, %v1580
    %vm2274 = vcmp.eq.s32.totalorder %v1298, %v1580
    %vm2275 = vcmp.eq.s32.totalorder %v1302, %v1580
    %vm2276 = vcmp.eq.s32.totalorder %v1306, %v1580
    %vm2277 = vcmp.eq.s32.totalorder %v1297, %v1594
    %vm2278 = vcmp.eq.s32.totalorder %v1298, %v1594
    %vm2279 = vcmp.eq.s32.totalorder %v1302, %v1594
    %vm2280 = vcmp.eq.s32.totalorder %v1306, %v1594
    %vm2281 = vcmp.eq.s32.totalorder %v1297, %v1608
    %vm2282 = vcmp.eq.s32.totalorder %v1298, %v1608
    %vm2283 = vcmp.eq.s32.totalorder %v1302, %v1608
    %vm2284 = vcmp.eq.s32.totalorder %v1306, %v1608
    %vm2285 = vcmp.eq.s32.totalorder %v1297, %v1622
    %vm2286 = vcmp.eq.s32.totalorder %v1298, %v1622
    %vm2287 = vcmp.eq.s32.totalorder %v1302, %v1622
    %vm2288 = vcmp.eq.s32.totalorder %v1306, %v1622
    %vm2289 = vcmp.eq.s32.totalorder %v1297, %v1636
    %vm2290 = vcmp.eq.s32.totalorder %v1298, %v1636
    %vm2291 = vcmp.eq.s32.totalorder %v1302, %v1636
    %vm2292 = vcmp.eq.s32.totalorder %v1306, %v1636
    %vm2293 = vcmp.eq.s32.totalorder %v1297, %v1650
    %vm2294 = vcmp.eq.s32.totalorder %v1298, %v1650
    %vm2295 = vcmp.eq.s32.totalorder %v1302, %v1650
    %vm2296 = vcmp.eq.s32.totalorder %v1306, %v1650
    %vm2297 = vcmp.eq.s32.totalorder %v1297, %v1664
    %vm2298 = vcmp.eq.s32.totalorder %v1298, %v1664
    %vm2299 = vcmp.eq.s32.totalorder %v1302, %v1664
    %vm2300 = vcmp.eq.s32.totalorder %v1306, %v1664
    %vm2301 = vcmp.eq.s32.totalorder %v1297, %v1678
    %vm2302 = vcmp.eq.s32.totalorder %v1298, %v1678
    %vm2303 = vcmp.eq.s32.totalorder %v1302, %v1678
    %vm2304 = vcmp.eq.s32.totalorder %v1306, %v1678
    %vm2305 = vcmp.eq.s32.totalorder %v1297, %v1692
    %vm2306 = vcmp.eq.s32.totalorder %v1298, %v1692
    %vm2307 = vcmp.eq.s32.totalorder %v1302, %v1692
    %vm2308 = vcmp.eq.s32.totalorder %v1306, %v1692
    %vm2309 = vcmp.eq.s32.totalorder %v1297, %v1706
    %vm2310 = vcmp.eq.s32.totalorder %v1298, %v1706
    %vm2311 = vcmp.eq.s32.totalorder %v1302, %v1706
    %vm2312 = vcmp.eq.s32.totalorder %v1306, %v1706
    %vm2313 = vcmp.eq.s32.totalorder %v1297, %v1720
    %vm2314 = vcmp.eq.s32.totalorder %v1298, %v1720
    %vm2315 = vcmp.eq.s32.totalorder %v1302, %v1720
    %vm2316 = vcmp.eq.s32.totalorder %v1306, %v1720
    %vm2317 = vcmp.eq.s32.totalorder %v1297, %v1734
    %vm2318 = vcmp.eq.s32.totalorder %v1298, %v1734
    %vm2319 = vcmp.eq.s32.totalorder %v1302, %v1734
    %vm2320 = vcmp.eq.s32.totalorder %v1306, %v1734
    %vm2321 = vcmp.eq.s32.totalorder %v1297, %v1748
    %vm2322 = vcmp.eq.s32.totalorder %v1298, %v1748
    %vm2323 = vcmp.eq.s32.totalorder %v1302, %v1748
    %vm2324 = vcmp.eq.s32.totalorder %v1306, %v1748
    %vm2325 = vcmp.eq.s32.totalorder %v1297, %v1762
    %vm2326 = vcmp.eq.s32.totalorder %v1298, %v1762
    %vm2327 = vcmp.eq.s32.totalorder %v1302, %v1762
    %vm2328 = vcmp.eq.s32.totalorder %v1306, %v1762
    %vm2329 = vcmp.eq.s32.totalorder %v1297, %v1776
    %vm2330 = vcmp.eq.s32.totalorder %v1298, %v1776
    %vm2331 = vcmp.eq.s32.totalorder %v1302, %v1776
    %vm2332 = vcmp.eq.s32.totalorder %v1306, %v1776
    %vm2333 = vcmp.eq.s32.totalorder %v1297, %v1790
    %vm2334 = vcmp.eq.s32.totalorder %v1298, %v1790
    %vm2335 = vcmp.eq.s32.totalorder %v1302, %v1790
    %vm2336 = vcmp.eq.s32.totalorder %v1306, %v1790
    %vm2337 = vcmp.eq.s32.totalorder %v1297, %v1804
    %vm2338 = vcmp.eq.s32.totalorder %v1298, %v1804
    %vm2339 = vcmp.eq.s32.totalorder %v1302, %v1804
    %vm2340 = vcmp.eq.s32.totalorder %v1306, %v1804
    %vm2341 = vcmp.eq.s32.totalorder %v1297, %v1818
    %vm2342 = vcmp.eq.s32.totalorder %v1298, %v1818
    %vm2343 = vcmp.eq.s32.totalorder %v1302, %v1818
    %vm2344 = vcmp.eq.s32.totalorder %v1306, %v1818
    %vm2345 = vcmp.eq.s32.totalorder %v1297, %v1832
    %vm2346 = vcmp.eq.s32.totalorder %v1298, %v1832
    %vm2347 = vcmp.eq.s32.totalorder %v1302, %v1832
    %vm2348 = vcmp.eq.s32.totalorder %v1306, %v1832
    %vm2349 = vcmp.eq.s32.totalorder %v1297, %v1846
    %vm2350 = vcmp.eq.s32.totalorder %v1298, %v1846
    %vm2351 = vcmp.eq.s32.totalorder %v1302, %v1846
    %vm2352 = vcmp.eq.s32.totalorder %v1306, %v1846
    %vm2353 = vcmp.eq.s32.totalorder %v1297, %v1860
    %vm2354 = vcmp.eq.s32.totalorder %v1298, %v1860
    %vm2355 = vcmp.eq.s32.totalorder %v1302, %v1860
    %vm2356 = vcmp.eq.s32.totalorder %v1306, %v1860
    %vm2357 = vcmp.eq.s32.totalorder %v1297, %v1874
    %vm2358 = vcmp.eq.s32.totalorder %v1298, %v1874
    %vm2359 = vcmp.eq.s32.totalorder %v1302, %v1874
    %vm2360 = vcmp.eq.s32.totalorder %v1306, %v1874
    %vm2361 = vcmp.eq.s32.totalorder %v1297, %v1888
    %vm2362 = vcmp.eq.s32.totalorder %v1298, %v1888
    %vm2363 = vcmp.eq.s32.totalorder %v1302, %v1888
    %vm2364 = vcmp.eq.s32.totalorder %v1306, %v1888
    %vm2365 = vcmp.eq.s32.totalorder %v1297, %v1902
    %vm2366 = vcmp.eq.s32.totalorder %v1298, %v1902
    %vm2367 = vcmp.eq.s32.totalorder %v1302, %v1902
    %vm2368 = vcmp.eq.s32.totalorder %v1306, %v1902
    %vm2369 = vcmp.eq.s32.totalorder %v1297, %v1916
    %vm2370 = vcmp.eq.s32.totalorder %v1298, %v1916
    %vm2371 = vcmp.eq.s32.totalorder %v1302, %v1916
    %vm2372 = vcmp.eq.s32.totalorder %v1306, %v1916
    %vm2373 = vcmp.eq.s32.totalorder %v1297, %v1930
    %vm2374 = vcmp.eq.s32.totalorder %v1298, %v1930
    %vm2375 = vcmp.eq.s32.totalorder %v1302, %v1930
    %vm2376 = vcmp.eq.s32.totalorder %v1306, %v1930
    %vm2377 = vcmp.eq.s32.totalorder %v1297, %v1944
    %vm2378 = vcmp.eq.s32.totalorder %v1298, %v1944
    %vm2379 = vcmp.eq.s32.totalorder %v1302, %v1944
    %vm2380 = vcmp.eq.s32.totalorder %v1306, %v1944
    %vm2381 = vcmp.eq.s32.totalorder %v1297, %v1958
    %vm2382 = vcmp.eq.s32.totalorder %v1298, %v1958
    %vm2383 = vcmp.eq.s32.totalorder %v1302, %v1958
    %vm2384 = vcmp.eq.s32.totalorder %v1306, %v1958
    %vm2385 = vcmp.eq.s32.totalorder %v1297, %v1972
    %vm2386 = vcmp.eq.s32.totalorder %v1298, %v1972
    %vm2387 = vcmp.eq.s32.totalorder %v1302, %v1972
    %vm2388 = vcmp.eq.s32.totalorder %v1306, %v1972
    %vm2389 = vcmp.eq.s32.totalorder %v1297, %v1986
    %vm2390 = vcmp.eq.s32.totalorder %v1298, %v1986
    %vm2391 = vcmp.eq.s32.totalorder %v1302, %v1986
    %vm2392 = vcmp.eq.s32.totalorder %v1306, %v1986
    %vm2393 = vcmp.eq.s32.totalorder %v1297, %v2000
    %vm2394 = vcmp.eq.s32.totalorder %v1298, %v2000
    %vm2395 = vcmp.eq.s32.totalorder %v1302, %v2000
    %vm2396 = vcmp.eq.s32.totalorder %v1306, %v2000
    %vm2397 = vcmp.eq.s32.totalorder %v1297, %v2014
    %vm2398 = vcmp.eq.s32.totalorder %v1298, %v2014
    %vm2399 = vcmp.eq.s32.totalorder %v1302, %v2014
    %vm2400 = vcmp.eq.s32.totalorder %v1306, %v2014
    %vm2401 = vcmp.eq.s32.totalorder %v1297, %v2028
    %vm2402 = vcmp.eq.s32.totalorder %v1298, %v2028
    %vm2403 = vcmp.eq.s32.totalorder %v1302, %v2028
    %vm2404 = vcmp.eq.s32.totalorder %v1306, %v2028
    %vm2405 = vcmp.eq.s32.totalorder %v1297, %v2042
    %vm2406 = vcmp.eq.s32.totalorder %v1298, %v2042
    %vm2407 = vcmp.eq.s32.totalorder %v1302, %v2042
    %vm2408 = vcmp.eq.s32.totalorder %v1306, %v2042
    %vm2409 = vcmp.eq.s32.totalorder %v1297, %v2056
    %vm2410 = vcmp.eq.s32.totalorder %v1298, %v2056
    %vm2411 = vcmp.eq.s32.totalorder %v1302, %v2056
    %vm2412 = vcmp.eq.s32.totalorder %v1306, %v2056
    %vm2413 = vcmp.eq.s32.totalorder %v1297, %v2070
    %vm2414 = vcmp.eq.s32.totalorder %v1298, %v2070
    %vm2415 = vcmp.eq.s32.totalorder %v1302, %v2070
    %vm2416 = vcmp.eq.s32.totalorder %v1306, %v2070
    %vm2417 = vcmp.eq.s32.totalorder %v1297, %v2084
    %vm2418 = vcmp.eq.s32.totalorder %v1298, %v2084
    %vm2419 = vcmp.eq.s32.totalorder %v1302, %v2084
    %vm2420 = vcmp.eq.s32.totalorder %v1306, %v2084
    %vm2421 = vcmp.eq.s32.totalorder %v1297, %v2098
    %vm2422 = vcmp.eq.s32.totalorder %v1298, %v2098
    %vm2423 = vcmp.eq.s32.totalorder %v1302, %v2098
    %vm2424 = vcmp.eq.s32.totalorder %v1306, %v2098
    %vm2425 = vcmp.eq.s32.totalorder %v1297, %v2112
    %vm2426 = vcmp.eq.s32.totalorder %v1298, %v2112
    %vm2427 = vcmp.eq.s32.totalorder %v1302, %v2112
    %vm2428 = vcmp.eq.s32.totalorder %v1306, %v2112
    %vm2429 = vcmp.eq.s32.totalorder %v1297, %v2126
    %vm2430 = vcmp.eq.s32.totalorder %v1298, %v2126
    %vm2431 = vcmp.eq.s32.totalorder %v1302, %v2126
    %vm2432 = vcmp.eq.s32.totalorder %v1306, %v2126
    %vm2433 = vcmp.eq.s32.totalorder %v1297, %v2140
    %vm2434 = vcmp.eq.s32.totalorder %v1298, %v2140
    %vm2435 = vcmp.eq.s32.totalorder %v1302, %v2140
    %vm2436 = vcmp.eq.s32.totalorder %v1306, %v2140
    %vm2437 = vcmp.eq.s32.totalorder %v1297, %v2154
    %vm2438 = vcmp.eq.s32.totalorder %v1298, %v2154
    %vm2439 = vcmp.eq.s32.totalorder %v1302, %v2154
    %vm2440 = vcmp.eq.s32.totalorder %v1306, %v2154
    %vm2441 = vcmp.eq.s32.totalorder %v1297, %v2168
    %vm2442 = vcmp.eq.s32.totalorder %v1298, %v2168
    %vm2443 = vcmp.eq.s32.totalorder %v1302, %v2168
    %vm2444 = vcmp.eq.s32.totalorder %v1306, %v2168
    %vm2445 = vcmp.eq.s32.totalorder %v1297, %v2182
    %vm2446 = vcmp.eq.s32.totalorder %v1298, %v2182
    %vm2447 = vcmp.eq.s32.totalorder %v1302, %v2182
    %vm2448 = vcmp.eq.s32.totalorder %v1306, %v2182
    %vm2449 = vcmp.eq.s32.totalorder %v1297, %v2196
    %vm2450 = vcmp.eq.s32.totalorder %v1298, %v2196
    %vm2451 = vcmp.eq.s32.totalorder %v1302, %v2196
    %vm2452 = vcmp.eq.s32.totalorder %v1306, %v2196
    %v2453 = vsel %vm2197, 1, 0
    %v2454 = vsel %vm2198, 1, 0
    %v2455 = vsel %vm2199, 1, 0
    %v2456 = vsel %vm2200, 1, 0
    %v2457 = vsel %vm2201, 1, 0
    %v2458 = vsel %vm2202, 1, 0
    %v2459 = vsel %vm2203, 1, 0
    %v2460 = vsel %vm2204, 1, 0
    %v2461 = vsel %vm2205, 1, 0
    %v2462 = vsel %vm2206, 1, 0
    %v2463 = vsel %vm2207, 1, 0
    %v2464 = vsel %vm2208, 1, 0
    %v2465 = vsel %vm2209, 1, 0
    %v2466 = vsel %vm2210, 1, 0
    %v2467 = vsel %vm2211, 1, 0
    %v2468 = vsel %vm2212, 1, 0
    %v2469 = vsel %vm2213, 1, 0
    %v2470 = vsel %vm2214, 1, 0
    %v2471 = vsel %vm2215, 1, 0
    %v2472 = vsel %vm2216, 1, 0
    %v2473 = vsel %vm2217, 1, 0
    %v2474 = vsel %vm2218, 1, 0
    %v2475 = vsel %vm2219, 1, 0
    %v2476 = vsel %vm2220, 1, 0
    %v2477 = vsel %vm2221, 1, 0
    %v2478 = vsel %vm2222, 1, 0
    %v2479 = vsel %vm2223, 1, 0
    %v2480 = vsel %vm2224, 1, 0
    %v2481 = vsel %vm2225, 1, 0
    %v2482 = vsel %vm2226, 1, 0
    %v2483 = vsel %vm2227, 1, 0
    %v2484 = vsel %vm2228, 1, 0
    %v2485 = vsel %vm2229, 1, 0
    %v2486 = vsel %vm2230, 1, 0
    %v2487 = vsel %vm2231, 1, 0
    %v2488 = vsel %vm2232, 1, 0
    %v2489 = vsel %vm2233, 1, 0
    %v2490 = vsel %vm2234, 1, 0
    %v2491 = vsel %vm2235, 1, 0
    %v2492 = vsel %vm2236, 1, 0
    %v2493 = vsel %vm2237, 1, 0
    %v2494 = vsel %vm2238, 1, 0
    %v2495 = vsel %vm2239, 1, 0
    %v2496 = vsel %vm2240, 1, 0
    %v2497 = vsel %vm2241, 1, 0
    %v2498 = vsel %vm2242, 1, 0
    %v2499 = vsel %vm2243, 1, 0
    %v2500 = vsel %vm2244, 1, 0
    %v2501 = vsel %vm2245, 1, 0
    %v2502 = vsel %vm2246, 1, 0
    %v2503 = vsel %vm2247, 1, 0
    %v2504 = vsel %vm2248, 1, 0
    %v2505 = vsel %vm2249, 1, 0
    %v2506 = vsel %vm2250, 1, 0
    %v2507 = vsel %vm2251, 1, 0
    %v2508 = vsel %vm2252, 1, 0
    %v2509 = vsel %vm2253, 1, 0
    %v2510 = vsel %vm2254, 1, 0
    %v2511 = vsel %vm2255, 1, 0
    %v2512 = vsel %vm2256, 1, 0
    %v2513 = vsel %vm2257, 1, 0
    %v2514 = vsel %vm2258, 1, 0
    %v2515 = vsel %vm2259, 1, 0
    %v2516 = vsel %vm2260, 1, 0
    %v2517 = vsel %vm2261, 1, 0
    %v2518 = vsel %vm2262, 1, 0
    %v2519 = vsel %vm2263, 1, 0
    %v2520 = vsel %vm2264, 1, 0
    %v2521 = vsel %vm2265, 1, 0
    %v2522 = vsel %vm2266, 1, 0
    %v2523 = vsel %vm2267, 1, 0
    %v2524 = vsel %vm2268, 1, 0
    %v2525 = vsel %vm2269, 1, 0
    %v2526 = vsel %vm2270, 1, 0
    %v2527 = vsel %vm2271, 1, 0
    %v2528 = vsel %vm2272, 1, 0
    %v2529 = vsel %vm2273, 1, 0
    %v2530 = vsel %vm2274, 1, 0
    %v2531 = vsel %vm2275, 1, 0
    %v2532 = vsel %vm2276, 1, 0
    %v2533 = vsel %vm2277, 1, 0
    %v2534 = vsel %vm2278, 1, 0
    %v2535 = vsel %vm2279, 1, 0
    %v2536 = vsel %vm2280, 1, 0
    %v2537 = vsel %vm2281, 1, 0
    %v2538 = vsel %vm2282, 1, 0
    %v2539 = vsel %vm2283, 1, 0
    %v2540 = vsel %vm2284, 1, 0
    %v2541 = vsel %vm2285, 1, 0
    %v2542 = vsel %vm2286, 1, 0
    %v2543 = vsel %vm2287, 1, 0
    %v2544 = vsel %vm2288, 1, 0
    %v2545 = vsel %vm2289, 1, 0
    %v2546 = vsel %vm2290, 1, 0
    %v2547 = vsel %vm2291, 1, 0
    %v2548 = vsel %vm2292, 1, 0
    %v2549 = vsel %vm2293, 1, 0
    %v2550 = vsel %vm2294, 1, 0
    %v2551 = vsel %vm2295, 1, 0
    %v2552 = vsel %vm2296, 1, 0
    %v2553 = vsel %vm2297, 1, 0
    %v2554 = vsel %vm2298, 1, 0
    %v2555 = vsel %vm2299, 1, 0
    %v2556 = vsel %vm2300, 1, 0
    %v2557 = vsel %vm2301, 1, 0
    %v2558 = vsel %vm2302, 1, 0
    %v2559 = vsel %vm2303, 1, 0
    %v2560 = vsel %vm2304, 1, 0
    %v2561 = vsel %vm2305, 1, 0
    %v2562 = vsel %vm2306, 1, 0
    %v2563 = vsel %vm2307, 1, 0
    %v2564 = vsel %vm2308, 1, 0
    %v2565 = vsel %vm2309, 1, 0
    %v2566 = vsel %vm2310, 1, 0
    %v2567 = vsel %vm2311, 1, 0
    %v2568 = vsel %vm2312, 1, 0
    %v2569 = vsel %vm2313, 1, 0
    %v2570 = vsel %vm2314, 1, 0
    %v2571 = vsel %vm2315, 1, 0
    %v2572 = vsel %vm2316, 1, 0
    %v2573 = vsel %vm2317, 1, 0
    %v2574 = vsel %vm2318, 1, 0
    %v2575 = vsel %vm2319, 1, 0
    %v2576 = vsel %vm2320, 1, 0
    %v2577 = vsel %vm2321, 1, 0
    %v2578 = vsel %vm2322, 1, 0
    %v2579 = vsel %vm2323, 1, 0
    %v2580 = vsel %vm2324, 1, 0
    %v2581 = vsel %vm2325, 1, 0
    %v2582 = vsel %vm2326, 1, 0
    %v2583 = vsel %vm2327, 1, 0
    %v2584 = vsel %vm2328, 1, 0
    %v2585 = vsel %vm2329, 1, 0
    %v2586 = vsel %vm2330, 1, 0
    %v2587 = vsel %vm2331, 1, 0
    %v2588 = vsel %vm2332, 1, 0
    %v2589 = vsel %vm2333, 1, 0
    %v2590 = vsel %vm2334, 1, 0
    %v2591 = vsel %vm2335, 1, 0
    %v2592 = vsel %vm2336, 1, 0
    %v2593 = vsel %vm2337, 1, 0
    %v2594 = vsel %vm2338, 1, 0
    %v2595 = vsel %vm2339, 1, 0
    %v2596 = vsel %vm2340, 1, 0
    %v2597 = vsel %vm2341, 1, 0
    %v2598 = vsel %vm2342, 1, 0
    %v2599 = vsel %vm2343, 1, 0
    %v2600 = vsel %vm2344, 1, 0
    %v2601 = vsel %vm2345, 1, 0
    %v2602 = vsel %vm2346, 1, 0
    %v2603 = vsel %vm2347, 1, 0
    %v2604 = vsel %vm2348, 1, 0
    %v2605 = vsel %vm2349, 1, 0
    %v2606 = vsel %vm2350, 1, 0
    %v2607 = vsel %vm2351, 1, 0
    %v2608 = vsel %vm2352, 1, 0
    %v2609 = vsel %vm2353, 1, 0
    %v2610 = vsel %vm2354, 1, 0
    %v2611 = vsel %vm2355, 1, 0
    %v2612 = vsel %vm2356, 1, 0
    %v2613 = vsel %vm2357, 1, 0
    %v2614 = vsel %vm2358, 1, 0
    %v2615 = vsel %vm2359, 1, 0
    %v2616 = vsel %vm2360, 1, 0
    %v2617 = vsel %vm2361, 1, 0
    %v2618 = vsel %vm2362, 1, 0
    %v2619 = vsel %vm2363, 1, 0
    %v2620 = vsel %vm2364, 1, 0
    %v2621 = vsel %vm2365, 1, 0
    %v2622 = vsel %vm2366, 1, 0
    %v2623 = vsel %vm2367, 1, 0
    %v2624 = vsel %vm2368, 1, 0
    %v2625 = vsel %vm2369, 1, 0
    %v2626 = vsel %vm2370, 1, 0
    %v2627 = vsel %vm2371, 1, 0
    %v2628 = vsel %vm2372, 1, 0
    %v2629 = vsel %vm2373, 1, 0
    %v2630 = vsel %vm2374, 1, 0
    %v2631 = vsel %vm2375, 1, 0
    %v2632 = vsel %vm2376, 1, 0
    %v2633 = vsel %vm2377, 1, 0
    %v2634 = vsel %vm2378, 1, 0
    %v2635 = vsel %vm2379, 1, 0
    %v2636 = vsel %vm2380, 1, 0
    %v2637 = vsel %vm2381, 1, 0
    %v2638 = vsel %vm2382, 1, 0
    %v2639 = vsel %vm2383, 1, 0
    %v2640 = vsel %vm2384, 1, 0
    %v2641 = vsel %vm2385, 1, 0
    %v2642 = vsel %vm2386, 1, 0
    %v2643 = vsel %vm2387, 1, 0
    %v2644 = vsel %vm2388, 1, 0
    %v2645 = vsel %vm2389, 1, 0
    %v2646 = vsel %vm2390, 1, 0
    %v2647 = vsel %vm2391, 1, 0
    %v2648 = vsel %vm2392, 1, 0
    %v2649 = vsel %vm2393, 1, 0
    %v2650 = vsel %vm2394, 1, 0
    %v2651 = vsel %vm2395, 1, 0
    %v2652 = vsel %vm2396, 1, 0
    %v2653 = vsel %vm2397, 1, 0
    %v2654 = vsel %vm2398, 1, 0
    %v2655 = vsel %vm2399, 1, 0
    %v2656 = vsel %vm2400, 1, 0
    %v2657 = vsel %vm2401, 1, 0
    %v2658 = vsel %vm2402, 1, 0
    %v2659 = vsel %vm2403, 1, 0
    %v2660 = vsel %vm2404, 1, 0
    %v2661 = vsel %vm2405, 1, 0
    %v2662 = vsel %vm2406, 1, 0
    %v2663 = vsel %vm2407, 1, 0
    %v2664 = vsel %vm2408, 1, 0
    %v2665 = vsel %vm2409, 1, 0
    %v2666 = vsel %vm2410, 1, 0
    %v2667 = vsel %vm2411, 1, 0
    %v2668 = vsel %vm2412, 1, 0
    %v2669 = vsel %vm2413, 1, 0
    %v2670 = vsel %vm2414, 1, 0
    %v2671 = vsel %vm2415, 1, 0
    %v2672 = vsel %vm2416, 1, 0
    %v2673 = vsel %vm2417, 1, 0
    %v2674 = vsel %vm2418, 1, 0
    %v2675 = vsel %vm2419, 1, 0
    %v2676 = vsel %vm2420, 1, 0
    %v2677 = vsel %vm2421, 1, 0
    %v2678 = vsel %vm2422, 1, 0
    %v2679 = vsel %vm2423, 1, 0
    %v2680 = vsel %vm2424, 1, 0
    %v2681 = vsel %vm2425, 1, 0
    %v2682 = vsel %vm2426, 1, 0
    %v2683 = vsel %vm2427, 1, 0
    %v2684 = vsel %vm2428, 1, 0
    %v2685 = vsel %vm2429, 1, 0
    %v2686 = vsel %vm2430, 1, 0
    %v2687 = vsel %vm2431, 1, 0
    %v2688 = vsel %vm2432, 1, 0
    %v2689 = vsel %vm2433, 1, 0
    %v2690 = vsel %vm2434, 1, 0
    %v2691 = vsel %vm2435, 1, 0
    %v2692 = vsel %vm2436, 1, 0
    %v2693 = vsel %vm2437, 1, 0
    %v2694 = vsel %vm2438, 1, 0
    %v2695 = vsel %vm2439, 1, 0
    %v2696 = vsel %vm2440, 1, 0
    %v2697 = vsel %vm2441, 1, 0
    %v2698 = vsel %vm2442, 1, 0
    %v2699 = vsel %vm2443, 1, 0
    %v2700 = vsel %vm2444, 1, 0
    %v2701 = vsel %vm2445, 1, 0
    %v2702 = vsel %vm2446, 1, 0
    %v2703 = vsel %vm2447, 1, 0
    %v2704 = vsel %vm2448, 1, 0
    %v2705 = vsel %vm2449, 1, 0
    %v2706 = vsel %vm2450, 1, 0
    %v2707 = vsel %vm2451, 1, 0
    %v2708 = vsel %vm2452, 1, 0
    %v2709 = vcvt.s32.f32 %v2453
    %v2710 = vcvt.s32.f32 %v2454
    %v2711 = vcvt.s32.f32 %v2455
    %v2712 = vcvt.s32.f32 %v2456
    %v2713 = vcvt.s32.f32 %v2457
    %v2714 = vcvt.s32.f32 %v2458
    %v2715 = vcvt.s32.f32 %v2459
    %v2716 = vcvt.s32.f32 %v2460
    %v2717 = vcvt.s32.f32 %v2461
    %v2718 = vcvt.s32.f32 %v2462
    %v2719 = vcvt.s32.f32 %v2463
    %v2720 = vcvt.s32.f32 %v2464
    %v2721 = vcvt.s32.f32 %v2465
    %v2722 = vcvt.s32.f32 %v2466
    %v2723 = vcvt.s32.f32 %v2467
    %v2724 = vcvt.s32.f32 %v2468
    %v2725 = vcvt.s32.f32 %v2469
    %v2726 = vcvt.s32.f32 %v2470
    %v2727 = vcvt.s32.f32 %v2471
    %v2728 = vcvt.s32.f32 %v2472
    %v2729 = vcvt.s32.f32 %v2473
    %v2730 = vcvt.s32.f32 %v2474
    %v2731 = vcvt.s32.f32 %v2475
    %v2732 = vcvt.s32.f32 %v2476
    %v2733 = vcvt.s32.f32 %v2477
    %v2734 = vcvt.s32.f32 %v2478
    %v2735 = vcvt.s32.f32 %v2479
    %v2736 = vcvt.s32.f32 %v2480
    %v2737 = vcvt.s32.f32 %v2481
    %v2738 = vcvt.s32.f32 %v2482
    %v2739 = vcvt.s32.f32 %v2483
    %v2740 = vcvt.s32.f32 %v2484
    %v2741 = vcvt.s32.f32 %v2485
    %v2742 = vcvt.s32.f32 %v2486
    %v2743 = vcvt.s32.f32 %v2487
    %v2744 = vcvt.s32.f32 %v2488
    %v2745 = vcvt.s32.f32 %v2489
    %v2746 = vcvt.s32.f32 %v2490
    %v2747 = vcvt.s32.f32 %v2491
    %v2748 = vcvt.s32.f32 %v2492
    %v2749 = vcvt.s32.f32 %v2493
    %v2750 = vcvt.s32.f32 %v2494
    %v2751 = vcvt.s32.f32 %v2495
    %v2752 = vcvt.s32.f32 %v2496
    %v2753 = vcvt.s32.f32 %v2497
    %v2754 = vcvt.s32.f32 %v2498
    %v2755 = vcvt.s32.f32 %v2499
    %v2756 = vcvt.s32.f32 %v2500
    %v2757 = vcvt.s32.f32 %v2501
    %v2758 = vcvt.s32.f32 %v2502
    %v2759 = vcvt.s32.f32 %v2503
    %v2760 = vcvt.s32.f32 %v2504
    %v2761 = vcvt.s32.f32 %v2505
    %v2762 = vcvt.s32.f32 %v2506
    %v2763 = vcvt.s32.f32 %v2507
    %v2764 = vcvt.s32.f32 %v2508
    %v2765 = vcvt.s32.f32 %v2509
    %v2766 = vcvt.s32.f32 %v2510
    %v2767 = vcvt.s32.f32 %v2511
    %v2768 = vcvt.s32.f32 %v2512
    %v2769 = vcvt.s32.f32 %v2513
    %v2770 = vcvt.s32.f32 %v2514
    %v2771 = vcvt.s32.f32 %v2515
    %v2772 = vcvt.s32.f32 %v2516
    %v2773 = vcvt.s32.f32 %v2517
    %v2774 = vcvt.s32.f32 %v2518
    %v2775 = vcvt.s32.f32 %v2519
    %v2776 = vcvt.s32.f32 %v2520
    %v2777 = vcvt.s32.f32 %v2521
    %v2778 = vcvt.s32.f32 %v2522
    %v2779 = vcvt.s32.f32 %v2523
    %v2780 = vcvt.s32.f32 %v2524
    %v2781 = vcvt.s32.f32 %v2525
    %v2782 = vcvt.s32.f32 %v2526
    %v2783 = vcvt.s32.f32 %v2527
    %v2784 = vcvt.s32.f32 %v2528
    %v2785 = vcvt.s32.f32 %v2529
    %v2786 = vcvt.s32.f32 %v2530
    %v2787 = vcvt.s32.f32 %v2531
    %v2788 = vcvt.s32.f32 %v2532
    %v2789 = vcvt.s32.f32 %v2533
    %v2790 = vcvt.s32.f32 %v2534
    %v2791 = vcvt.s32.f32 %v2535
    %v2792 = vcvt.s32.f32 %v2536
    %v2793 = vcvt.s32.f32 %v2537
    %v2794 = vcvt.s32.f32 %v2538
    %v2795 = vcvt.s32.f32 %v2539
    %v2796 = vcvt.s32.f32 %v2540
    %v2797 = vcvt.s32.f32 %v2541
    %v2798 = vcvt.s32.f32 %v2542
    %v2799 = vcvt.s32.f32 %v2543
    %v2800 = vcvt.s32.f32 %v2544
    %v2801 = vcvt.s32.f32 %v2545
    %v2802 = vcvt.s32.f32 %v2546
    %v2803 = vcvt.s32.f32 %v2547
    %v2804 = vcvt.s32.f32 %v2548
    %v2805 = vcvt.s32.f32 %v2549
    %v2806 = vcvt.s32.f32 %v2550
    %v2807 = vcvt.s32.f32 %v2551
    %v2808 = vcvt.s32.f32 %v2552
    %v2809 = vcvt.s32.f32 %v2553
    %v2810 = vcvt.s32.f32 %v2554
    %v2811 = vcvt.s32.f32 %v2555
    %v2812 = vcvt.s32.f32 %v2556
    %v2813 = vcvt.s32.f32 %v2557
    %v2814 = vcvt.s32.f32 %v2558
    %v2815 = vcvt.s32.f32 %v2559
    %v2816 = vcvt.s32.f32 %v2560
    %v2817 = vcvt.s32.f32 %v2561
    %v2818 = vcvt.s32.f32 %v2562
    %v2819 = vcvt.s32.f32 %v2563
    %v2820 = vcvt.s32.f32 %v2564
    %v2821 = vcvt.s32.f32 %v2565
    %v2822 = vcvt.s32.f32 %v2566
    %v2823 = vcvt.s32.f32 %v2567
    %v2824 = vcvt.s32.f32 %v2568
    %v2825 = vcvt.s32.f32 %v2569
    %v2826 = vcvt.s32.f32 %v2570
    %v2827 = vcvt.s32.f32 %v2571
    %v2828 = vcvt.s32.f32 %v2572
    %v2829 = vcvt.s32.f32 %v2573
    %v2830 = vcvt.s32.f32 %v2574
    %v2831 = vcvt.s32.f32 %v2575
    %v2832 = vcvt.s32.f32 %v2576
    %v2833 = vcvt.s32.f32 %v2577
    %v2834 = vcvt.s32.f32 %v2578
    %v2835 = vcvt.s32.f32 %v2579
    %v2836 = vcvt.s32.f32 %v2580
    %v2837 = vcvt.s32.f32 %v2581
    %v2838 = vcvt.s32.f32 %v2582
    %v2839 = vcvt.s32.f32 %v2583
    %v2840 = vcvt.s32.f32 %v2584
    %v2841 = vcvt.s32.f32 %v2585
    %v2842 = vcvt.s32.f32 %v2586
    %v2843 = vcvt.s32.f32 %v2587
    %v2844 = vcvt.s32.f32 %v2588
    %v2845 = vcvt.s32.f32 %v2589
    %v2846 = vcvt.s32.f32 %v2590
    %v2847 = vcvt.s32.f32 %v2591
    %v2848 = vcvt.s32.f32 %v2592
    %v2849 = vcvt.s32.f32 %v2593
    %v2850 = vcvt.s32.f32 %v2594
    %v2851 = vcvt.s32.f32 %v2595
    %v2852 = vcvt.s32.f32 %v2596
    %v2853 = vcvt.s32.f32 %v2597
    %v2854 = vcvt.s32.f32 %v2598
    %v2855 = vcvt.s32.f32 %v2599
    %v2856 = vcvt.s32.f32 %v2600
    %v2857 = vcvt.s32.f32 %v2601
    %v2858 = vcvt.s32.f32 %v2602
    %v2859 = vcvt.s32.f32 %v2603
    %v2860 = vcvt.s32.f32 %v2604
    %v2861 = vcvt.s32.f32 %v2605
    %v2862 = vcvt.s32.f32 %v2606
    %v2863 = vcvt.s32.f32 %v2607
    %v2864 = vcvt.s32.f32 %v2608
    %v2865 = vcvt.s32.f32 %v2609
    %v2866 = vcvt.s32.f32 %v2610
    %v2867 = vcvt.s32.f32 %v2611
    %v2868 = vcvt.s32.f32 %v2612
    %v2869 = vcvt.s32.f32 %v2613
    %v2870 = vcvt.s32.f32 %v2614
    %v2871 = vcvt.s32.f32 %v2615
    %v2872 = vcvt.s32.f32 %v2616
    %v2873 = vcvt.s32.f32 %v2617
    %v2874 = vcvt.s32.f32 %v2618
    %v2875 = vcvt.s32.f32 %v2619
    %v2876 = vcvt.s32.f32 %v2620
    %v2877 = vcvt.s32.f32 %v2621
    %v2878 = vcvt.s32.f32 %v2622
    %v2879 = vcvt.s32.f32 %v2623
    %v2880 = vcvt.s32.f32 %v2624
    %v2881 = vcvt.s32.f32 %v2625
    %v2882 = vcvt.s32.f32 %v2626
    %v2883 = vcvt.s32.f32 %v2627
    %v2884 = vcvt.s32.f32 %v2628
    %v2885 = vcvt.s32.f32 %v2629
    %v2886 = vcvt.s32.f32 %v2630
    %v2887 = vcvt.s32.f32 %v2631
    %v2888 = vcvt.s32.f32 %v2632
    %v2889 = vcvt.s32.f32 %v2633
    %v2890 = vcvt.s32.f32 %v2634
    %v2891 = vcvt.s32.f32 %v2635
    %v2892 = vcvt.s32.f32 %v2636
    %v2893 = vcvt.s32.f32 %v2637
    %v2894 = vcvt.s32.f32 %v2638
    %v2895 = vcvt.s32.f32 %v2639
    %v2896 = vcvt.s32.f32 %v2640
    %v2897 = vcvt.s32.f32 %v2641
    %v2898 = vcvt.s32.f32 %v2642
    %v2899 = vcvt.s32.f32 %v2643
    %v2900 = vcvt.s32.f32 %v2644
    %v2901 = vcvt.s32.f32 %v2645
    %v2902 = vcvt.s32.f32 %v2646
    %v2903 = vcvt.s32.f32 %v2647
    %v2904 = vcvt.s32.f32 %v2648
    %v2905 = vcvt.s32.f32 %v2649
    %v2906 = vcvt.s32.f32 %v2650
    %v2907 = vcvt.s32.f32 %v2651
    %v2908 = vcvt.s32.f32 %v2652
    %v2909 = vcvt.s32.f32 %v2653
    %v2910 = vcvt.s32.f32 %v2654
    %v2911 = vcvt.s32.f32 %v2655
    %v2912 = vcvt.s32.f32 %v2656
    %v2913 = vcvt.s32.f32 %v2657
    %v2914 = vcvt.s32.f32 %v2658
    %v2915 = vcvt.s32.f32 %v2659
    %v2916 = vcvt.s32.f32 %v2660
    %v2917 = vcvt.s32.f32 %v2661
    %v2918 = vcvt.s32.f32 %v2662
    %v2919 = vcvt.s32.f32 %v2663
    %v2920 = vcvt.s32.f32 %v2664
    %v2921 = vcvt.s32.f32 %v2665
    %v2922 = vcvt.s32.f32 %v2666
    %v2923 = vcvt.s32.f32 %v2667
    %v2924 = vcvt.s32.f32 %v2668
    %v2925 = vcvt.s32.f32 %v2669
    %v2926 = vcvt.s32.f32 %v2670
    %v2927 = vcvt.s32.f32 %v2671
    %v2928 = vcvt.s32.f32 %v2672
    %v2929 = vcvt.s32.f32 %v2673
    %v2930 = vcvt.s32.f32 %v2674
    %v2931 = vcvt.s32.f32 %v2675
    %v2932 = vcvt.s32.f32 %v2676
    %v2933 = vcvt.s32.f32 %v2677
    %v2934 = vcvt.s32.f32 %v2678
    %v2935 = vcvt.s32.f32 %v2679
    %v2936 = vcvt.s32.f32 %v2680
    %v2937 = vcvt.s32.f32 %v2681
    %v2938 = vcvt.s32.f32 %v2682
    %v2939 = vcvt.s32.f32 %v2683
    %v2940 = vcvt.s32.f32 %v2684
    %v2941 = vcvt.s32.f32 %v2685
    %v2942 = vcvt.s32.f32 %v2686
    %v2943 = vcvt.s32.f32 %v2687
    %v2944 = vcvt.s32.f32 %v2688
    %v2945 = vcvt.s32.f32 %v2689
    %v2946 = vcvt.s32.f32 %v2690
    %v2947 = vcvt.s32.f32 %v2691
    %v2948 = vcvt.s32.f32 %v2692
    %v2949 = vcvt.s32.f32 %v2693
    %v2950 = vcvt.s32.f32 %v2694
    %v2951 = vcvt.s32.f32 %v2695
    %v2952 = vcvt.s32.f32 %v2696
    %v2953 = vcvt.s32.f32 %v2697
    %v2954 = vcvt.s32.f32 %v2698
    %v2955 = vcvt.s32.f32 %v2699
    %v2956 = vcvt.s32.f32 %v2700
    %v2957 = vcvt.s32.f32 %v2701
    %v2958 = vcvt.s32.f32 %v2702
    %v2959 = vcvt.s32.f32 %v2703
    %v2960 = vcvt.s32.f32 %v2704
    %v2961 = vcvt.s32.f32 %v2705
    %v2962 = vcvt.s32.f32 %v2706
    %v2963 = vcvt.s32.f32 %v2707
    %v2964 = vcvt.s32.f32 %v2708
    %v2965 = vld [vmem:[%s3] sm:$0xff]
    %v2966 = vld [vmem:[%s3 + $0x8] sm:$0xff]
    %v2967 = vld [vmem:[%s3 + $0x10] sm:$0xff]
    %v2968 = vld [vmem:[%s3 + $0x18] sm:$0xff]
    %v2969 = vld [vmem:[%s3 + $0x20] sm:$0xff]
    %v2970 = vld [vmem:[%s3 + $0x28] sm:$0xff]
    %v2971 = vld [vmem:[%s3 + $0x30] sm:$0xff]
    %v2972 = vld [vmem:[%s3 + $0x38] sm:$0xff]
    %v2973 = vld [vmem:[%s3 + $0x40] sm:$0xff]
    %v2974 = vld [vmem:[%s3 + $0x48] sm:$0xff]
    %v2975 = vld [vmem:[%s3 + $0x50] sm:$0xff]
    %v2976 = vld [vmem:[%s3 + $0x58] sm:$0xff]
    %v2977 = vld [vmem:[%s3 + $0x60] sm:$0xff]
    %v2978 = vld [vmem:[%s3 + $0x68] sm:$0xff]
    %v2979 = vld [vmem:[%s3 + $0x70] sm:$0xff]
    %v2980 = vld [vmem:[%s3 + $0x78] sm:$0xff]
    %v2981 = vld [vmem:[%s3 + $0x80] sm:$0xff]
    %v2982 = vld [vmem:[%s3 + $0x88] sm:$0xff]
    %v2983 = vld [vmem:[%s3 + $0x90] sm:$0xff]
    %v2984 = vld [vmem:[%s3 + $0x98] sm:$0xff]
    %v2985 = vld [vmem:[%s3 + $0xa0] sm:$0xff]
    %v2986 = vld [vmem:[%s3 + $0xa8] sm:$0xff]
    %v2987 = vld [vmem:[%s3 + $0xb0] sm:$0xff]
    %v2988 = vld [vmem:[%s3 + $0xb8] sm:$0xff]
    %v2989 = vld [vmem:[%s3 + $0xc0] sm:$0xff]
    %v2990 = vld [vmem:[%s3 + $0xc8] sm:$0xff]
    %v2991 = vld [vmem:[%s3 + $0xd0] sm:$0xff]
    %v2992 = vld [vmem:[%s3 + $0xd8] sm:$0xff]
    %v2993 = vld [vmem:[%s3 + $0xe0] sm:$0xff]
    %v2994 = vld [vmem:[%s3 + $0xe8] sm:$0xff]
    %v2995 = vld [vmem:[%s3 + $0xf0] sm:$0xff]
    %v2996 = vld [vmem:[%s3 + $0xf8] sm:$0xff]
    %v2997 = vld [vmem:[%s3 + $0x100] sm:$0xff]
    %v2998 = vld [vmem:[%s3 + $0x108] sm:$0xff]
    %v2999 = vld [vmem:[%s3 + $0x110] sm:$0xff]
    %v3000 = vld [vmem:[%s3 + $0x118] sm:$0xff]
    %v3001 = vld [vmem:[%s3 + $0x120] sm:$0xff]
    %v3002 = vld [vmem:[%s3 + $0x128] sm:$0xff]
    %v3003 = vld [vmem:[%s3 + $0x130] sm:$0xff]
    %v3004 = vld [vmem:[%s3 + $0x138] sm:$0xff]
    %v3005 = vld [vmem:[%s3 + $0x140] sm:$0xff]
    %v3006 = vld [vmem:[%s3 + $0x148] sm:$0xff]
    %v3007 = vld [vmem:[%s3 + $0x150] sm:$0xff]
    %v3008 = vld [vmem:[%s3 + $0x158] sm:$0xff]
    %v3009 = vld [vmem:[%s3 + $0x160] sm:$0xff]
    %v3010 = vld [vmem:[%s3 + $0x168] sm:$0xff]
    %v3011 = vld [vmem:[%s3 + $0x170] sm:$0xff]
    %v3012 = vld [vmem:[%s3 + $0x178] sm:$0xff]
    %v3013 = vld [vmem:[%s3 + $0x180] sm:$0xff]
    %v3014 = vld [vmem:[%s3 + $0x188] sm:$0xff]
    %v3015 = vld [vmem:[%s3 + $0x190] sm:$0xff]
    %v3016 = vld [vmem:[%s3 + $0x198] sm:$0xff]
    %v3017 = vld [vmem:[%s3 + $0x1a0] sm:$0xff]
    %v3018 = vld [vmem:[%s3 + $0x1a8] sm:$0xff]
    %v3019 = vld [vmem:[%s3 + $0x1b0] sm:$0xff]
    %v3020 = vld [vmem:[%s3 + $0x1b8] sm:$0xff]
    %v3021 = vld [vmem:[%s3 + $0x1c0] sm:$0xff]
    %v3022 = vld [vmem:[%s3 + $0x1c8] sm:$0xff]
    %v3023 = vld [vmem:[%s3 + $0x1d0] sm:$0xff]
    %v3024 = vld [vmem:[%s3 + $0x1d8] sm:$0xff]
    %v3025 = vld [vmem:[%s3 + $0x1e0] sm:$0xff]
    %v3026 = vld [vmem:[%s3 + $0x1e8] sm:$0xff]
    %v3027 = vld [vmem:[%s3 + $0x1f0] sm:$0xff]
    %v3028 = vld [vmem:[%s3 + $0x1f8] sm:$0xff]
    %3029 = vmatprep.subr.mxu0 0.0
    %3030 = vmatpush1.msra.mxu0 %v2980
    %3031 = vmatprep.subr.mxu0 0.0
    %3032 = vmatpush1.msra.mxu0 %v2979
    %3033 = vmatprep.subr.mxu0 0.0
    %3034 = vmatpush1.msra.mxu0 %v2978
    %3035 = vmatprep.subr.mxu0 0.0
    %3036 = vmatpush1.msra.mxu0 %v2977
    %3037 = vmatprep.subr.mxu0 0.0
    %3038 = vmatpush1.msra.mxu0 %v2976
    %3039 = vmatprep.subr.mxu0 0.0
    %3040 = vmatpush1.msra.mxu0 %v2975
    %3041 = vmatprep.subr.mxu0 0.0
    %3042 = vmatpush1.msra.mxu0 %v2974
    %3043 = vmatprep.subr.mxu0 0.0
    %3044 = vmatpush1.msra.mxu0 %v2973
    %3045 = vmatprep.subr.mxu0 0.0
    %3046 = vmatpush1.msra.mxu0 %v2972
    %3047 = vmatprep.subr.mxu0 0.0
    %3048 = vmatpush1.msra.mxu0 %v2971
    %3049 = vmatprep.subr.mxu0 0.0
    %3050 = vmatpush1.msra.mxu0 %v2970
    %3051 = vmatprep.subr.mxu0 0.0
    %3052 = vmatpush1.msra.mxu0 %v2969
    %3053 = vmatprep.subr.mxu0 0.0
    %3054 = vmatpush1.msra.mxu0 %v2968
    %3055 = vmatprep.subr.mxu0 0.0
    %3056 = vmatpush1.msra.mxu0 %v2967
    %3057 = vmatprep.subr.mxu0 0.0
    %3058 = vmatpush1.msra.mxu0 %v2966
    %3059 = vmatprep.subr.mxu0 0.0
    %3060 = vmatpush1.msra.mxu0 %v2965
    %3061 = vmatprep.subr.mxu0 0.0
    %3062 = vmatpush2.msra.mxu0 %v2996
    %3063 = vmatprep.subr.mxu0 0.0
    %3064 = vmatpush2.msra.mxu0 %v2995
    %3065 = vmatprep.subr.mxu0 0.0
    %3066 = vmatpush2.msra.mxu0 %v2994
    %3067 = vmatprep.subr.mxu0 0.0
    %3068 = vmatpush2.msra.mxu0 %v2993
    %3069 = vmatprep.subr.mxu0 0.0
    %3070 = vmatpush2.msra.mxu0 %v2992
    %3071 = vmatprep.subr.mxu0 0.0
    %3072 = vmatpush2.msra.mxu0 %v2991
    %3073 = vmatprep.subr.mxu0 0.0
    %3074 = vmatpush2.msra.mxu0 %v2990
    %3075 = vmatprep.subr.mxu0 0.0
    %3076 = vmatpush2.msra.mxu0 %v2989
    %3077 = vmatprep.subr.mxu0 0.0
    %3078 = vmatpush2.msra.mxu0 %v2988
    %3079 = vmatprep.subr.mxu0 0.0
    %3080 = vmatpush2.msra.mxu0 %v2987
    %3081 = vmatprep.subr.mxu0 0.0
    %3082 = vmatpush2.msra.mxu0 %v2986
    %3083 = vmatprep.subr.mxu0 0.0
    %3084 = vmatpush2.msra.mxu0 %v2985
    %3085 = vmatprep.subr.mxu0 0.0
    %3086 = vmatpush2.msra.mxu0 %v2984
    %3087 = vmatprep.subr.mxu0 0.0
    %3088 = vmatpush2.msra.mxu0 %v2983
    %3089 = vmatprep.subr.mxu0 0.0
    %3090 = vmatpush2.msra.mxu0 %v2982
    %3091 = vmatprep.subr.mxu0 0.0
    %3092 = vmatpush2.msra.mxu0 %v2981
    %3093 = vmatprep.mubr.f32.mxu0 %v2710
    %3094 = vmatmul.mubr.f32.gmra.mxu0 %v2709
    %v3095 = vpop.f32.mrf.mxu0
    %v3096 = vadd.f32 0.0, %v3095
    %v3097 = vpop.f32.mrf.mxu0
    %3098 = vmatprep.mubr.f32.mxu0 %v2714
    %3099 = vmatmul.mubr.f32.gmra.mxu0 %v2713
    %v3100 = vpop.f32.mrf.mxu0
    %v3101 = vadd.f32 0.0, %v3100
    %v3102 = vpop.f32.mrf.mxu0
    %3103 = vmatprep.mubr.f32.mxu0 %v2718
    %3104 = vmatmul.mubr.f32.gmra.mxu0 %v2717
    %v3105 = vpop.f32.mrf.mxu0
    %v3106 = vadd.f32 0.0, %v3105
    %v3107 = vpop.f32.mrf.mxu0
    %3108 = vmatprep.mubr.f32.mxu0 %v2722
    %3109 = vmatmul.mubr.f32.gmra.mxu0 %v2721
    %v3110 = vpop.f32.mrf.mxu0
    %v3111 = vadd.f32 0.0, %v3110
    %v3112 = vpop.f32.mrf.mxu0
    %3113 = vmatprep.mubr.f32.mxu0 %v2726
    %3114 = vmatmul.mubr.f32.gmra.mxu0 %v2725
    %v3115 = vpop.f32.mrf.mxu0
    %v3116 = vadd.f32 0.0, %v3115
    %v3117 = vpop.f32.mrf.mxu0
    %3118 = vmatprep.mubr.f32.mxu0 %v2730
    %3119 = vmatmul.mubr.f32.gmra.mxu0 %v2729
    %v3120 = vpop.f32.mrf.mxu0
    %v3121 = vadd.f32 0.0, %v3120
    %v3122 = vpop.f32.mrf.mxu0
    %3123 = vmatprep.mubr.f32.mxu0 %v2734
    %3124 = vmatmul.mubr.f32.gmra.mxu0 %v2733
    %v3125 = vpop.f32.mrf.mxu0
    %v3126 = vadd.f32 0.0, %v3125
    %v3127 = vpop.f32.mrf.mxu0
    %3128 = vmatprep.mubr.f32.mxu0 %v2738
    %3129 = vmatmul.mubr.f32.gmra.mxu0 %v2737
    %v3130 = vpop.f32.mrf.mxu0
    %v3131 = vadd.f32 0.0, %v3130
    %v3132 = vpop.f32.mrf.mxu0
    %3133 = vmatprep.mubr.f32.mxu0 %v2742
    %3134 = vmatmul.mubr.f32.gmra.mxu0 %v2741
    %v3135 = vpop.f32.mrf.mxu0
    %v3136 = vadd.f32 0.0, %v3135
    %v3137 = vpop.f32.mrf.mxu0
    %3138 = vmatprep.mubr.f32.mxu0 %v2746
    %3139 = vmatmul.mubr.f32.gmra.mxu0 %v2745
    %v3140 = vpop.f32.mrf.mxu0
    %v3141 = vadd.f32 0.0, %v3140
    %v3142 = vpop.f32.mrf.mxu0
    %3143 = vmatprep.mubr.f32.mxu0 %v2750
    %3144 = vmatmul.mubr.f32.gmra.mxu0 %v2749
    %v3145 = vpop.f32.mrf.mxu0
    %v3146 = vadd.f32 0.0, %v3145
    %v3147 = vpop.f32.mrf.mxu0
    %3148 = vmatprep.mubr.f32.mxu0 %v2754
    %3149 = vmatmul.mubr.f32.gmra.mxu0 %v2753
    %v3150 = vpop.f32.mrf.mxu0
    %v3151 = vadd.f32 0.0, %v3150
    %v3152 = vpop.f32.mrf.mxu0
    %3153 = vmatprep.mubr.f32.mxu0 %v2758
    %3154 = vmatmul.mubr.f32.gmra.mxu0 %v2757
    %v3155 = vpop.f32.mrf.mxu0
    %v3156 = vadd.f32 0.0, %v3155
    %v3157 = vpop.f32.mrf.mxu0
    %3158 = vmatprep.mubr.f32.mxu0 %v2762
    %3159 = vmatmul.mubr.f32.gmra.mxu0 %v2761
    %v3160 = vpop.f32.mrf.mxu0
    %v3161 = vadd.f32 0.0, %v3160
    %v3162 = vpop.f32.mrf.mxu0
    %3163 = vmatprep.mubr.f32.mxu0 %v2766
    %3164 = vmatmul.mubr.f32.gmra.mxu0 %v2765
    %v3165 = vpop.f32.mrf.mxu0
    %v3166 = vadd.f32 0.0, %v3165
    %v3167 = vpop.f32.mrf.mxu0
    %3168 = vmatprep.mubr.f32.mxu0 %v2770
    %3169 = vmatmul.mubr.f32.gmra.mxu0 %v2769
    %v3170 = vpop.f32.mrf.mxu0
    %v3171 = vadd.f32 0.0, %v3170
    %v3172 = vpop.f32.mrf.mxu0
    %3173 = vmatprep.mubr.f32.mxu0 %v2774
    %3174 = vmatmul.mubr.f32.gmra.mxu0 %v2773
    %v3175 = vpop.f32.mrf.mxu0
    %v3176 = vadd.f32 0.0, %v3175
    %v3177 = vpop.f32.mrf.mxu0
    %3178 = vmatprep.mubr.f32.mxu0 %v2778
    %3179 = vmatmul.mubr.f32.gmra.mxu0 %v2777
    %v3180 = vpop.f32.mrf.mxu0
    %v3181 = vadd.f32 0.0, %v3180
    %v3182 = vpop.f32.mrf.mxu0
    %3183 = vmatprep.mubr.f32.mxu0 %v2782
    %3184 = vmatmul.mubr.f32.gmra.mxu0 %v2781
    %v3185 = vpop.f32.mrf.mxu0
    %v3186 = vadd.f32 0.0, %v3185
    %v3187 = vpop.f32.mrf.mxu0
    %3188 = vmatprep.mubr.f32.mxu0 %v2786
    %3189 = vmatmul.mubr.f32.gmra.mxu0 %v2785
    %v3190 = vpop.f32.mrf.mxu0
    %v3191 = vadd.f32 0.0, %v3190
    %v3192 = vpop.f32.mrf.mxu0
    %3193 = vmatprep.mubr.f32.mxu0 %v2790
    %3194 = vmatmul.mubr.f32.gmra.mxu0 %v2789
    %v3195 = vpop.f32.mrf.mxu0
    %v3196 = vadd.f32 0.0, %v3195
    %v3197 = vpop.f32.mrf.mxu0
    %3198 = vmatprep.mubr.f32.mxu0 %v2794
    %3199 = vmatmul.mubr.f32.gmra.mxu0 %v2793
    %v3200 = vpop.f32.mrf.mxu0
    %v3201 = vadd.f32 0.0, %v3200
    %v3202 = vpop.f32.mrf.mxu0
    %3203 = vmatprep.mubr.f32.mxu0 %v2798
    %3204 = vmatmul.mubr.f32.gmra.mxu0 %v2797
    %v3205 = vpop.f32.mrf.mxu0
    %v3206 = vadd.f32 0.0, %v3205
    %v3207 = vpop.f32.mrf.mxu0
    %3208 = vmatprep.mubr.f32.mxu0 %v2802
    %3209 = vmatmul.mubr.f32.gmra.mxu0 %v2801
    %v3210 = vpop.f32.mrf.mxu0
    %v3211 = vadd.f32 0.0, %v3210
    %v3212 = vpop.f32.mrf.mxu0
    %3213 = vmatprep.mubr.f32.mxu0 %v2806
    %3214 = vmatmul.mubr.f32.gmra.mxu0 %v2805
    %v3215 = vpop.f32.mrf.mxu0
    %v3216 = vadd.f32 0.0, %v3215
    %v3217 = vpop.f32.mrf.mxu0
    %3218 = vmatprep.mubr.f32.mxu0 %v2810
    %3219 = vmatmul.mubr.f32.gmra.mxu0 %v2809
    %v3220 = vpop.f32.mrf.mxu0
    %v3221 = vadd.f32 0.0, %v3220
    %v3222 = vpop.f32.mrf.mxu0
    %3223 = vmatprep.mubr.f32.mxu0 %v2814
    %3224 = vmatmul.mubr.f32.gmra.mxu0 %v2813
    %v3225 = vpop.f32.mrf.mxu0
    %v3226 = vadd.f32 0.0, %v3225
    %v3227 = vpop.f32.mrf.mxu0
    %3228 = vmatprep.mubr.f32.mxu0 %v2818
    %3229 = vmatmul.mubr.f32.gmra.mxu0 %v2817
    %v3230 = vpop.f32.mrf.mxu0
    %v3231 = vadd.f32 0.0, %v3230
    %v3232 = vpop.f32.mrf.mxu0
    %3233 = vmatprep.mubr.f32.mxu0 %v2822
    %3234 = vmatmul.mubr.f32.gmra.mxu0 %v2821
    %v3235 = vpop.f32.mrf.mxu0
    %v3236 = vadd.f32 0.0, %v3235
    %v3237 = vpop.f32.mrf.mxu0
    %3238 = vmatprep.mubr.f32.mxu0 %v2826
    %3239 = vmatmul.mubr.f32.gmra.mxu0 %v2825
    %v3240 = vpop.f32.mrf.mxu0
    %v3241 = vadd.f32 0.0, %v3240
    %v3242 = vpop.f32.mrf.mxu0
    %3243 = vmatprep.mubr.f32.mxu0 %v2830
    %3244 = vmatmul.mubr.f32.gmra.mxu0 %v2829
    %v3245 = vpop.f32.mrf.mxu0
    %v3246 = vadd.f32 0.0, %v3245
    %v3247 = vpop.f32.mrf.mxu0
    %3248 = vmatprep.mubr.f32.mxu0 %v2834
    %3249 = vmatmul.mubr.f32.gmra.mxu0 %v2833
    %v3250 = vpop.f32.mrf.mxu0
    %v3251 = vadd.f32 0.0, %v3250
    %v3252 = vpop.f32.mrf.mxu0
    %3253 = vmatprep.mubr.f32.mxu0 %v2838
    %3254 = vmatmul.mubr.f32.gmra.mxu0 %v2837
    %v3255 = vpop.f32.mrf.mxu0
    %v3256 = vadd.f32 0.0, %v3255
    %v3257 = vpop.f32.mrf.mxu0
    %3258 = vmatprep.mubr.f32.mxu0 %v2842
    %3259 = vmatmul.mubr.f32.gmra.mxu0 %v2841
    %v3260 = vpop.f32.mrf.mxu0
    %v3261 = vadd.f32 0.0, %v3260
    %v3262 = vpop.f32.mrf.mxu0
    %3263 = vmatprep.mubr.f32.mxu0 %v2846
    %3264 = vmatmul.mubr.f32.gmra.mxu0 %v2845
    %v3265 = vpop.f32.mrf.mxu0
    %v3266 = vadd.f32 0.0, %v3265
    %v3267 = vpop.f32.mrf.mxu0
    %3268 = vmatprep.mubr.f32.mxu0 %v2850
    %3269 = vmatmul.mubr.f32.gmra.mxu0 %v2849
    %v3270 = vpop.f32.mrf.mxu0
    %v3271 = vadd.f32 0.0, %v3270
    %v3272 = vpop.f32.mrf.mxu0
    %3273 = vmatprep.mubr.f32.mxu0 %v2854
    %3274 = vmatmul.mubr.f32.gmra.mxu0 %v2853
    %v3275 = vpop.f32.mrf.mxu0
    %v3276 = vadd.f32 0.0, %v3275
    %v3277 = vpop.f32.mrf.mxu0
    %3278 = vmatprep.mubr.f32.mxu0 %v2858
    %3279 = vmatmul.mubr.f32.gmra.mxu0 %v2857
    %v3280 = vpop.f32.mrf.mxu0
    %v3281 = vadd.f32 0.0, %v3280
    %v3282 = vpop.f32.mrf.mxu0
    %3283 = vmatprep.mubr.f32.mxu0 %v2862
    %3284 = vmatmul.mubr.f32.gmra.mxu0 %v2861
    %v3285 = vpop.f32.mrf.mxu0
    %v3286 = vadd.f32 0.0, %v3285
    %v3287 = vpop.f32.mrf.mxu0
    %3288 = vmatprep.mubr.f32.mxu0 %v2866
    %3289 = vmatmul.mubr.f32.gmra.mxu0 %v2865
    %v3290 = vpop.f32.mrf.mxu0
    %v3291 = vadd.f32 0.0, %v3290
    %v3292 = vpop.f32.mrf.mxu0
    %3293 = vmatprep.mubr.f32.mxu0 %v2870
    %3294 = vmatmul.mubr.f32.gmra.mxu0 %v2869
    %v3295 = vpop.f32.mrf.mxu0
    %v3296 = vadd.f32 0.0, %v3295
    %v3297 = vpop.f32.mrf.mxu0
    %3298 = vmatprep.mubr.f32.mxu0 %v2874
    %3299 = vmatmul.mubr.f32.gmra.mxu0 %v2873
    %v3300 = vpop.f32.mrf.mxu0
    %v3301 = vadd.f32 0.0, %v3300
    %v3302 = vpop.f32.mrf.mxu0
    %3303 = vmatprep.mubr.f32.mxu0 %v2878
    %3304 = vmatmul.mubr.f32.gmra.mxu0 %v2877
    %v3305 = vpop.f32.mrf.mxu0
    %v3306 = vadd.f32 0.0, %v3305
    %v3307 = vpop.f32.mrf.mxu0
    %3308 = vmatprep.mubr.f32.mxu0 %v2882
    %3309 = vmatmul.mubr.f32.gmra.mxu0 %v2881
    %v3310 = vpop.f32.mrf.mxu0
    %v3311 = vadd.f32 0.0, %v3310
    %v3312 = vpop.f32.mrf.mxu0
    %3313 = vmatprep.mubr.f32.mxu0 %v2886
    %3314 = vmatmul.mubr.f32.gmra.mxu0 %v2885
    %v3315 = vpop.f32.mrf.mxu0
    %v3316 = vadd.f32 0.0, %v3315
    %v3317 = vpop.f32.mrf.mxu0
    %3318 = vmatprep.mubr.f32.mxu0 %v2890
    %3319 = vmatmul.mubr.f32.gmra.mxu0 %v2889
    %v3320 = vpop.f32.mrf.mxu0
    %v3321 = vadd.f32 0.0, %v3320
    %v3322 = vpop.f32.mrf.mxu0
    %3323 = vmatprep.mubr.f32.mxu0 %v2894
    %3324 = vmatmul.mubr.f32.gmra.mxu0 %v2893
    %v3325 = vpop.f32.mrf.mxu0
    %v3326 = vadd.f32 0.0, %v3325
    %v3327 = vpop.f32.mrf.mxu0
    %3328 = vmatprep.mubr.f32.mxu0 %v2898
    %3329 = vmatmul.mubr.f32.gmra.mxu0 %v2897
    %v3330 = vpop.f32.mrf.mxu0
    %v3331 = vadd.f32 0.0, %v3330
    %v3332 = vpop.f32.mrf.mxu0
    %3333 = vmatprep.mubr.f32.mxu0 %v2902
    %3334 = vmatmul.mubr.f32.gmra.mxu0 %v2901
    %v3335 = vpop.f32.mrf.mxu0
    %v3336 = vadd.f32 0.0, %v3335
    %v3337 = vpop.f32.mrf.mxu0
    %3338 = vmatprep.mubr.f32.mxu0 %v2906
    %3339 = vmatmul.mubr.f32.gmra.mxu0 %v2905
    %v3340 = vpop.f32.mrf.mxu0
    %v3341 = vadd.f32 0.0, %v3340
    %v3342 = vpop.f32.mrf.mxu0
    %3343 = vmatprep.mubr.f32.mxu0 %v2910
    %3344 = vmatmul.mubr.f32.gmra.mxu0 %v2909
    %v3345 = vpop.f32.mrf.mxu0
    %v3346 = vadd.f32 0.0, %v3345
    %v3347 = vpop.f32.mrf.mxu0
    %3348 = vmatprep.mubr.f32.mxu0 %v2914
    %3349 = vmatmul.mubr.f32.gmra.mxu0 %v2913
    %v3350 = vpop.f32.mrf.mxu0
    %v3351 = vadd.f32 0.0, %v3350
    %v3352 = vpop.f32.mrf.mxu0
    %3353 = vmatprep.mubr.f32.mxu0 %v2918
    %3354 = vmatmul.mubr.f32.gmra.mxu0 %v2917
    %v3355 = vpop.f32.mrf.mxu0
    %v3356 = vadd.f32 0.0, %v3355
    %v3357 = vpop.f32.mrf.mxu0
    %3358 = vmatprep.mubr.f32.mxu0 %v2922
    %3359 = vmatmul.mubr.f32.gmra.mxu0 %v2921
    %v3360 = vpop.f32.mrf.mxu0
    %v3361 = vadd.f32 0.0, %v3360
    %v3362 = vpop.f32.mrf.mxu0
    %3363 = vmatprep.mubr.f32.mxu0 %v2926
    %3364 = vmatmul.mubr.f32.gmra.mxu0 %v2925
    %v3365 = vpop.f32.mrf.mxu0
    %v3366 = vadd.f32 0.0, %v3365
    %v3367 = vpop.f32.mrf.mxu0
    %3368 = vmatprep.mubr.f32.mxu0 %v2930
    %3369 = vmatmul.mubr.f32.gmra.mxu0 %v2929
    %v3370 = vpop.f32.mrf.mxu0
    %v3371 = vadd.f32 0.0, %v3370
    %v3372 = vpop.f32.mrf.mxu0
    %3373 = vmatprep.mubr.f32.mxu0 %v2934
    %3374 = vmatmul.mubr.f32.gmra.mxu0 %v2933
    %v3375 = vpop.f32.mrf.mxu0
    %v3376 = vadd.f32 0.0, %v3375
    %v3377 = vpop.f32.mrf.mxu0
    %3378 = vmatprep.mubr.f32.mxu0 %v2938
    %3379 = vmatmul.mubr.f32.gmra.mxu0 %v2937
    %v3380 = vpop.f32.mrf.mxu0
    %v3381 = vadd.f32 0.0, %v3380
    %v3382 = vpop.f32.mrf.mxu0
    %3383 = vmatprep.mubr.f32.mxu0 %v2942
    %3384 = vmatmul.mubr.f32.gmra.mxu0 %v2941
    %v3385 = vpop.f32.mrf.mxu0
    %v3386 = vadd.f32 0.0, %v3385
    %v3387 = vpop.f32.mrf.mxu0
    %3388 = vmatprep.mubr.f32.mxu0 %v2946
    %3389 = vmatmul.mubr.f32.gmra.mxu0 %v2945
    %v3390 = vpop.f32.mrf.mxu0
    %v3391 = vadd.f32 0.0, %v3390
    %v3392 = vpop.f32.mrf.mxu0
    %3393 = vmatprep.mubr.f32.mxu0 %v2950
    %3394 = vmatmul.mubr.f32.gmra.mxu0 %v2949
    %v3395 = vpop.f32.mrf.mxu0
    %v3396 = vadd.f32 0.0, %v3395
    %v3397 = vpop.f32.mrf.mxu0
    %3398 = vmatprep.mubr.f32.mxu0 %v2954
    %3399 = vmatmul.mubr.f32.gmra.mxu0 %v2953
    %v3400 = vpop.f32.mrf.mxu0
    %v3401 = vadd.f32 0.0, %v3400
    %v3402 = vpop.f32.mrf.mxu0
    %3403 = vmatprep.mubr.f32.mxu0 %v2958
    %3404 = vmatmul.mubr.f32.gmra.mxu0 %v2957
    %v3405 = vpop.f32.mrf.mxu0
    %v3406 = vadd.f32 0.0, %v3405
    %v3407 = vpop.f32.mrf.mxu0
    %3408 = vmatprep.mubr.f32.mxu0 %v2962
    %3409 = vmatmul.mubr.f32.gmra.mxu0 %v2961
    %v3410 = vpop.f32.mrf.mxu0
    %v3411 = vadd.f32 0.0, %v3410
    %v3412 = vpop.f32.mrf.mxu0
    %3413 = vdwg.mxu0
    %3414 = vmatprep.subr.mxu0 0.0
    %3415 = vmatpush1.msra.mxu0 %v3012
    %3416 = vmatprep.subr.mxu0 0.0
    %3417 = vmatpush1.msra.mxu0 %v3011
    %3418 = vmatprep.subr.mxu0 0.0
    %3419 = vmatpush1.msra.mxu0 %v3010
    %3420 = vmatprep.subr.mxu0 0.0
    %3421 = vmatpush1.msra.mxu0 %v3009
    %3422 = vmatprep.subr.mxu0 0.0
    %3423 = vmatpush1.msra.mxu0 %v3008
    %3424 = vmatprep.subr.mxu0 0.0
    %3425 = vmatpush1.msra.mxu0 %v3007
    %3426 = vmatprep.subr.mxu0 0.0
    %3427 = vmatpush1.msra.mxu0 %v3006
    %3428 = vmatprep.subr.mxu0 0.0
    %3429 = vmatpush1.msra.mxu0 %v3005
    %3430 = vmatprep.subr.mxu0 0.0
    %3431 = vmatpush1.msra.mxu0 %v3004
    %3432 = vmatprep.subr.mxu0 0.0
    %3433 = vmatpush1.msra.mxu0 %v3003
    %3434 = vmatprep.subr.mxu0 0.0
    %3435 = vmatpush1.msra.mxu0 %v3002
    %3436 = vmatprep.subr.mxu0 0.0
    %3437 = vmatpush1.msra.mxu0 %v3001
    %3438 = vmatprep.subr.mxu0 0.0
    %3439 = vmatpush1.msra.mxu0 %v3000
    %3440 = vmatprep.subr.mxu0 0.0
    %3441 = vmatpush1.msra.mxu0 %v2999
    %3442 = vmatprep.subr.mxu0 0.0
    %3443 = vmatpush1.msra.mxu0 %v2998
    %3444 = vmatprep.subr.mxu0 0.0
    %3445 = vmatpush1.msra.mxu0 %v2997
    %3446 = vmatprep.subr.mxu0 0.0
    %3447 = vmatpush2.msra.mxu0 %v3028
    %3448 = vmatprep.subr.mxu0 0.0
    %3449 = vmatpush2.msra.mxu0 %v3027
    %3450 = vmatprep.subr.mxu0 0.0
    %3451 = vmatpush2.msra.mxu0 %v3026
    %3452 = vmatprep.subr.mxu0 0.0
    %3453 = vmatpush2.msra.mxu0 %v3025
    %3454 = vmatprep.subr.mxu0 0.0
    %3455 = vmatpush2.msra.mxu0 %v3024
    %3456 = vmatprep.subr.mxu0 0.0
    %3457 = vmatpush2.msra.mxu0 %v3023
    %3458 = vmatprep.subr.mxu0 0.0
    %3459 = vmatpush2.msra.mxu0 %v3022
    %3460 = vmatprep.subr.mxu0 0.0
    %3461 = vmatpush2.msra.mxu0 %v3021
    %3462 = vmatprep.subr.mxu0 0.0
    %3463 = vmatpush2.msra.mxu0 %v3020
    %3464 = vmatprep.subr.mxu0 0.0
    %3465 = vmatpush2.msra.mxu0 %v3019
    %3466 = vmatprep.subr.mxu0 0.0
    %3467 = vmatpush2.msra.mxu0 %v3018
    %3468 = vmatprep.subr.mxu0 0.0
    %3469 = vmatpush2.msra.mxu0 %v3017
    %3470 = vmatprep.subr.mxu0 0.0
    %3471 = vmatpush2.msra.mxu0 %v3016
    %3472 = vmatprep.subr.mxu0 0.0
    %3473 = vmatpush2.msra.mxu0 %v3015
    %3474 = vmatprep.subr.mxu0 0.0
    %3475 = vmatpush2.msra.mxu0 %v3014
    %3476 = vmatprep.subr.mxu0 0.0
    %3477 = vmatpush2.msra.mxu0 %v3013
    %3478 = vmatprep.mubr.f32.mxu0 %v2712
    %3479 = vmatmul.mubr.f32.gmra.mxu0 %v2711
    %v3480 = vpop.f32.mrf.mxu0
    %v3481 = vadd.f32 %v3096, %v3480
    %v3482 = vpop.f32.mrf.mxu0
    %3483 = vmatprep.mubr.f32.mxu0 %v2716
    %3484 = vmatmul.mubr.f32.gmra.mxu0 %v2715
    %v3485 = vpop.f32.mrf.mxu0
    %v3486 = vadd.f32 %v3101, %v3485
    %v3487 = vpop.f32.mrf.mxu0
    %3488 = vmatprep.mubr.f32.mxu0 %v2720
    %3489 = vmatmul.mubr.f32.gmra.mxu0 %v2719
    %v3490 = vpop.f32.mrf.mxu0
    %v3491 = vadd.f32 %v3106, %v3490
    %v3492 = vpop.f32.mrf.mxu0
    %3493 = vmatprep.mubr.f32.mxu0 %v2724
    %3494 = vmatmul.mubr.f32.gmra.mxu0 %v2723
    %v3495 = vpop.f32.mrf.mxu0
    %v3496 = vadd.f32 %v3111, %v3495
    %v3497 = vpop.f32.mrf.mxu0
    %3498 = vmatprep.mubr.f32.mxu0 %v2728
    %3499 = vmatmul.mubr.f32.gmra.mxu0 %v2727
    %v3500 = vpop.f32.mrf.mxu0
    %v3501 = vadd.f32 %v3116, %v3500
    %v3502 = vpop.f32.mrf.mxu0
    %3503 = vmatprep.mubr.f32.mxu0 %v2732
    %3504 = vmatmul.mubr.f32.gmra.mxu0 %v2731
    %v3505 = vpop.f32.mrf.mxu0
    %v3506 = vadd.f32 %v3121, %v3505
    %v3507 = vpop.f32.mrf.mxu0
    %3508 = vmatprep.mubr.f32.mxu0 %v2736
    %3509 = vmatmul.mubr.f32.gmra.mxu0 %v2735
    %v3510 = vpop.f32.mrf.mxu0
    %v3511 = vadd.f32 %v3126, %v3510
    %v3512 = vpop.f32.mrf.mxu0
    %3513 = vmatprep.mubr.f32.mxu0 %v2740
    %3514 = vmatmul.mubr.f32.gmra.mxu0 %v2739
    %v3515 = vpop.f32.mrf.mxu0
    %v3516 = vadd.f32 %v3131, %v3515
    %v3517 = vpop.f32.mrf.mxu0
    %3518 = vmatprep.mubr.f32.mxu0 %v2744
    %3519 = vmatmul.mubr.f32.gmra.mxu0 %v2743
    %v3520 = vpop.f32.mrf.mxu0
    %v3521 = vadd.f32 %v3136, %v3520
    %v3522 = vpop.f32.mrf.mxu0
    %3523 = vmatprep.mubr.f32.mxu0 %v2748
    %3524 = vmatmul.mubr.f32.gmra.mxu0 %v2747
    %v3525 = vpop.f32.mrf.mxu0
    %v3526 = vadd.f32 %v3141, %v3525
    %v3527 = vpop.f32.mrf.mxu0
    %3528 = vmatprep.mubr.f32.mxu0 %v2752
    %3529 = vmatmul.mubr.f32.gmra.mxu0 %v2751
    %v3530 = vpop.f32.mrf.mxu0
    %v3531 = vadd.f32 %v3146, %v3530
    %v3532 = vpop.f32.mrf.mxu0
    %3533 = vmatprep.mubr.f32.mxu0 %v2756
    %3534 = vmatmul.mubr.f32.gmra.mxu0 %v2755
    %v3535 = vpop.f32.mrf.mxu0
    %v3536 = vadd.f32 %v3151, %v3535
    %v3537 = vpop.f32.mrf.mxu0
    %3538 = vmatprep.mubr.f32.mxu0 %v2760
    %3539 = vmatmul.mubr.f32.gmra.mxu0 %v2759
    %v3540 = vpop.f32.mrf.mxu0
    %v3541 = vadd.f32 %v3156, %v3540
    %v3542 = vpop.f32.mrf.mxu0
    %3543 = vmatprep.mubr.f32.mxu0 %v2764
    %3544 = vmatmul.mubr.f32.gmra.mxu0 %v2763
    %v3545 = vpop.f32.mrf.mxu0
    %v3546 = vadd.f32 %v3161, %v3545
    %v3547 = vpop.f32.mrf.mxu0
    %3548 = vmatprep.mubr.f32.mxu0 %v2768
    %3549 = vmatmul.mubr.f32.gmra.mxu0 %v2767
    %v3550 = vpop.f32.mrf.mxu0
    %v3551 = vadd.f32 %v3166, %v3550
    %v3552 = vpop.f32.mrf.mxu0
    %3553 = vmatprep.mubr.f32.mxu0 %v2772
    %3554 = vmatmul.mubr.f32.gmra.mxu0 %v2771
    %v3555 = vpop.f32.mrf.mxu0
    %v3556 = vadd.f32 %v3171, %v3555
    %v3557 = vpop.f32.mrf.mxu0
    %3558 = vmatprep.mubr.f32.mxu0 %v2776
    %3559 = vmatmul.mubr.f32.gmra.mxu0 %v2775
    %v3560 = vpop.f32.mrf.mxu0
    %v3561 = vadd.f32 %v3176, %v3560
    %v3562 = vpop.f32.mrf.mxu0
    %3563 = vmatprep.mubr.f32.mxu0 %v2780
    %3564 = vmatmul.mubr.f32.gmra.mxu0 %v2779
    %v3565 = vpop.f32.mrf.mxu0
    %v3566 = vadd.f32 %v3181, %v3565
    %v3567 = vpop.f32.mrf.mxu0
    %3568 = vmatprep.mubr.f32.mxu0 %v2784
    %3569 = vmatmul.mubr.f32.gmra.mxu0 %v2783
    %v3570 = vpop.f32.mrf.mxu0
    %v3571 = vadd.f32 %v3186, %v3570
    %v3572 = vpop.f32.mrf.mxu0
    %3573 = vmatprep.mubr.f32.mxu0 %v2788
    %3574 = vmatmul.mubr.f32.gmra.mxu0 %v2787
    %v3575 = vpop.f32.mrf.mxu0
    %v3576 = vadd.f32 %v3191, %v3575
    %v3577 = vpop.f32.mrf.mxu0
    %3578 = vmatprep.mubr.f32.mxu0 %v2792
    %3579 = vmatmul.mubr.f32.gmra.mxu0 %v2791
    %v3580 = vpop.f32.mrf.mxu0
    %v3581 = vadd.f32 %v3196, %v3580
    %v3582 = vpop.f32.mrf.mxu0
    %3583 = vmatprep.mubr.f32.mxu0 %v2796
    %3584 = vmatmul.mubr.f32.gmra.mxu0 %v2795
    %v3585 = vpop.f32.mrf.mxu0
    %v3586 = vadd.f32 %v3201, %v3585
    %v3587 = vpop.f32.mrf.mxu0
    %3588 = vmatprep.mubr.f32.mxu0 %v2800
    %3589 = vmatmul.mubr.f32.gmra.mxu0 %v2799
    %v3590 = vpop.f32.mrf.mxu0
    %v3591 = vadd.f32 %v3206, %v3590
    %v3592 = vpop.f32.mrf.mxu0
    %3593 = vmatprep.mubr.f32.mxu0 %v2804
    %3594 = vmatmul.mubr.f32.gmra.mxu0 %v2803
    %v3595 = vpop.f32.mrf.mxu0
    %v3596 = vadd.f32 %v3211, %v3595
    %v3597 = vpop.f32.mrf.mxu0
    %3598 = vmatprep.mubr.f32.mxu0 %v2808
    %3599 = vmatmul.mubr.f32.gmra.mxu0 %v2807
    %v3600 = vpop.f32.mrf.mxu0
    %v3601 = vadd.f32 %v3216, %v3600
    %v3602 = vpop.f32.mrf.mxu0
    %3603 = vmatprep.mubr.f32.mxu0 %v2812
    %3604 = vmatmul.mubr.f32.gmra.mxu0 %v2811
    %v3605 = vpop.f32.mrf.mxu0
    %v3606 = vadd.f32 %v3221, %v3605
    %v3607 = vpop.f32.mrf.mxu0
    %3608 = vmatprep.mubr.f32.mxu0 %v2816
    %3609 = vmatmul.mubr.f32.gmra.mxu0 %v2815
    %v3610 = vpop.f32.mrf.mxu0
    %v3611 = vadd.f32 %v3226, %v3610
    %v3612 = vpop.f32.mrf.mxu0
    %3613 = vmatprep.mubr.f32.mxu0 %v2820
    %3614 = vmatmul.mubr.f32.gmra.mxu0 %v2819
    %v3615 = vpop.f32.mrf.mxu0
    %v3616 = vadd.f32 %v3231, %v3615
    %v3617 = vpop.f32.mrf.mxu0
    %3618 = vmatprep.mubr.f32.mxu0 %v2824
    %3619 = vmatmul.mubr.f32.gmra.mxu0 %v2823
    %v3620 = vpop.f32.mrf.mxu0
    %v3621 = vadd.f32 %v3236, %v3620
    %v3622 = vpop.f32.mrf.mxu0
    %3623 = vmatprep.mubr.f32.mxu0 %v2828
    %3624 = vmatmul.mubr.f32.gmra.mxu0 %v2827
    %v3625 = vpop.f32.mrf.mxu0
    %v3626 = vadd.f32 %v3241, %v3625
    %v3627 = vpop.f32.mrf.mxu0
    %3628 = vmatprep.mubr.f32.mxu0 %v2832
    %3629 = vmatmul.mubr.f32.gmra.mxu0 %v2831
    %v3630 = vpop.f32.mrf.mxu0
    %v3631 = vadd.f32 %v3246, %v3630
    %v3632 = vpop.f32.mrf.mxu0
    %3633 = vmatprep.mubr.f32.mxu0 %v2836
    %3634 = vmatmul.mubr.f32.gmra.mxu0 %v2835
    %v3635 = vpop.f32.mrf.mxu0
    %v3636 = vadd.f32 %v3251, %v3635
    %v3637 = vpop.f32.mrf.mxu0
    %3638 = vmatprep.mubr.f32.mxu0 %v2840
    %3639 = vmatmul.mubr.f32.gmra.mxu0 %v2839
    %v3640 = vpop.f32.mrf.mxu0
    %v3641 = vadd.f32 %v3256, %v3640
    %v3642 = vpop.f32.mrf.mxu0
    %3643 = vmatprep.mubr.f32.mxu0 %v2844
    %3644 = vmatmul.mubr.f32.gmra.mxu0 %v2843
    %v3645 = vpop.f32.mrf.mxu0
    %v3646 = vadd.f32 %v3261, %v3645
    %v3647 = vpop.f32.mrf.mxu0
    %3648 = vmatprep.mubr.f32.mxu0 %v2848
    %3649 = vmatmul.mubr.f32.gmra.mxu0 %v2847
    %v3650 = vpop.f32.mrf.mxu0
    %v3651 = vadd.f32 %v3266, %v3650
    %v3652 = vpop.f32.mrf.mxu0
    %3653 = vmatprep.mubr.f32.mxu0 %v2852
    %3654 = vmatmul.mubr.f32.gmra.mxu0 %v2851
    %v3655 = vpop.f32.mrf.mxu0
    %v3656 = vadd.f32 %v3271, %v3655
    %v3657 = vpop.f32.mrf.mxu0
    %3658 = vmatprep.mubr.f32.mxu0 %v2856
    %3659 = vmatmul.mubr.f32.gmra.mxu0 %v2855
    %v3660 = vpop.f32.mrf.mxu0
    %v3661 = vadd.f32 %v3276, %v3660
    %v3662 = vpop.f32.mrf.mxu0
    %3663 = vmatprep.mubr.f32.mxu0 %v2860
    %3664 = vmatmul.mubr.f32.gmra.mxu0 %v2859
    %v3665 = vpop.f32.mrf.mxu0
    %v3666 = vadd.f32 %v3281, %v3665
    %v3667 = vpop.f32.mrf.mxu0
    %3668 = vmatprep.mubr.f32.mxu0 %v2864
    %3669 = vmatmul.mubr.f32.gmra.mxu0 %v2863
    %v3670 = vpop.f32.mrf.mxu0
    %v3671 = vadd.f32 %v3286, %v3670
    %v3672 = vpop.f32.mrf.mxu0
    %3673 = vmatprep.mubr.f32.mxu0 %v2868
    %3674 = vmatmul.mubr.f32.gmra.mxu0 %v2867
    %v3675 = vpop.f32.mrf.mxu0
    %v3676 = vadd.f32 %v3291, %v3675
    %v3677 = vpop.f32.mrf.mxu0
    %3678 = vmatprep.mubr.f32.mxu0 %v2872
    %3679 = vmatmul.mubr.f32.gmra.mxu0 %v2871
    %v3680 = vpop.f32.mrf.mxu0
    %v3681 = vadd.f32 %v3296, %v3680
    %v3682 = vpop.f32.mrf.mxu0
    %3683 = vmatprep.mubr.f32.mxu0 %v2876
    %3684 = vmatmul.mubr.f32.gmra.mxu0 %v2875
    %v3685 = vpop.f32.mrf.mxu0
    %v3686 = vadd.f32 %v3301, %v3685
    %v3687 = vpop.f32.mrf.mxu0
    %3688 = vmatprep.mubr.f32.mxu0 %v2880
    %3689 = vmatmul.mubr.f32.gmra.mxu0 %v2879
    %v3690 = vpop.f32.mrf.mxu0
    %v3691 = vadd.f32 %v3306, %v3690
    %v3692 = vpop.f32.mrf.mxu0
    %3693 = vmatprep.mubr.f32.mxu0 %v2884
    %3694 = vmatmul.mubr.f32.gmra.mxu0 %v2883
    %v3695 = vpop.f32.mrf.mxu0
    %v3696 = vadd.f32 %v3311, %v3695
    %v3697 = vpop.f32.mrf.mxu0
    %3698 = vmatprep.mubr.f32.mxu0 %v2888
    %3699 = vmatmul.mubr.f32.gmra.mxu0 %v2887
    %v3700 = vpop.f32.mrf.mxu0
    %v3701 = vadd.f32 %v3316, %v3700
    %v3702 = vpop.f32.mrf.mxu0
    %3703 = vmatprep.mubr.f32.mxu0 %v2892
    %3704 = vmatmul.mubr.f32.gmra.mxu0 %v2891
    %v3705 = vpop.f32.mrf.mxu0
    %v3706 = vadd.f32 %v3321, %v3705
    %v3707 = vpop.f32.mrf.mxu0
    %3708 = vmatprep.mubr.f32.mxu0 %v2896
    %3709 = vmatmul.mubr.f32.gmra.mxu0 %v2895
    %v3710 = vpop.f32.mrf.mxu0
    %v3711 = vadd.f32 %v3326, %v3710
    %v3712 = vpop.f32.mrf.mxu0
    %3713 = vmatprep.mubr.f32.mxu0 %v2900
    %3714 = vmatmul.mubr.f32.gmra.mxu0 %v2899
    %v3715 = vpop.f32.mrf.mxu0
    %v3716 = vadd.f32 %v3331, %v3715
    %v3717 = vpop.f32.mrf.mxu0
    %3718 = vmatprep.mubr.f32.mxu0 %v2904
    %3719 = vmatmul.mubr.f32.gmra.mxu0 %v2903
    %v3720 = vpop.f32.mrf.mxu0
    %v3721 = vadd.f32 %v3336, %v3720
    %v3722 = vpop.f32.mrf.mxu0
    %3723 = vmatprep.mubr.f32.mxu0 %v2908
    %3724 = vmatmul.mubr.f32.gmra.mxu0 %v2907
    %v3725 = vpop.f32.mrf.mxu0
    %v3726 = vadd.f32 %v3341, %v3725
    %v3727 = vpop.f32.mrf.mxu0
    %3728 = vmatprep.mubr.f32.mxu0 %v2912
    %3729 = vmatmul.mubr.f32.gmra.mxu0 %v2911
    %v3730 = vpop.f32.mrf.mxu0
    %v3731 = vadd.f32 %v3346, %v3730
    %v3732 = vpop.f32.mrf.mxu0
    %3733 = vmatprep.mubr.f32.mxu0 %v2916
    %3734 = vmatmul.mubr.f32.gmra.mxu0 %v2915
    %v3735 = vpop.f32.mrf.mxu0
    %v3736 = vadd.f32 %v3351, %v3735
    %v3737 = vpop.f32.mrf.mxu0
    %3738 = vmatprep.mubr.f32.mxu0 %v2920
    %3739 = vmatmul.mubr.f32.gmra.mxu0 %v2919
    %v3740 = vpop.f32.mrf.mxu0
    %v3741 = vadd.f32 %v3356, %v3740
    %v3742 = vpop.f32.mrf.mxu0
    %3743 = vmatprep.mubr.f32.mxu0 %v2924
    %3744 = vmatmul.mubr.f32.gmra.mxu0 %v2923
    %v3745 = vpop.f32.mrf.mxu0
    %v3746 = vadd.f32 %v3361, %v3745
    %v3747 = vpop.f32.mrf.mxu0
    %3748 = vmatprep.mubr.f32.mxu0 %v2928
    %3749 = vmatmul.mubr.f32.gmra.mxu0 %v2927
    %v3750 = vpop.f32.mrf.mxu0
    %v3751 = vadd.f32 %v3366, %v3750
    %v3752 = vpop.f32.mrf.mxu0
    %3753 = vmatprep.mubr.f32.mxu0 %v2932
    %3754 = vmatmul.mubr.f32.gmra.mxu0 %v2931
    %v3755 = vpop.f32.mrf.mxu0
    %v3756 = vadd.f32 %v3371, %v3755
    %v3757 = vpop.f32.mrf.mxu0
    %3758 = vmatprep.mubr.f32.mxu0 %v2936
    %3759 = vmatmul.mubr.f32.gmra.mxu0 %v2935
    %v3760 = vpop.f32.mrf.mxu0
    %v3761 = vadd.f32 %v3376, %v3760
    %v3762 = vpop.f32.mrf.mxu0
    %3763 = vmatprep.mubr.f32.mxu0 %v2940
    %3764 = vmatmul.mubr.f32.gmra.mxu0 %v2939
    %v3765 = vpop.f32.mrf.mxu0
    %v3766 = vadd.f32 %v3381, %v3765
    %v3767 = vpop.f32.mrf.mxu0
    %3768 = vmatprep.mubr.f32.mxu0 %v2944
    %3769 = vmatmul.mubr.f32.gmra.mxu0 %v2943
    %v3770 = vpop.f32.mrf.mxu0
    %v3771 = vadd.f32 %v3386, %v3770
    %v3772 = vpop.f32.mrf.mxu0
    %3773 = vmatprep.mubr.f32.mxu0 %v2948
    %3774 = vmatmul.mubr.f32.gmra.mxu0 %v2947
    %v3775 = vpop.f32.mrf.mxu0
    %v3776 = vadd.f32 %v3391, %v3775
    %v3777 = vpop.f32.mrf.mxu0
    %3778 = vmatprep.mubr.f32.mxu0 %v2952
    %3779 = vmatmul.mubr.f32.gmra.mxu0 %v2951
    %v3780 = vpop.f32.mrf.mxu0
    %v3781 = vadd.f32 %v3396, %v3780
    %v3782 = vpop.f32.mrf.mxu0
    %3783 = vmatprep.mubr.f32.mxu0 %v2956
    %3784 = vmatmul.mubr.f32.gmra.mxu0 %v2955
    %v3785 = vpop.f32.mrf.mxu0
    %v3786 = vadd.f32 %v3401, %v3785
    %v3787 = vpop.f32.mrf.mxu0
    %3788 = vmatprep.mubr.f32.mxu0 %v2960
    %3789 = vmatmul.mubr.f32.gmra.mxu0 %v2959
    %v3790 = vpop.f32.mrf.mxu0
    %v3791 = vadd.f32 %v3406, %v3790
    %v3792 = vpop.f32.mrf.mxu0
    %3793 = vmatprep.mubr.f32.mxu0 %v2964
    %3794 = vmatmul.mubr.f32.gmra.mxu0 %v2963
    %v3795 = vpop.f32.mrf.mxu0
    %v3796 = vadd.f32 %v3411, %v3795
    %v3797 = vpop.f32.mrf.mxu0
    %3798 = vdwg.mxu0
    %3799 = vst.msk [vmem:[#allocation2] sm:$0xff] %vm215, %v3481
    %3800 = vst.msk [vmem:[#allocation2 + $0x8] sm:$0xff] %vm215, %v3486
    %3801 = vst.msk [vmem:[#allocation2 + $0x10] sm:$0xff] %vm215, %v3491
    %3802 = vst.msk [vmem:[#allocation2 + $0x18] sm:$0xff] %vm215, %v3496
    %3803 = vst.msk [vmem:[#allocation2 + $0x20] sm:$0xff] %vm215, %v3501
    %3804 = vst.msk [vmem:[#allocation2 + $0x28] sm:$0xff] %vm215, %v3506
    %3805 = vst.msk [vmem:[#allocation2 + $0x30] sm:$0xff] %vm215, %v3511
    %3806 = vst.msk [vmem:[#allocation2 + $0x38] sm:$0xff] %vm215, %v3516
    %3807 = vst.msk [vmem:[#allocation2 + $0x40] sm:$0xff] %vm215, %v3521
    %3808 = vst.msk [vmem:[#allocation2 + $0x48] sm:$0xff] %vm215, %v3526
    %3809 = vst.msk [vmem:[#allocation2 + $0x50] sm:$0xff] %vm215, %v3531
    %3810 = vst.msk [vmem:[#allocation2 + $0x58] sm:$0xff] %vm215, %v3536
    %3811 = vst.msk [vmem:[#allocation2 + $0x60] sm:$0xff] %vm215, %v3541
    %3812 = vst.msk [vmem:[#allocation2 + $0x68] sm:$0xff] %vm215, %v3546
    %3813 = vst.msk [vmem:[#allocation2 + $0x70] sm:$0xff] %vm215, %v3551
    %3814 = vst.msk [vmem:[#allocation2 + $0x78] sm:$0xff] %vm215, %v3556
    %3815 = vst.msk [vmem:[#allocation2 + $0x80] sm:$0xff] %vm215, %v3561
    %3816 = vst.msk [vmem:[#allocation2 + $0x88] sm:$0xff] %vm215, %v3566
    %3817 = vst.msk [vmem:[#allocation2 + $0x90] sm:$0xff] %vm215, %v3571
    %3818 = vst.msk [vmem:[#allocation2 + $0x98] sm:$0xff] %vm215, %v3576
    %3819 = vst.msk [vmem:[#allocation2 + $0xa0] sm:$0xff] %vm215, %v3581
    %3820 = vst.msk [vmem:[#allocation2 + $0xa8] sm:$0xff] %vm215, %v3586
    %3821 = vst.msk [vmem:[#allocation2 + $0xb0] sm:$0xff] %vm215, %v3591
    %3822 = vst.msk [vmem:[#allocation2 + $0xb8] sm:$0xff] %vm215, %v3596
    %3823 = vst.msk [vmem:[#allocation2 + $0xc0] sm:$0xff] %vm215, %v3601
    %3824 = vst.msk [vmem:[#allocation2 + $0xc8] sm:$0xff] %vm215, %v3606
    %3825 = vst.msk [vmem:[#allocation2 + $0xd0] sm:$0xff] %vm215, %v3611
    %3826 = vst.msk [vmem:[#allocation2 + $0xd8] sm:$0xff] %vm215, %v3616
    %3827 = vst.msk [vmem:[#allocation2 + $0xe0] sm:$0xff] %vm215, %v3621
    %3828 = vst.msk [vmem:[#allocation2 + $0xe8] sm:$0xff] %vm215, %v3626
    %3829 = vst.msk [vmem:[#allocation2 + $0xf0] sm:$0xff] %vm215, %v3631
    %3830 = vst.msk [vmem:[#allocation2 + $0xf8] sm:$0xff] %vm215, %v3636
    %3831 = vst.msk [vmem:[#allocation2 + $0x100] sm:$0xff] %vm215, %v3641
    %3832 = vst.msk [vmem:[#allocation2 + $0x108] sm:$0xff] %vm215, %v3646
    %3833 = vst.msk [vmem:[#allocation2 + $0x110] sm:$0xff] %vm215, %v3651
    %3834 = vst.msk [vmem:[#allocation2 + $0x118] sm:$0xff] %vm215, %v3656
    %3835 = vst.msk [vmem:[#allocation2 + $0x120] sm:$0xff] %vm215, %v3661
    %3836 = vst.msk [vmem:[#allocation2 + $0x128] sm:$0xff] %vm215, %v3666
    %3837 = vst.msk [vmem:[#allocation2 + $0x130] sm:$0xff] %vm215, %v3671
    %3838 = vst.msk [vmem:[#allocation2 + $0x138] sm:$0xff] %vm215, %v3676
    %3839 = vst.msk [vmem:[#allocation2 + $0x140] sm:$0xff] %vm215, %v3681
    %3840 = vst.msk [vmem:[#allocation2 + $0x148] sm:$0xff] %vm215, %v3686
    %3841 = vst.msk [vmem:[#allocation2 + $0x150] sm:$0xff] %vm215, %v3691
    %3842 = vst.msk [vmem:[#allocation2 + $0x158] sm:$0xff] %vm215, %v3696
    %3843 = vst.msk [vmem:[#allocation2 + $0x160] sm:$0xff] %vm215, %v3701
    %3844 = vst.msk [vmem:[#allocation2 + $0x168] sm:$0xff] %vm215, %v3706
    %3845 = vst.msk [vmem:[#allocation2 + $0x170] sm:$0xff] %vm215, %v3711
    %3846 = vst.msk [vmem:[#allocation2 + $0x178] sm:$0xff] %vm215, %v3716
    %3847 = vst.msk [vmem:[#allocation2 + $0x180] sm:$0xff] %vm215, %v3721
    %3848 = vst.msk [vmem:[#allocation2 + $0x188] sm:$0xff] %vm215, %v3726
    %3849 = vst.msk [vmem:[#allocation2 + $0x190] sm:$0xff] %vm215, %v3731
    %3850 = vst.msk [vmem:[#allocation2 + $0x198] sm:$0xff] %vm215, %v3736
    %3851 = vst.msk [vmem:[#allocation2 + $0x1a0] sm:$0xff] %vm215, %v3741
    %3852 = vst.msk [vmem:[#allocation2 + $0x1a8] sm:$0xff] %vm215, %v3746
    %3853 = vst.msk [vmem:[#allocation2 + $0x1b0] sm:$0xff] %vm215, %v3751
    %3854 = vst.msk [vmem:[#allocation2 + $0x1b8] sm:$0xff] %vm215, %v3756
    %3855 = vst.msk [vmem:[#allocation2 + $0x1c0] sm:$0xff] %vm215, %v3761
    %3856 = vst.msk [vmem:[#allocation2 + $0x1c8] sm:$0xff] %vm215, %v3766
    %3857 = vst.msk [vmem:[#allocation2 + $0x1d0] sm:$0xff] %vm215, %v3771
    %3858 = vst.msk [vmem:[#allocation2 + $0x1d8] sm:$0xff] %vm215, %v3776
    %3859 = vst.msk [vmem:[#allocation2 + $0x1e0] sm:$0xff] %vm215, %v3781
    %3860 = vst.msk [vmem:[#allocation2 + $0x1e8] sm:$0xff] %vm215, %v3786
    %3861 = vst.msk [vmem:[#allocation2 + $0x1f0] sm:$0xff] %vm215, %v3791
    %3862 = vst.msk [vmem:[#allocation2 + $0x1f8] sm:$0xff] %vm215, %v3796
    %v3863 = vsub.f32 %v3481, %v23
    %v3864 = vsub.f32 %v3486, %v24
    %v3865 = vsub.f32 %v3491, %v25
    %v3866 = vsub.f32 %v3496, %v26
    %v3867 = vsub.f32 %v3501, %v27
    %v3868 = vsub.f32 %v3506, %v28
    %v3869 = vsub.f32 %v3511, %v29
    %v3870 = vsub.f32 %v3516, %v30
    %v3871 = vsub.f32 %v3521, %v31
    %v3872 = vsub.f32 %v3526, %v32
    %v3873 = vsub.f32 %v3531, %v33
    %v3874 = vsub.f32 %v3536, %v34
    %v3875 = vsub.f32 %v3541, %v35
    %v3876 = vsub.f32 %v3546, %v36
    %v3877 = vsub.f32 %v3551, %v37
    %v3878 = vsub.f32 %v3556, %v38
    %v3879 = vsub.f32 %v3561, %v39
    %v3880 = vsub.f32 %v3566, %v40
    %v3881 = vsub.f32 %v3571, %v41
    %v3882 = vsub.f32 %v3576, %v42
    %v3883 = vsub.f32 %v3581, %v43
    %v3884 = vsub.f32 %v3586, %v44
    %v3885 = vsub.f32 %v3591, %v45
    %v3886 = vsub.f32 %v3596, %v46
    %v3887 = vsub.f32 %v3601, %v47
    %v3888 = vsub.f32 %v3606, %v48
    %v3889 = vsub.f32 %v3611, %v49
    %v3890 = vsub.f32 %v3616, %v50
    %v3891 = vsub.f32 %v3621, %v51
    %v3892 = vsub.f32 %v3626, %v52
    %v3893 = vsub.f32 %v3631, %v53
    %v3894 = vsub.f32 %v3636, %v54
    %v3895 = vsub.f32 %v3641, %v55
    %v3896 = vsub.f32 %v3646, %v56
    %v3897 = vsub.f32 %v3651, %v57
    %v3898 = vsub.f32 %v3656, %v58
    %v3899 = vsub.f32 %v3661, %v59
    %v3900 = vsub.f32 %v3666, %v60
    %v3901 = vsub.f32 %v3671, %v61
    %v3902 = vsub.f32 %v3676, %v62
    %v3903 = vsub.f32 %v3681, %v63
    %v3904 = vsub.f32 %v3686, %v64
    %v3905 = vsub.f32 %v3691, %v65
    %v3906 = vsub.f32 %v3696, %v66
    %v3907 = vsub.f32 %v3701, %v67
    %v3908 = vsub.f32 %v3706, %v68
    %v3909 = vsub.f32 %v3711, %v69
    %v3910 = vsub.f32 %v3716, %v70
    %v3911 = vsub.f32 %v3721, %v71
    %v3912 = vsub.f32 %v3726, %v72
    %v3913 = vsub.f32 %v3731, %v73
    %v3914 = vsub.f32 %v3736, %v74
    %v3915 = vsub.f32 %v3741, %v75
    %v3916 = vsub.f32 %v3746, %v76
    %v3917 = vsub.f32 %v3751, %v77
    %v3918 = vsub.f32 %v3756, %v78
    %v3919 = vsub.f32 %v3761, %v79
    %v3920 = vsub.f32 %v3766, %v80
    %v3921 = vsub.f32 %v3771, %v81
    %v3922 = vsub.f32 %v3776, %v82
    %v3923 = vsub.f32 %v3781, %v83
    %v3924 = vsub.f32 %v3786, %v84
    %v3925 = vsub.f32 %v3791, %v85
    %v3926 = vsub.f32 %v3796, %v86
    %v3927 = vmul.f32 %v3863, %v3863
    %v3928 = vmul.f32 %v3864, %v3864
    %v3929 = vmul.f32 %v3865, %v3865
    %v3930 = vmul.f32 %v3866, %v3866
    %v3931 = vmul.f32 %v3867, %v3867
    %v3932 = vmul.f32 %v3868, %v3868
    %v3933 = vmul.f32 %v3869, %v3869
    %v3934 = vmul.f32 %v3870, %v3870
    %v3935 = vmul.f32 %v3871, %v3871
    %v3936 = vmul.f32 %v3872, %v3872
    %v3937 = vmul.f32 %v3873, %v3873
    %v3938 = vmul.f32 %v3874, %v3874
    %v3939 = vmul.f32 %v3875, %v3875
    %v3940 = vmul.f32 %v3876, %v3876
    %v3941 = vmul.f32 %v3877, %v3877
    %v3942 = vmul.f32 %v3878, %v3878
    %v3943 = vmul.f32 %v3879, %v3879
    %v3944 = vmul.f32 %v3880, %v3880
    %v3945 = vmul.f32 %v3881, %v3881
    %v3946 = vmul.f32 %v3882, %v3882
    %v3947 = vmul.f32 %v3883, %v3883
    %v3948 = vmul.f32 %v3884, %v3884
    %v3949 = vmul.f32 %v3885, %v3885
    %v3950 = vmul.f32 %v3886, %v3886
    %v3951 = vmul.f32 %v3887, %v3887
    %v3952 = vmul.f32 %v3888, %v3888
    %v3953 = vmul.f32 %v3889, %v3889
    %v3954 = vmul.f32 %v3890, %v3890
    %v3955 = vmul.f32 %v3891, %v3891
    %v3956 = vmul.f32 %v3892, %v3892
    %v3957 = vmul.f32 %v3893, %v3893
    %v3958 = vmul.f32 %v3894, %v3894
    %v3959 = vmul.f32 %v3895, %v3895
    %v3960 = vmul.f32 %v3896, %v3896
    %v3961 = vmul.f32 %v3897, %v3897
    %v3962 = vmul.f32 %v3898, %v3898
    %v3963 = vmul.f32 %v3899, %v3899
    %v3964 = vmul.f32 %v3900, %v3900
    %v3965 = vmul.f32 %v3901, %v3901
    %v3966 = vmul.f32 %v3902, %v3902
    %v3967 = vmul.f32 %v3903, %v3903
    %v3968 = vmul.f32 %v3904, %v3904
    %v3969 = vmul.f32 %v3905, %v3905
    %v3970 = vmul.f32 %v3906, %v3906
    %v3971 = vmul.f32 %v3907, %v3907
    %v3972 = vmul.f32 %v3908, %v3908
    %v3973 = vmul.f32 %v3909, %v3909
    %v3974 = vmul.f32 %v3910, %v3910
    %v3975 = vmul.f32 %v3911, %v3911
    %v3976 = vmul.f32 %v3912, %v3912
    %v3977 = vmul.f32 %v3913, %v3913
    %v3978 = vmul.f32 %v3914, %v3914
    %v3979 = vmul.f32 %v3915, %v3915
    %v3980 = vmul.f32 %v3916, %v3916
    %v3981 = vmul.f32 %v3917, %v3917
    %v3982 = vmul.f32 %v3918, %v3918
    %v3983 = vmul.f32 %v3919, %v3919
    %v3984 = vmul.f32 %v3920, %v3920
    %v3985 = vmul.f32 %v3921, %v3921
    %v3986 = vmul.f32 %v3922, %v3922
    %v3987 = vmul.f32 %v3923, %v3923
    %v3988 = vmul.f32 %v3924, %v3924
    %v3989 = vmul.f32 %v3925, %v3925
    %v3990 = vmul.f32 %v3926, %v3926
    %v3991 = vsel %vm215, %v3927, 0.0
    %v3992 = vsel %vm215, %v3928, 0.0
    %v3993 = vadd.f32 %v3991, %v3992
    %v3994 = vsel %vm215, %v3929, 0.0
    %v3995 = vadd.f32 %v3993, %v3994
    %v3996 = vsel %vm215, %v3930, 0.0
    %v3997 = vadd.f32 %v3995, %v3996
    %v3998 = vsel %vm215, %v3931, 0.0
    %v3999 = vadd.f32 %v3997, %v3998
    %v4000 = vsel %vm215, %v3932, 0.0
    %v4001 = vadd.f32 %v3999, %v4000
    %v4002 = vsel %vm215, %v3933, 0.0
    %v4003 = vadd.f32 %v4001, %v4002
    %v4004 = vsel %vm215, %v3934, 0.0
    %v4005 = vadd.f32 %v4003, %v4004
    %v4006 = vsel %vm215, %v3935, 0.0
    %v4007 = vadd.f32 %v4005, %v4006
    %v4008 = vsel %vm215, %v3936, 0.0
    %v4009 = vadd.f32 %v4007, %v4008
    %v4010 = vsel %vm215, %v3937, 0.0
    %v4011 = vadd.f32 %v4009, %v4010
    %v4012 = vsel %vm215, %v3938, 0.0
    %v4013 = vadd.f32 %v4011, %v4012
    %v4014 = vsel %vm215, %v3939, 0.0
    %v4015 = vadd.f32 %v4013, %v4014
    %v4016 = vsel %vm215, %v3940, 0.0
    %v4017 = vadd.f32 %v4015, %v4016
    %v4018 = vsel %vm215, %v3941, 0.0
    %v4019 = vadd.f32 %v4017, %v4018
    %v4020 = vsel %vm215, %v3942, 0.0
    %v4021 = vadd.f32 %v4019, %v4020
    %v4022 = vsel %vm215, %v3943, 0.0
    %v4023 = vadd.f32 %v4021, %v4022
    %v4024 = vsel %vm215, %v3944, 0.0
    %v4025 = vadd.f32 %v4023, %v4024
    %v4026 = vsel %vm215, %v3945, 0.0
    %v4027 = vadd.f32 %v4025, %v4026
    %v4028 = vsel %vm215, %v3946, 0.0
    %v4029 = vadd.f32 %v4027, %v4028
    %v4030 = vsel %vm215, %v3947, 0.0
    %v4031 = vadd.f32 %v4029, %v4030
    %v4032 = vsel %vm215, %v3948, 0.0
    %v4033 = vadd.f32 %v4031, %v4032
    %v4034 = vsel %vm215, %v3949, 0.0
    %v4035 = vadd.f32 %v4033, %v4034
    %v4036 = vsel %vm215, %v3950, 0.0
    %v4037 = vadd.f32 %v4035, %v4036
    %v4038 = vsel %vm215, %v3951, 0.0
    %v4039 = vadd.f32 %v4037, %v4038
    %v4040 = vsel %vm215, %v3952, 0.0
    %v4041 = vadd.f32 %v4039, %v4040
    %v4042 = vsel %vm215, %v3953, 0.0
    %v4043 = vadd.f32 %v4041, %v4042
    %v4044 = vsel %vm215, %v3954, 0.0
    %v4045 = vadd.f32 %v4043, %v4044
    %v4046 = vsel %vm215, %v3955, 0.0
    %v4047 = vadd.f32 %v4045, %v4046
    %v4048 = vsel %vm215, %v3956, 0.0
    %v4049 = vadd.f32 %v4047, %v4048
    %v4050 = vsel %vm215, %v3957, 0.0
    %v4051 = vadd.f32 %v4049, %v4050
    %v4052 = vsel %vm215, %v3958, 0.0
    %v4053 = vadd.f32 %v4051, %v4052
    %v4054 = vsel %vm215, %v3959, 0.0
    %v4055 = vadd.f32 %v4053, %v4054
    %v4056 = vsel %vm215, %v3960, 0.0
    %v4057 = vadd.f32 %v4055, %v4056
    %v4058 = vsel %vm215, %v3961, 0.0
    %v4059 = vadd.f32 %v4057, %v4058
    %v4060 = vsel %vm215, %v3962, 0.0
    %v4061 = vadd.f32 %v4059, %v4060
    %v4062 = vsel %vm215, %v3963, 0.0
    %v4063 = vadd.f32 %v4061, %v4062
    %v4064 = vsel %vm215, %v3964, 0.0
    %v4065 = vadd.f32 %v4063, %v4064
    %v4066 = vsel %vm215, %v3965, 0.0
    %v4067 = vadd.f32 %v4065, %v4066
    %v4068 = vsel %vm215, %v3966, 0.0
    %v4069 = vadd.f32 %v4067, %v4068
    %v4070 = vsel %vm215, %v3967, 0.0
    %v4071 = vadd.f32 %v4069, %v4070
    %v4072 = vsel %vm215, %v3968, 0.0
    %v4073 = vadd.f32 %v4071, %v4072
    %v4074 = vsel %vm215, %v3969, 0.0
    %v4075 = vadd.f32 %v4073, %v4074
    %v4076 = vsel %vm215, %v3970, 0.0
    %v4077 = vadd.f32 %v4075, %v4076
    %v4078 = vsel %vm215, %v3971, 0.0
    %v4079 = vadd.f32 %v4077, %v4078
    %v4080 = vsel %vm215, %v3972, 0.0
    %v4081 = vadd.f32 %v4079, %v4080
    %v4082 = vsel %vm215, %v3973, 0.0
    %v4083 = vadd.f32 %v4081, %v4082
    %v4084 = vsel %vm215, %v3974, 0.0
    %v4085 = vadd.f32 %v4083, %v4084
    %v4086 = vsel %vm215, %v3975, 0.0
    %v4087 = vadd.f32 %v4085, %v4086
    %v4088 = vsel %vm215, %v3976, 0.0
    %v4089 = vadd.f32 %v4087, %v4088
    %v4090 = vsel %vm215, %v3977, 0.0
    %v4091 = vadd.f32 %v4089, %v4090
    %v4092 = vsel %vm215, %v3978, 0.0
    %v4093 = vadd.f32 %v4091, %v4092
    %v4094 = vsel %vm215, %v3979, 0.0
    %v4095 = vadd.f32 %v4093, %v4094
    %v4096 = vsel %vm215, %v3980, 0.0
    %v4097 = vadd.f32 %v4095, %v4096
    %v4098 = vsel %vm215, %v3981, 0.0
    %v4099 = vadd.f32 %v4097, %v4098
    %v4100 = vsel %vm215, %v3982, 0.0
    %v4101 = vadd.f32 %v4099, %v4100
    %v4102 = vsel %vm215, %v3983, 0.0
    %v4103 = vadd.f32 %v4101, %v4102
    %v4104 = vsel %vm215, %v3984, 0.0
    %v4105 = vadd.f32 %v4103, %v4104
    %v4106 = vsel %vm215, %v3985, 0.0
    %v4107 = vadd.f32 %v4105, %v4106
    %v4108 = vsel %vm215, %v3986, 0.0
    %v4109 = vadd.f32 %v4107, %v4108
    %v4110 = vsel %vm215, %v3987, 0.0
    %v4111 = vadd.f32 %v4109, %v4110
    %v4112 = vsel %vm215, %v3988, 0.0
    %v4113 = vadd.f32 %v4111, %v4112
    %v4114 = vsel %vm215, %v3989, 0.0
    %v4115 = vadd.f32 %v4113, %v4114
    %v4116 = vsel %vm215, %v3990, 0.0
    %v4117 = vadd.f32 %v4115, %v4116
    %4118 = vadd.xlane.f32.xlu0 %v4117
    %v4119 = vpop.xlane.xlu0 %4118
    %v4120 = vrot.slane %v4119, 4
    %v4121 = vadd.f32 %v4119, %v4120
    %v4122 = vrot.slane %v4121, 2
    %v4123 = vadd.f32 %v4121, %v4122
    %v4124 = vrot.slane %v4123, 1
    %v4125 = vadd.f32 %v4123, %v4124
    %s4126 = vtos %v4125
    %v4127 = vstv %s4126
    %vm4128 = vcmask 0
    %4129 = vst.msk [vmem:[#allocation4] sm:$0x1] %vm4128, %v4127
    %v4130 = vadd.f32 %v2709, %v2713
    %v4131 = vadd.f32 %v4130, %v2717
    %v4132 = vadd.f32 %v4131, %v2721
    %v4133 = vadd.f32 %v4132, %v2725
    %v4134 = vadd.f32 %v4133, %v2729
    %v4135 = vadd.f32 %v4134, %v2733
    %v4136 = vadd.f32 %v4135, %v2737
    %v4137 = vadd.f32 %v4136, %v2741
    %v4138 = vadd.f32 %v4137, %v2745
    %v4139 = vadd.f32 %v4138, %v2749
    %v4140 = vadd.f32 %v4139, %v2753
    %v4141 = vadd.f32 %v4140, %v2757
    %v4142 = vadd.f32 %v4141, %v2761
    %v4143 = vadd.f32 %v4142, %v2765
    %v4144 = vadd.f32 %v4143, %v2769
    %v4145 = vadd.f32 %v4144, %v2773
    %v4146 = vadd.f32 %v4145, %v2777
    %v4147 = vadd.f32 %v4146, %v2781
    %v4148 = vadd.f32 %v4147, %v2785
    %v4149 = vadd.f32 %v4148, %v2789
    %v4150 = vadd.f32 %v4149, %v2793
    %v4151 = vadd.f32 %v4150, %v2797
    %v4152 = vadd.f32 %v4151, %v2801
    %v4153 = vadd.f32 %v4152, %v2805
    %v4154 = vadd.f32 %v4153, %v2809
    %v4155 = vadd.f32 %v4154, %v2813
    %v4156 = vadd.f32 %v4155, %v2817
    %v4157 = vadd.f32 %v4156, %v2821
    %v4158 = vadd.f32 %v4157, %v2825
    %v4159 = vadd.f32 %v4158, %v2829
    %v4160 = vadd.f32 %v4159, %v2833
    %v4161 = vadd.f32 %v4160, %v2837
    %v4162 = vadd.f32 %v4161, %v2841
    %v4163 = vadd.f32 %v4162, %v2845
    %v4164 = vadd.f32 %v4163, %v2849
    %v4165 = vadd.f32 %v4164, %v2853
    %v4166 = vadd.f32 %v4165, %v2857
    %v4167 = vadd.f32 %v4166, %v2861
    %v4168 = vadd.f32 %v4167, %v2865
    %v4169 = vadd.f32 %v4168, %v2869
    %v4170 = vadd.f32 %v4169, %v2873
    %v4171 = vadd.f32 %v4170, %v2877
    %v4172 = vadd.f32 %v4171, %v2881
    %v4173 = vadd.f32 %v4172, %v2885
    %v4174 = vadd.f32 %v4173, %v2889
    %v4175 = vadd.f32 %v4174, %v2893
    %v4176 = vadd.f32 %v4175, %v2897
    %v4177 = vadd.f32 %v4176, %v2901
    %v4178 = vadd.f32 %v4177, %v2905
    %v4179 = vadd.f32 %v4178, %v2909
    %v4180 = vadd.f32 %v4179, %v2913
    %v4181 = vadd.f32 %v4180, %v2917
    %v4182 = vadd.f32 %v4181, %v2921
    %v4183 = vadd.f32 %v4182, %v2925
    %v4184 = vadd.f32 %v4183, %v2929
    %v4185 = vadd.f32 %v4184, %v2933
    %v4186 = vadd.f32 %v4185, %v2937
    %v4187 = vadd.f32 %v4186, %v2941
    %v4188 = vadd.f32 %v4187, %v2945
    %v4189 = vadd.f32 %v4188, %v2949
    %v4190 = vadd.f32 %v4189, %v2953
    %v4191 = vadd.f32 %v4190, %v2957
    %v4192 = vadd.f32 %v4191, %v2961
    %v4193 = vrot.slane %v4192, 4
    %v4194 = vadd.f32 %v4192, %v4193
    %v4195 = vrot.slane %v4194, 2
    %v4196 = vadd.f32 %v4194, %v4195
    %v4197 = vrot.slane %v4196, 1
    %v4198 = vadd.f32 %v4196, %v4197
    %v4199 = vadd.f32 %v2710, %v2714
    %v4200 = vadd.f32 %v4199, %v2718
    %v4201 = vadd.f32 %v4200, %v2722
    %v4202 = vadd.f32 %v4201, %v2726
    %v4203 = vadd.f32 %v4202, %v2730
    %v4204 = vadd.f32 %v4203, %v2734
    %v4205 = vadd.f32 %v4204, %v2738
    %v4206 = vadd.f32 %v4205, %v2742
    %v4207 = vadd.f32 %v4206, %v2746
    %v4208 = vadd.f32 %v4207, %v2750
    %v4209 = vadd.f32 %v4208, %v2754
    %v4210 = vadd.f32 %v4209, %v2758
    %v4211 = vadd.f32 %v4210, %v2762
    %v4212 = vadd.f32 %v4211, %v2766
    %v4213 = vadd.f32 %v4212, %v2770
    %v4214 = vadd.f32 %v4213, %v2774
    %v4215 = vadd.f32 %v4214, %v2778
    %v4216 = vadd.f32 %v4215, %v2782
    %v4217 = vadd.f32 %v4216, %v2786
    %v4218 = vadd.f32 %v4217, %v2790
    %v4219 = vadd.f32 %v4218, %v2794
    %v4220 = vadd.f32 %v4219, %v2798
    %v4221 = vadd.f32 %v4220, %v2802
    %v4222 = vadd.f32 %v4221, %v2806
    %v4223 = vadd.f32 %v4222, %v2810
    %v4224 = vadd.f32 %v4223, %v2814
    %v4225 = vadd.f32 %v4224, %v2818
    %v4226 = vadd.f32 %v4225, %v2822
    %v4227 = vadd.f32 %v4226, %v2826
    %v4228 = vadd.f32 %v4227, %v2830
    %v4229 = vadd.f32 %v4228, %v2834
    %v4230 = vadd.f32 %v4229, %v2838
    %v4231 = vadd.f32 %v4230, %v2842
    %v4232 = vadd.f32 %v4231, %v2846
    %v4233 = vadd.f32 %v4232, %v2850
    %v4234 = vadd.f32 %v4233, %v2854
    %v4235 = vadd.f32 %v4234, %v2858
    %v4236 = vadd.f32 %v4235, %v2862
    %v4237 = vadd.f32 %v4236, %v2866
    %v4238 = vadd.f32 %v4237, %v2870
    %v4239 = vadd.f32 %v4238, %v2874
    %v4240 = vadd.f32 %v4239, %v2878
    %v4241 = vadd.f32 %v4240, %v2882
    %v4242 = vadd.f32 %v4241, %v2886
    %v4243 = vadd.f32 %v4242, %v2890
    %v4244 = vadd.f32 %v4243, %v2894
    %v4245 = vadd.f32 %v4244, %v2898
    %v4246 = vadd.f32 %v4245, %v2902
    %v4247 = vadd.f32 %v4246, %v2906
    %v4248 = vadd.f32 %v4247, %v2910
    %v4249 = vadd.f32 %v4248, %v2914
    %v4250 = vadd.f32 %v4249, %v2918
    %v4251 = vadd.f32 %v4250, %v2922
    %v4252 = vadd.f32 %v4251, %v2926
    %v4253 = vadd.f32 %v4252, %v2930
    %v4254 = vadd.f32 %v4253, %v2934
    %v4255 = vadd.f32 %v4254, %v2938
    %v4256 = vadd.f32 %v4255, %v2942
    %v4257 = vadd.f32 %v4256, %v2946
    %v4258 = vadd.f32 %v4257, %v2950
    %v4259 = vadd.f32 %v4258, %v2954
    %v4260 = vadd.f32 %v4259, %v2958
    %v4261 = vadd.f32 %v4260, %v2962
    %v4262 = vrot.slane %v4261, 4
    %v4263 = vadd.f32 %v4261, %v4262
    %v4264 = vrot.slane %v4263, 2
    %v4265 = vadd.f32 %v4263, %v4264
    %v4266 = vrot.slane %v4265, 1
    %v4267 = vadd.f32 %v4265, %v4266
    %v4268 = vadd.f32 %v2711, %v2715
    %v4269 = vadd.f32 %v4268, %v2719
    %v4270 = vadd.f32 %v4269, %v2723
    %v4271 = vadd.f32 %v4270, %v2727
    %v4272 = vadd.f32 %v4271, %v2731
    %v4273 = vadd.f32 %v4272, %v2735
    %v4274 = vadd.f32 %v4273, %v2739
    %v4275 = vadd.f32 %v4274, %v2743
    %v4276 = vadd.f32 %v4275, %v2747
    %v4277 = vadd.f32 %v4276, %v2751
    %v4278 = vadd.f32 %v4277, %v2755
    %v4279 = vadd.f32 %v4278, %v2759
    %v4280 = vadd.f32 %v4279, %v2763
    %v4281 = vadd.f32 %v4280, %v2767
    %v4282 = vadd.f32 %v4281, %v2771
    %v4283 = vadd.f32 %v4282, %v2775
    %v4284 = vadd.f32 %v4283, %v2779
    %v4285 = vadd.f32 %v4284, %v2783
    %v4286 = vadd.f32 %v4285, %v2787
    %v4287 = vadd.f32 %v4286, %v2791
    %v4288 = vadd.f32 %v4287, %v2795
    %v4289 = vadd.f32 %v4288, %v2799
    %v4290 = vadd.f32 %v4289, %v2803
    %v4291 = vadd.f32 %v4290, %v2807
    %v4292 = vadd.f32 %v4291, %v2811
    %v4293 = vadd.f32 %v4292, %v2815
    %v4294 = vadd.f32 %v4293, %v2819
    %v4295 = vadd.f32 %v4294, %v2823
    %v4296 = vadd.f32 %v4295, %v2827
    %v4297 = vadd.f32 %v4296, %v2831
    %v4298 = vadd.f32 %v4297, %v2835
    %v4299 = vadd.f32 %v4298, %v2839
    %v4300 = vadd.f32 %v4299, %v2843
    %v4301 = vadd.f32 %v4300, %v2847
    %v4302 = vadd.f32 %v4301, %v2851
    %v4303 = vadd.f32 %v4302, %v2855
    %v4304 = vadd.f32 %v4303, %v2859
    %v4305 = vadd.f32 %v4304, %v2863
    %v4306 = vadd.f32 %v4305, %v2867
    %v4307 = vadd.f32 %v4306, %v2871
    %v4308 = vadd.f32 %v4307, %v2875
    %v4309 = vadd.f32 %v4308, %v2879
    %v4310 = vadd.f32 %v4309, %v2883
    %v4311 = vadd.f32 %v4310, %v2887
    %v4312 = vadd.f32 %v4311, %v2891
    %v4313 = vadd.f32 %v4312, %v2895
    %v4314 = vadd.f32 %v4313, %v2899
    %v4315 = vadd.f32 %v4314, %v2903
    %v4316 = vadd.f32 %v4315, %v2907
    %v4317 = vadd.f32 %v4316, %v2911
    %v4318 = vadd.f32 %v4317, %v2915
    %v4319 = vadd.f32 %v4318, %v2919
    %v4320 = vadd.f32 %v4319, %v2923
    %v4321 = vadd.f32 %v4320, %v2927
    %v4322 = vadd.f32 %v4321, %v2931
    %v4323 = vadd.f32 %v4322, %v2935
    %v4324 = vadd.f32 %v4323, %v2939
    %v4325 = vadd.f32 %v4324, %v2943
    %v4326 = vadd.f32 %v4325, %v2947
    %v4327 = vadd.f32 %v4326, %v2951
    %v4328 = vadd.f32 %v4327, %v2955
    %v4329 = vadd.f32 %v4328, %v2959
    %v4330 = vadd.f32 %v4329, %v2963
    %v4331 = vrot.slane %v4330, 4
    %v4332 = vadd.f32 %v4330, %v4331
    %v4333 = vrot.slane %v4332, 2
    %v4334 = vadd.f32 %v4332, %v4333
    %v4335 = vrot.slane %v4334, 1
    %v4336 = vadd.f32 %v4334, %v4335
    %v4337 = vadd.f32 %v2712, %v2716
    %v4338 = vadd.f32 %v4337, %v2720
    %v4339 = vadd.f32 %v4338, %v2724
    %v4340 = vadd.f32 %v4339, %v2728
    %v4341 = vadd.f32 %v4340, %v2732
    %v4342 = vadd.f32 %v4341, %v2736
    %v4343 = vadd.f32 %v4342, %v2740
    %v4344 = vadd.f32 %v4343, %v2744
    %v4345 = vadd.f32 %v4344, %v2748
    %v4346 = vadd.f32 %v4345, %v2752
    %v4347 = vadd.f32 %v4346, %v2756
    %v4348 = vadd.f32 %v4347, %v2760
    %v4349 = vadd.f32 %v4348, %v2764
    %v4350 = vadd.f32 %v4349, %v2768
    %v4351 = vadd.f32 %v4350, %v2772
    %v4352 = vadd.f32 %v4351, %v2776
    %v4353 = vadd.f32 %v4352, %v2780
    %v4354 = vadd.f32 %v4353, %v2784
    %v4355 = vadd.f32 %v4354, %v2788
    %v4356 = vadd.f32 %v4355, %v2792
    %v4357 = vadd.f32 %v4356, %v2796
    %v4358 = vadd.f32 %v4357, %v2800
    %v4359 = vadd.f32 %v4358, %v2804
    %v4360 = vadd.f32 %v4359, %v2808
    %v4361 = vadd.f32 %v4360, %v2812
    %v4362 = vadd.f32 %v4361, %v2816
    %v4363 = vadd.f32 %v4362, %v2820
    %v4364 = vadd.f32 %v4363, %v2824
    %v4365 = vadd.f32 %v4364, %v2828
    %v4366 = vadd.f32 %v4365, %v2832
    %v4367 = vadd.f32 %v4366, %v2836
    %v4368 = vadd.f32 %v4367, %v2840
    %v4369 = vadd.f32 %v4368, %v2844
    %v4370 = vadd.f32 %v4369, %v2848
    %v4371 = vadd.f32 %v4370, %v2852
    %v4372 = vadd.f32 %v4371, %v2856
    %v4373 = vadd.f32 %v4372, %v2860
    %v4374 = vadd.f32 %v4373, %v2864
    %v4375 = vadd.f32 %v4374, %v2868
    %v4376 = vadd.f32 %v4375, %v2872
    %v4377 = vadd.f32 %v4376, %v2876
    %v4378 = vadd.f32 %v4377, %v2880
    %v4379 = vadd.f32 %v4378, %v2884
    %v4380 = vadd.f32 %v4379, %v2888
    %v4381 = vadd.f32 %v4380, %v2892
    %v4382 = vadd.f32 %v4381, %v2896
    %v4383 = vadd.f32 %v4382, %v2900
    %v4384 = vadd.f32 %v4383, %v2904
    %v4385 = vadd.f32 %v4384, %v2908
    %v4386 = vadd.f32 %v4385, %v2912
    %v4387 = vadd.f32 %v4386, %v2916
    %v4388 = vadd.f32 %v4387, %v2920
    %v4389 = vadd.f32 %v4388, %v2924
    %v4390 = vadd.f32 %v4389, %v2928
    %v4391 = vadd.f32 %v4390, %v2932
    %v4392 = vadd.f32 %v4391, %v2936
    %v4393 = vadd.f32 %v4392, %v2940
    %v4394 = vadd.f32 %v4393, %v2944
    %v4395 = vadd.f32 %v4394, %v2948
    %v4396 = vadd.f32 %v4395, %v2952
    %v4397 = vadd.f32 %v4396, %v2956
    %v4398 = vadd.f32 %v4397, %v2960
    %v4399 = vadd.f32 %v4398, %v2964
    %v4400 = vrot.slane %v4399, 4
    %v4401 = vadd.f32 %v4399, %v4400
    %v4402 = vrot.slane %v4401, 2
    %v4403 = vadd.f32 %v4401, %v4402
    %v4404 = vrot.slane %v4403, 1
    %v4405 = vadd.f32 %v4403, %v4404
    %v4410 = vcombine.low %v4198, %v4267
    %v4411 = vcombine.low %v4336, %v4405
    %v4413 = vunpack.c.l.s4 1966171168
    %v4414 = vunpack.c.0.s8 %v4413
    %v4415 = vlaneseq
    %v4416 = vshrl.u32 %v4415, 7
    %v4417 = vsub.s32 %v4414, %v4416
    %v4418 = vrot.slane %v4410, %v4417
    %v4420 = vunpack.c.l.s4 1966171168
    %v4421 = vunpack.c.0.s8 %v4420
    %v4422 = vlaneseq
    %v4423 = vshrl.u32 %v4422, 7
    %v4424 = vsub.s32 %v4421, %v4423
    %v4425 = vrot.slane %v4411, %v4424
    %v4426 = vcombine.low %v4418, %v4425
    %v4428 = vunpack.c.l.s4 1966171168
    %v4429 = vunpack.c.0.s8 %v4428
    %v4430 = vlaneseq
    %v4431 = vshrl.u32 %v4430, 7
    %v4432 = vsub.s32 %v4429, %v4431
    %v4433 = vrot.slane %v4426, %v4432
    %v4435 = vlaneseq
    %vm4436 = vcmp.ge.s32.totalorder %v4435, 0
    %vm4437 = vcmp.lt.s32.totalorder %v4435, 512
    %vm4438 = vmand %vm4436, %vm4437
    %4439 = vst.msk [vmem:[%s6] sm:$0xf] %vm4438, %v4433
    // Predicated region
    $region18: #{vector_quantizer_forward.1} parent=1 // pred_check
      _
    $region19: #{vector_quantizer_forward.1} parent=1 // pred_check_branch
      %4441 = sbr.rel (0) target = $region21
    $region20: #{vector_quantizer_forward.1} parent=1 // pred_region
      %s4443 = ssub.s32 8192, 8192
      %4444 = vsyncadd [#allocation3], %s4443
      %s4445 = sshll.u32 [#allocation2], 4
      %s4446 = int_to_ptr.vmem [resolvable:$true] %s4445
      %4451 = dma.vmem_to_hbm [thread:$0]  %s4446, 8192, %s4, [#allocation3], 128, 128, 8
    $region21: #{vector_quantizer_forward.1} parent=1 // pred_fallthru
      _
    // Predicated region
    $region22: #{vector_quantizer_forward.1} parent=1 // pred_check
      _
    $region23: #{vector_quantizer_forward.1} parent=1 // pred_check_branch
      %4453 = sbr.rel (0) target = $region25
    $region24: #{vector_quantizer_forward.1} parent=1 // pred_region
      %s4455 = ssub.s32 16, 16
      %4456 = vsyncadd [#allocation5], %s4455
      %s4458 = sshll.u32 [#allocation4], 4
      %s4459 = int_to_ptr.vmem [resolvable:$true] %s4458
      %4461 = dma.vmem_to_hbm [thread:$0]  %s4459, 16, %s5, [#allocation5]
    $region25: #{vector_quantizer_forward.1} parent=1 // pred_fallthru
      _
    // Predicated region
    $region26: #{vector_quantizer_forward.1} parent=1 // pred_check
      _
    $region27: #{vector_quantizer_forward.1} parent=1 // pred_check_branch
      %4463 = sbr.rel (0) target = $region29
    $region28: #{vector_quantizer_forward.1} parent=1 // pred_region
      _
    $region29: #{vector_quantizer_forward.1} parent=1 // pred_fallthru
      _
    // Predicated region
    $region30: #{vector_quantizer_forward.1} parent=1 // pred_check
      _
    $region31: #{vector_quantizer_forward.1} parent=1 // pred_check_branch
      %4465 = sbr.rel (0) target = $region33
    $region32: #{vector_quantizer_forward.1} parent=1 // pred_region
      %4466 = dma.done [#allocation3], 8192
    $region33: #{vector_quantizer_forward.1} parent=1 // pred_fallthru
      _
    // Predicated region
    $region34: #{vector_quantizer_forward.1} parent=1 // pred_check
      _
    $region35: #{vector_quantizer_forward.1} parent=1 // pred_check_branch
      %4468 = sbr.rel (0) target = $region37
    $region36: #{vector_quantizer_forward.1} parent=1 // pred_region
      %4469 = dma.done [#allocation5], 16
    $region37: #{vector_quantizer_forward.1} parent=1 // pred_fallthru
      _
    // Predicated region
    $region38: #{vector_quantizer_forward.1} parent=1 // pred_check
      _
    $region39: #{vector_quantizer_forward.1} parent=1 // pred_check_branch
      %4471 = sbr.rel (0) target = $region41
    $region40: #{vector_quantizer_forward.1} parent=1 // pred_region
      _
    $region41: #{vector_quantizer_forward.1} parent=1 // pred_fallthru
      _
    %4472 = vsyncpa [#allocation3], 1
    %4473 = vsyncpa [#allocation5], 1

</llo_original>
